<compile_context>
chip_gen: v7x
topology: tpu7x:2x2x1
jax: 0.10.0
libtpu: 0.0.40
codegen_flags: <defaults>
</compile_context>

<pallas_src>
import jax
import jax.numpy as jnp
from jax.experimental import pallas as pl
from jax.experimental.pallas import tpu as pltpu


def _softmax_lastdim(scores):
    # exp -> EUP; normalization via approximate reciprocal also rides the EUP
    # slot instead of occupying VALU division slots.
    scores = scores - jnp.max(scores, axis=-1, keepdims=True)
    e = jnp.exp(scores)
    return e * pl.reciprocal(jnp.sum(e, axis=-1, keepdims=True), approx=True)


def attention_knowledge_kernel(out_ref, ctx_ref, know_ref, pmem_ref, rmem_ref,
                               w_mem_ref, b_mem_ref,
                               w_mix_ref, w_self_ref, w_know_ref, w_mixm_ref,
                               b_out_ref,
                               y_ref, attn_ref, comb_ref):
    Bb, L, D = out_ref.shape
    E = pmem_ref.shape[2]

    out3 = out_ref[...]                        # (Bb, L, D)
    ctx3 = ctx_ref[...]                        # (Bb, S, D)
    pm3 = pmem_ref[...]                        # (Bb, M, E)
    rm3 = rmem_ref[...]                        # (Bb, M, E)
    know = know_ref[...]                       # (Bb, 1, E)
    out2 = out3.reshape(Bb * L, D)             # fold batch into the MXU M dim

    # --- attention over encoder context (batched dot_general, no explicit .T)
    scores = jnp.einsum('bld,bsd->bls', out3, ctx3,
                        preferred_element_type=jnp.float32)          # (Bb,L,S)
    attn = _softmax_lastdim(scores)
    mix3 = jnp.einsum('bls,bsd->bld', attn, ctx3,
                      preferred_element_type=jnp.float32)            # (Bb,L,D)

    # --- attention over (p_memory, r_memory) --------------------------------
    out1 = jnp.dot(out2, w_mem_ref[...],
                   preferred_element_type=jnp.float32) + b_mem_ref[...]  # (Bb*L,E)
    ms = jnp.einsum('ble,bme->blm', out1.reshape(Bb, L, E), pm3,
                    preferred_element_type=jnp.float32)              # (Bb,L,M)
    attn_m = _softmax_lastdim(ms)
    mixm3 = jnp.einsum('blm,bme->ble', attn_m, rm3,
                       preferred_element_type=jnp.float32)           # (Bb,L,E)

    # --- output projection: W_out pre-split row-wise => no concatenate ------
    lin2 = (jnp.dot(mix3.reshape(Bb * L, D), w_mix_ref[...],
                    preferred_element_type=jnp.float32)
            + jnp.dot(out2, w_self_ref[...],
                      preferred_element_type=jnp.float32)
            + jnp.dot(mixm3.reshape(Bb * L, E), w_mixm_ref[...],
                      preferred_element_type=jnp.float32)
            + b_out_ref[...])                                        # (Bb*L,D)
    # knowledge is constant over L: project once per batch row, broadcast-add.
    know_proj = jnp.dot(know.reshape(Bb, E), w_know_ref[...],
                        preferred_element_type=jnp.float32)          # (Bb, D)
    lin3 = lin2.reshape(Bb, L, D) + know_proj[:, None, :]

    y_ref[...] = jnp.tanh(lin3).astype(y_ref.dtype)
    attn_ref[...] = attn.astype(attn_ref.dtype)

    # combined = [mix | output | knowledge | mix_memory], written as four
    # static lane slabs (no in-kernel lane-axis concatenate).
    comb_ref[:, :, 0:D] = mix3.astype(comb_ref.dtype)
    comb_ref[:, :, D:2 * D] = out3.astype(comb_ref.dtype)
    comb_ref[:, :, 2 * D:2 * D + E] = jnp.broadcast_to(
        know, (Bb, L, E)).astype(comb_ref.dtype)
    comb_ref[:, :, 2 * D + E:2 * D + 2 * E] = mixm3.astype(comb_ref.dtype)


def attention_knowledge(output, context, knowledge, p_memory, r_memory,
                        w_mem, b_mem, w_out, b_out, *, grid_steps=None):
    """output: (B,L,D)  context: (B,S,D)  knowledge: (B,E)
       p_memory/r_memory: (B,M,E)
       w_mem: (D,E)  b_mem: (1,E)  w_out: (2D+2E, D)  b_out: (1,D)"""
    B, L, D = output.shape
    S = context.shape[1]
    M, E = p_memory.shape[1], p_memory.shape[2]
    C = 2 * D + 2 * E
    assert w_out.shape == (C, D)

    # 2 parallel grid steps keep both v7x TensorCores busy; on v5e/v6e (1 TC)
    # the extra step costs only ~0.35 us.
    if grid_steps is None:
        grid_steps = 2 if (B % 2 == 0 and B >= 2) else 1
    assert B % grid_steps == 0
    Bb = B // grid_steps

    # Pre-split linear_out weight row-wise so the kernel never concatenates.
    w_mix = w_out[0:D]               # acts on mix            (D, D)
    w_self = w_out[D:2 * D]          # acts on output         (D, D)
    w_know = w_out[2 * D:2 * D + E]  # acts on knowledge      (E, D)
    w_mixm = w_out[2 * D + E:]       # acts on mix_memory     (E, D)

    know3 = knowledge.reshape(B, 1, E)

    bmap = lambda b: (b, 0, 0)       # per-batch-block
    wmap = lambda b: (0, 0)          # weights: resident, same block every step

    return pl.pallas_call(
        attention_knowledge_kernel,
        out_shape=(
            jax.ShapeDtypeStruct((B, L, D), jnp.float32),   # attended output
            jax.ShapeDtypeStruct((B, L, S), jnp.float32),   # attention weights
            jax.ShapeDtypeStruct((B, L, C), jnp.float32),   # combined features
        ),
        grid_spec=pltpu.PrefetchScalarGridSpec(
            num_scalar_prefetch=0,
            grid=(grid_steps,),
            in_specs=[
                pl.BlockSpec((Bb, L, D), bmap),   # output
                pl.BlockSpec((Bb, S, D), bmap),   # context
                pl.BlockSpec((Bb, 1, E), bmap),   # knowledge (reshaped)
                pl.BlockSpec((Bb, M, E), bmap),   # p_memory
                pl.BlockSpec((Bb, M, E), bmap),   # r_memory
                pl.BlockSpec((D, E), wmap),       # linear_formemory weight
                pl.BlockSpec((1, E), wmap),       # linear_formemory bias
                pl.BlockSpec((D, D), wmap),       # W_out rows for mix
                pl.BlockSpec((D, D), wmap),       # W_out rows for output
                pl.BlockSpec((E, D), wmap),       # W_out rows for knowledge
                pl.BlockSpec((E, D), wmap),       # W_out rows for mix_memory
                pl.BlockSpec((1, D), wmap),       # linear_out bias
            ],
            out_specs=[
                pl.BlockSpec((Bb, L, D), bmap),
                pl.BlockSpec((Bb, L, S), bmap),
                pl.BlockSpec((Bb, L, C), bmap),
            ],
        ),
        compiler_params=pltpu.CompilerParams(
            dimension_semantics=("parallel",)),
    )(output, context, know3, p_memory, r_memory,
      w_mem, b_mem, w_mix, w_self, w_know, w_mixm, b_out)


def _reference(output, context, knowledge, p_memory, r_memory,
               w_mem, b_mem, w_out, b_out):
    scores = jnp.einsum('bld,bsd->bls', output, context)
    attn = jax.nn.softmax(scores, axis=-1)
    mix = jnp.einsum('bls,bsd->bld', attn, context)
    out1 = output @ w_mem + b_mem
    ms = jnp.einsum('ble,bme->blm', out1, p_memory)
    attn_m = jax.nn.softmax(ms, axis=-1)
    mix_m = jnp.einsum('blm,bme->ble', attn_m, r_memory)
    L = output.shape[1]
    know_rep = jnp.broadcast_to(knowledge[:, None, :],
                                (knowledge.shape[0], L, knowledge.shape[1]))
    combined = jnp.concatenate([mix, output, know_rep, mix_m], axis=-1)
    y = jnp.tanh(combined @ w_out + b_out)
    return y, attn, combined


if __name__ == "__main__":
    # Small but lane-dense shapes (D, S multiples of 128; C = 384 = 3*128) so
    # all output stores are unmasked full-lane writes.
    B, L, S, M = 8, 8, 128, 64       # batch, output_len, input_len, memory_len
    D, E = 128, 64                   # dim, emb_size
    C = 2 * D + 2 * E

    key = jax.random.PRNGKey(0)
    ks = jax.random.split(key, 9)
    output = jax.random.normal(ks[0], (B, L, D), jnp.float32)
    context = jax.random.normal(ks[1], (B, S, D), jnp.float32)
    knowledge = jax.random.normal(ks[2], (B, E), jnp.float32)
    p_memory = jax.random.normal(ks[3], (B, M, E), jnp.float32)
    r_memory = jax.random.normal(ks[4], (B, M, E), jnp.float32)

    # Deterministic parameter init (Linear weights stored as (in, out)).
    w_mem = jax.random.normal(ks[5], (D, E), jnp.float32) * 0.1
    b_mem = jax.random.normal(ks[6], (1, E), jnp.float32) * 0.1
    w_out = jax.random.normal(ks[7], (C, D), jnp.float32) * 0.1
    b_out = jax.random.normal(ks[8], (1, D), jnp.float32) * 0.1

    y, attn, combined = attention_knowledge(
        output, context, knowledge, p_memory, r_memory,
        w_mem, b_mem, w_out, b_out)
    jax.block_until_ready((y, attn, combined))

    y_r, attn_r, comb_r = _reference(
        output, context, knowledge, p_memory, r_memory,
        w_mem, b_mem, w_out, b_out)

    # Tolerance is slightly relaxed to cover the EUP approximate-reciprocal
    # softmax normalization used in the kernel.
    assert jnp.allclose(y, y_r, atol=1e-2, rtol=1e-2)
    assert jnp.allclose(attn, attn_r, atol=1e-2, rtol=1e-2)
    assert jnp.allclose(combined, comb_r, atol=1e-2, rtol=1e-2)

    print("KERNEL_OK")
</pallas_src>

<mosaic_0001>
module attributes {stable_mosaic.version = 11 : i64} {
  func.func @attention_knowledge_kernel(%arg0: i32, %arg1: memref<4x8x128xf32, #tpu.memory_space<vmem>>, %arg2: memref<4x128x128xf32, #tpu.memory_space<vmem>>, %arg3: memref<4x1x64xf32, #tpu.memory_space<vmem>>, %arg4: memref<4x64x64xf32, #tpu.memory_space<vmem>>, %arg5: memref<4x64x64xf32, #tpu.memory_space<vmem>>, %arg6: memref<128x64xf32, #tpu.memory_space<vmem>>, %arg7: memref<1x64xf32, #tpu.memory_space<vmem>>, %arg8: memref<128x128xf32, #tpu.memory_space<vmem>>, %arg9: memref<128x128xf32, #tpu.memory_space<vmem>>, %arg10: memref<64x128xf32, #tpu.memory_space<vmem>>, %arg11: memref<64x128xf32, #tpu.memory_space<vmem>>, %arg12: memref<1x128xf32, #tpu.memory_space<vmem>>, %arg13: memref<4x8x128xf32, #tpu.memory_space<vmem>>, %arg14: memref<4x8x128xf32, #tpu.memory_space<vmem>>, %arg15: memref<4x8x384xf32, #tpu.memory_space<vmem>>) attributes {dimension_semantics = [#tpu.dimension_semantics<parallel>], iteration_bounds = array<i64: 2>, scalar_prefetch = 0 : i64, scratch_operands = 0 : i64, tpu.core_type = #tpu.core_type<tc>, window_params = [{transform_indices = @transform_0, window_bounds = array<i64: 4, 8, 128>}, {transform_indices = @transform_1, window_bounds = array<i64: 4, 128, 128>}, {transform_indices = @transform_2, window_bounds = array<i64: 4, 1, 64>}, {transform_indices = @transform_3, window_bounds = array<i64: 4, 64, 64>}, {transform_indices = @transform_4, window_bounds = array<i64: 4, 64, 64>}, {pipeline_mode = #tpu.pipeline_mode<synchronous>, transform_indices = @transform_5, window_bounds = array<i64: 128, 64>}, {pipeline_mode = #tpu.pipeline_mode<synchronous>, transform_indices = @transform_6, window_bounds = array<i64: 1, 64>}, {pipeline_mode = #tpu.pipeline_mode<synchronous>, transform_indices = @transform_7, window_bounds = array<i64: 128, 128>}, {pipeline_mode = #tpu.pipeline_mode<synchronous>, transform_indices = @transform_8, window_bounds = array<i64: 128, 128>}, {pipeline_mode = #tpu.pipeline_mode<synchronous>, transform_indices = @transform_9, window_bounds = array<i64: 64, 128>}, {pipeline_mode = #tpu.pipeline_mode<synchronous>, transform_indices = @transform_10, window_bounds = array<i64: 64, 128>}, {pipeline_mode = #tpu.pipeline_mode<synchronous>, transform_indices = @transform_11, window_bounds = array<i64: 1, 128>}, {transform_indices = @transform_12, window_bounds = array<i64: 4, 8, 128>}, {transform_indices = @transform_13, window_bounds = array<i64: 4, 8, 128>}, {transform_indices = @transform_14, window_bounds = array<i64: 4, 8, 384>}]} {
    %c0 = arith.constant 0 : index
    %c0_0 = arith.constant 0 : index
    %c0_1 = arith.constant 0 : index
    %0 = vector.load %arg1[%c0, %c0_0, %c0_1] : memref<4x8x128xf32, #tpu.memory_space<vmem>>, vector<4x8x128xf32>
    %c0_2 = arith.constant 0 : index
    %c0_3 = arith.constant 0 : index
    %c0_4 = arith.constant 0 : index
    %1 = vector.load %arg2[%c0_2, %c0_3, %c0_4] : memref<4x128x128xf32, #tpu.memory_space<vmem>>, vector<4x128x128xf32>
    %c0_5 = arith.constant 0 : index
    %c0_6 = arith.constant 0 : index
    %c0_7 = arith.constant 0 : index
    %2 = vector.load %arg4[%c0_5, %c0_6, %c0_7] : memref<4x64x64xf32, #tpu.memory_space<vmem>>, vector<4x64x64xf32>
    %c0_8 = arith.constant 0 : index
    %c0_9 = arith.constant 0 : index
    %c0_10 = arith.constant 0 : index
    %3 = vector.load %arg5[%c0_8, %c0_9, %c0_10] : memref<4x64x64xf32, #tpu.memory_space<vmem>>, vector<4x64x64xf32>
    %c0_11 = arith.constant 0 : index
    %c0_12 = arith.constant 0 : index
    %c0_13 = arith.constant 0 : index
    %4 = vector.load %arg3[%c0_11, %c0_12, %c0_13] : memref<4x1x64xf32, #tpu.memory_space<vmem>>, vector<4x1x64xf32>
    %5 = vector.shape_cast %0 : vector<4x8x128xf32> to vector<32x128xf32>
    "tpu.trace_start"() <{level = 10 : i32, message = "bld,bsd->bls"}> : () -> ()
    %cst = arith.constant dense<0.000000e+00> : vector<4x8x128xf32>
    %6 = tpu.matmul %0, %1, %cst {dimension_numbers = #tpu.dot_dimension_numbers<[2], [2], [1], [1], [0, 0, 0, 1, 1, 1], [0], [0]>} : vector<4x8x128xf32>, vector<4x128x128xf32>, vector<4x8x128xf32> -> vector<4x8x128xf32>
    "tpu.trace_stop"() : () -> ()
    %cst_14 = arith.constant dense<0xFF800000> : vector<4x8xf32>
    %7 = vector.multi_reduction <maximumf>, %6, %cst_14 [2] : vector<4x8x128xf32> to vector<4x8xf32>
    %8 = vector.shape_cast %7 : vector<4x8xf32> to vector<4x8x1xf32>
    %9 = vector.broadcast %8 : vector<4x8x1xf32> to vector<4x8x128xf32>
    %10 = arith.subf %6, %9 : vector<4x8x128xf32>
    %11 = math.exp %10 : vector<4x8x128xf32>
    %cst_15 = arith.constant dense<0.000000e+00> : vector<4x8xf32>
    %12 = vector.multi_reduction <add>, %11, %cst_15 [2] : vector<4x8x128xf32> to vector<4x8xf32>
    %13 = vector.shape_cast %12 : vector<4x8xf32> to vector<4x8x1xf32>
    %14 = tpu.reciprocal %13 {approx = true} : vector<4x8x1xf32> -> vector<4x8x1xf32>
    %15 = vector.broadcast %14 : vector<4x8x1xf32> to vector<4x8x128xf32>
    %16 = arith.mulf %11, %15 : vector<4x8x128xf32>
    "tpu.trace_start"() <{level = 10 : i32, message = "bls,bsd->bld"}> : () -> ()
    %cst_16 = arith.constant dense<0.000000e+00> : vector<4x8x128xf32>
    %17 = tpu.matmul %16, %1, %cst_16 {dimension_numbers = #tpu.dot_dimension_numbers<[2], [1], [1], [2], [0, 0, 0, 1, 1, 2], [0], [0]>} : vector<4x8x128xf32>, vector<4x128x128xf32>, vector<4x8x128xf32> -> vector<4x8x128xf32>
    "tpu.trace_stop"() : () -> ()
    %c0_17 = arith.constant 0 : index
    %c0_18 = arith.constant 0 : index
    %18 = vector.load %arg6[%c0_17, %c0_18] : memref<128x64xf32, #tpu.memory_space<vmem>>, vector<128x64xf32>
    %cst_19 = arith.constant dense<0.000000e+00> : vector<32x64xf32>
    %19 = tpu.matmul %5, %18, %cst_19 {dimension_numbers = #tpu.dot_dimension_numbers<[1], [0], [0], [1], [0, 0, 1, 1], [], []>} : vector<32x128xf32>, vector<128x64xf32>, vector<32x64xf32> -> vector<32x64xf32>
    %c0_20 = arith.constant 0 : index
    %c0_21 = arith.constant 0 : index
    %20 = vector.load %arg7[%c0_20, %c0_21] : memref<1x64xf32, #tpu.memory_space<vmem>>, vector<1x64xf32>
    %21 = vector.broadcast %20 : vector<1x64xf32> to vector<32x64xf32>
    %22 = arith.addf %19, %21 : vector<32x64xf32>
    %23 = vector.shape_cast %22 : vector<32x64xf32> to vector<4x8x64xf32>
    "tpu.trace_start"() <{level = 10 : i32, message = "ble,bme->blm"}> : () -> ()
    %cst_22 = arith.constant dense<0.000000e+00> : vector<4x8x64xf32>
    %24 = tpu.matmul %23, %2, %cst_22 {dimension_numbers = #tpu.dot_dimension_numbers<[2], [2], [1], [1], [0, 0, 0, 1, 1, 1], [0], [0]>} : vector<4x8x64xf32>, vector<4x64x64xf32>, vector<4x8x64xf32> -> vector<4x8x64xf32>
    "tpu.trace_stop"() : () -> ()
    %cst_23 = arith.constant dense<0xFF800000> : vector<4x8xf32>
    %25 = vector.multi_reduction <maximumf>, %24, %cst_23 [2] : vector<4x8x64xf32> to vector<4x8xf32>
    %26 = vector.shape_cast %25 : vector<4x8xf32> to vector<4x8x1xf32>
    %27 = vector.broadcast %26 : vector<4x8x1xf32> to vector<4x8x64xf32>
    %28 = arith.subf %24, %27 : vector<4x8x64xf32>
    %29 = math.exp %28 : vector<4x8x64xf32>
    %cst_24 = arith.constant dense<0.000000e+00> : vector<4x8xf32>
    %30 = vector.multi_reduction <add>, %29, %cst_24 [2] : vector<4x8x64xf32> to vector<4x8xf32>
    %31 = vector.shape_cast %30 : vector<4x8xf32> to vector<4x8x1xf32>
    %32 = tpu.reciprocal %31 {approx = true} : vector<4x8x1xf32> -> vector<4x8x1xf32>
    %33 = vector.broadcast %32 : vector<4x8x1xf32> to vector<4x8x64xf32>
    %34 = arith.mulf %29, %33 : vector<4x8x64xf32>
    "tpu.trace_start"() <{level = 10 : i32, message = "blm,bme->ble"}> : () -> ()
    %cst_25 = arith.constant dense<0.000000e+00> : vector<4x8x64xf32>
    %35 = tpu.matmul %34, %3, %cst_25 {dimension_numbers = #tpu.dot_dimension_numbers<[2], [1], [1], [2], [0, 0, 0, 1, 1, 2], [0], [0]>} : vector<4x8x64xf32>, vector<4x64x64xf32>, vector<4x8x64xf32> -> vector<4x8x64xf32>
    "tpu.trace_stop"() : () -> ()
    %36 = vector.shape_cast %17 : vector<4x8x128xf32> to vector<32x128xf32>
    %c0_26 = arith.constant 0 : index
    %c0_27 = arith.constant 0 : index
    %37 = vector.load %arg8[%c0_26, %c0_27] : memref<128x128xf32, #tpu.memory_space<vmem>>, vector<128x128xf32>
    %cst_28 = arith.constant dense<0.000000e+00> : vector<32x128xf32>
    %38 = tpu.matmul %36, %37, %cst_28 {dimension_numbers = #tpu.dot_dimension_numbers<[1], [0], [0], [1], [0, 0, 1, 1], [], []>} : vector<32x128xf32>, vector<128x128xf32>, vector<32x128xf32> -> vector<32x128xf32>
    %c0_29 = arith.constant 0 : index
    %c0_30 = arith.constant 0 : index
    %39 = vector.load %arg9[%c0_29, %c0_30] : memref<128x128xf32, #tpu.memory_space<vmem>>, vector<128x128xf32>
    %cst_31 = arith.constant dense<0.000000e+00> : vector<32x128xf32>
    %40 = tpu.matmul %5, %39, %cst_31 {dimension_numbers = #tpu.dot_dimension_numbers<[1], [0], [0], [1], [0, 0, 1, 1], [], []>} : vector<32x128xf32>, vector<128x128xf32>, vector<32x128xf32> -> vector<32x128xf32>
    %41 = arith.addf %38, %40 : vector<32x128xf32>
    %42 = vector.shape_cast %35 : vector<4x8x64xf32> to vector<32x64xf32>
    %c0_32 = arith.constant 0 : index
    %c0_33 = arith.constant 0 : index
    %43 = vector.load %arg11[%c0_32, %c0_33] : memref<64x128xf32, #tpu.memory_space<vmem>>, vector<64x128xf32>
    %cst_34 = arith.constant dense<0.000000e+00> : vector<32x128xf32>
    %44 = tpu.matmul %42, %43, %cst_34 {dimension_numbers = #tpu.dot_dimension_numbers<[1], [0], [0], [1], [0, 0, 1, 1], [], []>} : vector<32x64xf32>, vector<64x128xf32>, vector<32x128xf32> -> vector<32x128xf32>
    %45 = arith.addf %41, %44 : vector<32x128xf32>
    %c0_35 = arith.constant 0 : index
    %c0_36 = arith.constant 0 : index
    %46 = vector.load %arg12[%c0_35, %c0_36] : memref<1x128xf32, #tpu.memory_space<vmem>>, vector<1x128xf32>
    %47 = vector.broadcast %46 : vector<1x128xf32> to vector<32x128xf32>
    %48 = arith.addf %45, %47 : vector<32x128xf32>
    %49 = vector.shape_cast %4 : vector<4x1x64xf32> to vector<4x64xf32>
    %c0_37 = arith.constant 0 : index
    %c0_38 = arith.constant 0 : index
    %50 = vector.load %arg10[%c0_37, %c0_38] : memref<64x128xf32, #tpu.memory_space<vmem>>, vector<64x128xf32>
    %cst_39 = arith.constant dense<0.000000e+00> : vector<4x128xf32>
    %51 = tpu.matmul %49, %50, %cst_39 {dimension_numbers = #tpu.dot_dimension_numbers<[1], [0], [0], [1], [0, 0, 1, 1], [], []>} : vector<4x64xf32>, vector<64x128xf32>, vector<4x128xf32> -> vector<4x128xf32>
    %52 = vector.shape_cast %48 : vector<32x128xf32> to vector<4x8x128xf32>
    %53 = vector.shape_cast %51 : vector<4x128xf32> to vector<4x1x128xf32>
    %54 = vector.broadcast %53 : vector<4x1x128xf32> to vector<4x8x128xf32>
    %55 = arith.addf %52, %54 : vector<4x8x128xf32>
    %56 = math.tanh %55 : vector<4x8x128xf32>
    %c0_40 = arith.constant 0 : index
    %c0_41 = arith.constant 0 : index
    %c0_42 = arith.constant 0 : index
    %57 = vector.load %arg13[%c0_40, %c0_41, %c0_42] : memref<4x8x128xf32, #tpu.memory_space<vmem>>, vector<4x8x128xf32>
    tpu.vector_store %arg13[%c0_40, %c0_41, %c0_42], %56 {strides = array<i32>} : memref<4x8x128xf32, #tpu.memory_space<vmem>>, vector<4x8x128xf32>,
    %c0_43 = arith.constant 0 : index
    %c0_44 = arith.constant 0 : index
    %c0_45 = arith.constant 0 : index
    %58 = vector.load %arg14[%c0_43, %c0_44, %c0_45] : memref<4x8x128xf32, #tpu.memory_space<vmem>>, vector<4x8x128xf32>
    tpu.vector_store %arg14[%c0_43, %c0_44, %c0_45], %16 {strides = array<i32>} : memref<4x8x128xf32, #tpu.memory_space<vmem>>, vector<4x8x128xf32>,
    %c0_46 = arith.constant 0 : index
    %c0_47 = arith.constant 0 : index
    %c0_48 = arith.constant 0 : index
    %59 = vector.load %arg15[%c0_46, %c0_47, %c0_48] : memref<4x8x384xf32, #tpu.memory_space<vmem>>, vector<4x8x128xf32>
    tpu.vector_store %arg15[%c0_46, %c0_47, %c0_48], %17 {strides = array<i32>} : memref<4x8x384xf32, #tpu.memory_space<vmem>>, vector<4x8x128xf32>,
    %c0_49 = arith.constant 0 : index
    %c0_50 = arith.constant 0 : index
    %c128 = arith.constant 128 : index
    %60 = vector.load %arg15[%c0_49, %c0_50, %c128] : memref<4x8x384xf32, #tpu.memory_space<vmem>>, vector<4x8x128xf32>
    tpu.vector_store %arg15[%c0_49, %c0_50, %c128], %0 {strides = array<i32>} : memref<4x8x384xf32, #tpu.memory_space<vmem>>, vector<4x8x128xf32>,
    %61 = vector.shape_cast %4 : vector<4x1x64xf32> to vector<4x1x64xf32>
    %62 = vector.broadcast %61 : vector<4x1x64xf32> to vector<4x8x64xf32>
    %c0_51 = arith.constant 0 : index
    %c0_52 = arith.constant 0 : index
    %c256 = arith.constant 256 : index
    %63 = vector.load %arg15[%c0_51, %c0_52, %c256] : memref<4x8x384xf32, #tpu.memory_space<vmem>>, vector<4x8x64xf32>
    tpu.vector_store %arg15[%c0_51, %c0_52, %c256], %62 {strides = array<i32>} : memref<4x8x384xf32, #tpu.memory_space<vmem>>, vector<4x8x64xf32>,
    %c0_53 = arith.constant 0 : index
    %c0_54 = arith.constant 0 : index
    %c320 = arith.constant 320 : index
    %64 = vector.load %arg15[%c0_53, %c0_54, %c320] : memref<4x8x384xf32, #tpu.memory_space<vmem>>, vector<4x8x64xf32>
    tpu.vector_store %arg15[%c0_53, %c0_54, %c320], %35 {strides = array<i32>} : memref<4x8x384xf32, #tpu.memory_space<vmem>>, vector<4x8x64xf32>,
    return
  }
  func.func @transform_0(%arg0: i32) -> (i32, i32, i32) {
    %c0_i32 = arith.constant 0 : i32
    %c0_i32_0 = arith.constant 0 : i32
    %c0_i32_1 = arith.constant 0 : i32
    return %arg0, %c0_i32, %c0_i32_0 : i32, i32, i32
  }
  func.func @transform_1(%arg0: i32) -> (i32, i32, i32) {
    %c0_i32 = arith.constant 0 : i32
    %c0_i32_0 = arith.constant 0 : i32
    %c0_i32_1 = arith.constant 0 : i32
    return %arg0, %c0_i32, %c0_i32_0 : i32, i32, i32
  }
  func.func @transform_2(%arg0: i32) -> (i32, i32, i32) {
    %c0_i32 = arith.constant 0 : i32
    %c0_i32_0 = arith.constant 0 : i32
    %c0_i32_1 = arith.constant 0 : i32
    return %arg0, %c0_i32, %c0_i32_0 : i32, i32, i32
  }
  func.func @transform_3(%arg0: i32) -> (i32, i32, i32) {
    %c0_i32 = arith.constant 0 : i32
    %c0_i32_0 = arith.constant 0 : i32
    %c0_i32_1 = arith.constant 0 : i32
    return %arg0, %c0_i32, %c0_i32_0 : i32, i32, i32
  }
  func.func @transform_4(%arg0: i32) -> (i32, i32, i32) {
    %c0_i32 = arith.constant 0 : i32
    %c0_i32_0 = arith.constant 0 : i32
    %c0_i32_1 = arith.constant 0 : i32
    return %arg0, %c0_i32, %c0_i32_0 : i32, i32, i32
  }
  func.func @transform_5(%arg0: i32) -> (i32, i32) {
    %c0_i32 = arith.constant 0 : i32
    %c0_i32_0 = arith.constant 0 : i32
    %c0_i32_1 = arith.constant 0 : i32
    return %c0_i32, %c0_i32_0 : i32, i32
  }
  func.func @transform_6(%arg0: i32) -> (i32, i32) {
    %c0_i32 = arith.constant 0 : i32
    %c0_i32_0 = arith.constant 0 : i32
    %c0_i32_1 = arith.constant 0 : i32
    return %c0_i32, %c0_i32_0 : i32, i32
  }
  func.func @transform_7(%arg0: i32) -> (i32, i32) {
    %c0_i32 = arith.constant 0 : i32
    %c0_i32_0 = arith.constant 0 : i32
    %c0_i32_1 = arith.constant 0 : i32
    return %c0_i32, %c0_i32_0 : i32, i32
  }
  func.func @transform_8(%arg0: i32) -> (i32, i32) {
    %c0_i32 = arith.constant 0 : i32
    %c0_i32_0 = arith.constant 0 : i32
    %c0_i32_1 = arith.constant 0 : i32
    return %c0_i32, %c0_i32_0 : i32, i32
  }
  func.func @transform_9(%arg0: i32) -> (i32, i32) {
    %c0_i32 = arith.constant 0 : i32
    %c0_i32_0 = arith.constant 0 : i32
    %c0_i32_1 = arith.constant 0 : i32
    return %c0_i32, %c0_i32_0 : i32, i32
  }
  func.func @transform_10(%arg0: i32) -> (i32, i32) {
    %c0_i32 = arith.constant 0 : i32
    %c0_i32_0 = arith.constant 0 : i32
    %c0_i32_1 = arith.constant 0 : i32
    return %c0_i32, %c0_i32_0 : i32, i32
  }
  func.func @transform_11(%arg0: i32) -> (i32, i32) {
    %c0_i32 = arith.constant 0 : i32
    %c0_i32_0 = arith.constant 0 : i32
    %c0_i32_1 = arith.constant 0 : i32
    return %c0_i32, %c0_i32_0 : i32, i32
  }
  func.func @transform_12(%arg0: i32) -> (i32, i32, i32) {
    %c0_i32 = arith.constant 0 : i32
    %c0_i32_0 = arith.constant 0 : i32
    %c0_i32_1 = arith.constant 0 : i32
    return %arg0, %c0_i32, %c0_i32_0 : i32, i32, i32
  }
  func.func @transform_13(%arg0: i32) -> (i32, i32, i32) {
    %c0_i32 = arith.constant 0 : i32
    %c0_i32_0 = arith.constant 0 : i32
    %c0_i32_1 = arith.constant 0 : i32
    return %arg0, %c0_i32, %c0_i32_0 : i32, i32, i32
  }
  func.func @transform_14(%arg0: i32) -> (i32, i32, i32) {
    %c0_i32 = arith.constant 0 : i32
    %c0_i32_0 = arith.constant 0 : i32
    %c0_i32_1 = arith.constant 0 : i32
    return %arg0, %c0_i32, %c0_i32_0 : i32, i32, i32
  }
}

</mosaic_0001>

<llo_original>
// kernel: tpu_custom_call.1
$region0: #{tpu_custom_call.1}
  #allocation0 [shape = 'u32[]', space=smem, size = 0x4, offset = 0x4, fixed_abs, tag = 'smem constant byte address 0x4 - core index']
  #allocation1 [shape = 'u32[144,128]{1,0:T(1,128)}', space=vmem, size = 0x12000, scoped, tag = 'internal scratch']
  %s0 = inlined_call_operand.vmem [shape: f32[8,8,128], index: 0, kind: input, shape index: {}]
  %s1 = inlined_call_operand.hbm [shape: f32[8,128,128], index: 1, kind: input, shape index: {}]
  %s2 = inlined_call_operand.vmem [shape: f32[8,1,64], index: 2, kind: input, shape index: {}]
  %s3 = inlined_call_operand.hbm [shape: f32[8,64,64], index: 3, kind: input, shape index: {}]
  %s4 = inlined_call_operand.hbm [shape: f32[8,64,64], index: 4, kind: input, shape index: {}]
  %s5 = inlined_call_operand.vmem [shape: f32[128,64], index: 5, kind: input, shape index: {}]
  %s6 = inlined_call_operand.vmem [shape: f32[1,64], index: 6, kind: input, shape index: {}]
  %s7 = inlined_call_operand.vmem [shape: f32[128,128], index: 7, kind: input, shape index: {}]
  %s8 = inlined_call_operand.hbm [shape: f32[128,128], index: 8, kind: input, shape index: {}]
  %s9 = inlined_call_operand.hbm [shape: f32[64,128], index: 9, kind: input, shape index: {}]
  %s10 = inlined_call_operand.hbm [shape: f32[64,128], index: 10, kind: input, shape index: {}]
  %s11 = inlined_call_operand.vmem [shape: f32[1,128], index: 11, kind: input, shape index: {}]
  %s12 = inlined_call_operand.hbm [shape: f32[8,8,128], index: 12, kind: output, shape index: {0}]
  %s13 = inlined_call_operand.hbm [shape: f32[8,8,128], index: 13, kind: output, shape index: {1}]
  %s14 = inlined_call_operand.hbm [shape: f32[8,8,384], index: 14, kind: output, shape index: {2}]
  %15 = xla_tuple %s12, %s13, %s14
  %s16 = sld [smem:[#allocation0]]
  $region121: #{tpu_custom_call.1} parent=0
    _
  %s18 = ssub.s32 1, %s16
  %s19 = scalar_select 0, %s18, %s16
  $region1: #{tpu_custom_call.1} parent=0
    #allocation2 [shape = 'u8[524288]{0}', space=vmem, size = 0x80000, scoped, tag = 'input window, operand 1']
    #allocation3 [shape = 's32[2]{0}', space=sflag, size = 0x8, scoped, tag = 'scoped memory for tpu_custom_call.1']
    #allocation4 [shape = 's32[2]{0}', space=sflag, size = 0x8, scoped, tag = 'scoped memory for tpu_custom_call.1']
    #allocation5 [shape = 'u8[262144]{0}', space=vmem, size = 0x40000, scoped, tag = 'input window, operand 3']
    #allocation6 [shape = 's32[2]{0}', space=sflag, size = 0x8, scoped, tag = 'scoped memory for tpu_custom_call.1']
    #allocation7 [shape = 'u8[262144]{0}', space=vmem, size = 0x40000, scoped, tag = 'input window, operand 4']
    #allocation8 [shape = 'u8[65536]{0}', space=vmem, size = 0x10000, scoped, tag = 'input window, operand 8, single buffered']
    #allocation9 [shape = 's32[1]{0}', space=sflag, size = 0x4, scoped, tag = 'scoped memory for tpu_custom_call.1']
    #allocation10 [shape = 'u8[32768]{0}', space=vmem, size = 0x8000, scoped, tag = 'input window, operand 9, single buffered']
    #allocation11 [shape = 'u8[32768]{0}', space=vmem, size = 0x8000, scoped, tag = 'input window, operand 10, single buffered']
    #allocation12 [shape = 's32[1]{0}', space=sflag, size = 0x4, scoped, tag = 'scoped memory for tpu_custom_call.1']
    #allocation13 [shape = 'u8[32768]{0}', space=vmem, size = 0x8000, scoped, tag = 'output window, operand 0']
    #allocation14 [shape = 'u8[32768]{0}', space=vmem, size = 0x8000, scoped, tag = 'output window, operand 1']
    #allocation15 [shape = 's32[2]{0}', space=sflag, size = 0x8, scoped, tag = 'scoped memory for tpu_custom_call.1']
    #allocation16 [shape = 'u8[98304]{0}', space=vmem, size = 0x18000, scoped, tag = 'output window, operand 2']
    %20 = vsyncpa [#allocation3], 0
    %s21 = scalar_lea.sflag [#allocation3], 1
    %22 = vsyncpa %s21, 0
    %23 = vsyncpa [#allocation6], 0
    %s24 = scalar_lea.sflag [#allocation6], 1
    %25 = vsyncpa %s24, 0
    %26 = vsyncpa [#allocation9], 0
    %27 = vsyncpa [#allocation12], 0
    %28 = vsyncpa [#allocation4], 0
    %s29 = scalar_lea.sflag [#allocation4], 1
    %30 = vsyncpa %s29, 0
    %31 = vsyncpa [#allocation15], 0
    %s32 = scalar_lea.sflag [#allocation15], 1
    %33 = vsyncpa %s32, 0
    loop: start=0, step=1, limit=4
    $region2: #{tpu_custom_call.1} parent=1 // loop_pre_header
      _
    $region3: #{tpu_custom_call.1} parent=1 // loop_header
      %s35 = sphi 0, %s39
      %p36 = scmp.ge.s32.totalorder %s35, 4
      %s45 = sphi 0, %s47
      %s48 = sphi 0, %s45
      %s49 = sphi 0, %s48
      %s65 = sphi 0, %s49
      %s71 = sphi 0, %s73
      %s74 = sphi 0, %s71
      %s75 = sphi 0, %s74
      %s91 = sphi 0, %s75
      %s97 = sphi 0, %s99
      %s100 = sphi 0, %s97
      %s101 = sphi 0, %s100
      %s117 = sphi 0, %s101
      %s123 = sphi 0, %s125
      %s126 = sphi 0, %s123
      %s127 = sphi 0, %s126
      %s143 = sphi 0, %s127
      %s149 = sphi 0, %s151
      %s152 = sphi 0, %s149
      %s153 = sphi 0, %s152
      %s169 = sphi 0, %s153
      %s173 = sphi 0, %s173
      %s175 = sphi 0, %s173
      %s176 = sphi 0, %s175
      %s190 = sphi 0, %s176
      %s194 = sphi 0, %s194
      %s196 = sphi 0, %s194
      %s197 = sphi 0, %s196
      %s211 = sphi 0, %s197
      %s215 = sphi 0, %s215
      %s217 = sphi 0, %s215
      %s218 = sphi 0, %s217
      %s232 = sphi 0, %s218
      %s236 = sphi 0, %s236
      %s238 = sphi 0, %s236
      %s239 = sphi 0, %s238
      %s253 = sphi 0, %s239
      %s257 = sphi 0, %s257
      %s259 = sphi 0, %s257
      %s260 = sphi 0, %s259
      %s274 = sphi 0, %s260
      %s278 = sphi 0, %s278
      %s280 = sphi 0, %s278
      %s281 = sphi 0, %s280
      %s295 = sphi 0, %s281
      %s299 = sphi 0, %s299
      %s301 = sphi 0, %s299
      %s302 = sphi 0, %s301
      %s316 = sphi 0, %s302
      %s322 = sphi 0, %s324
      %s325 = sphi 0, %s322
      %s326 = sphi 0, %s325
      %s342 = sphi 0, %s326
      %s348 = sphi 0, %s350
      %s351 = sphi 0, %s348
      %s352 = sphi 0, %s351
      %s368 = sphi 0, %s352
      %s374 = sphi 0, %s376
      %s377 = sphi 0, %s374
      %s378 = sphi 0, %s377
      %s394 = sphi 0, %s378
    $region4: #{tpu_custom_call.1} parent=1 // loop_header_branch
      %38 = sbr.rel (%p36) target = $region8
    $region5: #{tpu_custom_call.1} parent=1 // loop_body
      %s40 = ssub.s32 %s35, 1
      %s41 = ssub.s32 %s35, 2
      %s42 = sadd.s32 %s35, 1
      %s43 = ssub.s32 %s35, %s42
      %p44 = scmp.eq.s32.totalorder %s43, 0
      %s46 = sadd.s32 %s45, 1
      %s47 = scalar_select %p44, %s45, %s46
      %p50 = pneg %p44
      %p51 = scmp.eq.s32.totalorder %s35, 1
      %p52 = por %p50, %p51
      %p53 = scmp.ne.s32.totalorder %s45, %s48
      %p54 = scmp.eq.s32.totalorder %s35, 0
      %p55 = por %p53, %p54
      %p56 = scmp.ne.s32.totalorder %s45, %s48
      %p57 = scmp.eq.s32.totalorder %s40, 1
      %p58 = por %p56, %p57
      %p59 = scmp.ne.s32.totalorder %s48, %s49
      %p60 = scmp.eq.s32.totalorder %s40, 0
      %p61 = por %p59, %p60
      %p62 = scmp.ne.s32.totalorder %s48, %s49
      %p63 = scmp.eq.s32.totalorder %s41, 1
      %p64 = por %p62, %p63
      %p66 = scmp.ne.s32.totalorder %s49, %s65
      %p67 = scmp.eq.s32.totalorder %s41, 0
      %p68 = por %p66, %p67
      %s69 = ssub.s32 %s35, %s42
      %p70 = scmp.eq.s32.totalorder %s69, 0
      %s72 = sadd.s32 %s71, 1
      %s73 = scalar_select %p70, %s71, %s72
      %p76 = pneg %p70
      %p77 = scmp.eq.s32.totalorder %s35, 1
      %p78 = por %p76, %p77
      %p79 = scmp.ne.s32.totalorder %s71, %s74
      %p80 = scmp.eq.s32.totalorder %s35, 0
      %p81 = por %p79, %p80
      %p82 = scmp.ne.s32.totalorder %s71, %s74
      %p83 = scmp.eq.s32.totalorder %s40, 1
      %p84 = por %p82, %p83
      %p85 = scmp.ne.s32.totalorder %s74, %s75
      %p86 = scmp.eq.s32.totalorder %s40, 0
      %p87 = por %p85, %p86
      %p88 = scmp.ne.s32.totalorder %s74, %s75
      %p89 = scmp.eq.s32.totalorder %s41, 1
      %p90 = por %p88, %p89
      %p92 = scmp.ne.s32.totalorder %s75, %s91
      %p93 = scmp.eq.s32.totalorder %s41, 0
      %p94 = por %p92, %p93
      %s95 = ssub.s32 %s35, %s42
      %p96 = scmp.eq.s32.totalorder %s95, 0
      %s98 = sadd.s32 %s97, 1
      %s99 = scalar_select %p96, %s97, %s98
      %p102 = pneg %p96
      %p103 = scmp.eq.s32.totalorder %s35, 1
      %p104 = por %p102, %p103
      %p105 = scmp.ne.s32.totalorder %s97, %s100
      %p106 = scmp.eq.s32.totalorder %s35, 0
      %p107 = por %p105, %p106
      %p108 = scmp.ne.s32.totalorder %s97, %s100
      %p109 = scmp.eq.s32.totalorder %s40, 1
      %p110 = por %p108, %p109
      %p111 = scmp.ne.s32.totalorder %s100, %s101
      %p112 = scmp.eq.s32.totalorder %s40, 0
      %p113 = por %p111, %p112
      %p114 = scmp.ne.s32.totalorder %s100, %s101
      %p115 = scmp.eq.s32.totalorder %s41, 1
      %p116 = por %p114, %p115
      %p118 = scmp.ne.s32.totalorder %s101, %s117
      %p119 = scmp.eq.s32.totalorder %s41, 0
      %p120 = por %p118, %p119
      %s121 = ssub.s32 %s35, %s42
      %p122 = scmp.eq.s32.totalorder %s121, 0
      %s124 = sadd.s32 %s123, 1
      %s125 = scalar_select %p122, %s123, %s124
      %p128 = pneg %p122
      %p129 = scmp.eq.s32.totalorder %s35, 1
      %p130 = por %p128, %p129
      %p131 = scmp.ne.s32.totalorder %s123, %s126
      %p132 = scmp.eq.s32.totalorder %s35, 0
      %p133 = por %p131, %p132
      %p134 = scmp.ne.s32.totalorder %s123, %s126
      %p135 = scmp.eq.s32.totalorder %s40, 1
      %p136 = por %p134, %p135
      %p137 = scmp.ne.s32.totalorder %s126, %s127
      %p138 = scmp.eq.s32.totalorder %s40, 0
      %p139 = por %p137, %p138
      %p140 = scmp.ne.s32.totalorder %s126, %s127
      %p141 = scmp.eq.s32.totalorder %s41, 1
      %p142 = por %p140, %p141
      %p144 = scmp.ne.s32.totalorder %s127, %s143
      %p145 = scmp.eq.s32.totalorder %s41, 0
      %p146 = por %p144, %p145
      %s147 = ssub.s32 %s35, %s42
      %p148 = scmp.eq.s32.totalorder %s147, 0
      %s150 = sadd.s32 %s149, 1
      %s151 = scalar_select %p148, %s149, %s150
      %p154 = pneg %p148
      %p155 = scmp.eq.s32.totalorder %s35, 1
      %p156 = por %p154, %p155
      %p157 = scmp.ne.s32.totalorder %s149, %s152
      %p158 = scmp.eq.s32.totalorder %s35, 0
      %p159 = por %p157, %p158
      %p160 = scmp.ne.s32.totalorder %s149, %s152
      %p161 = scmp.eq.s32.totalorder %s40, 1
      %p162 = por %p160, %p161
      %p163 = scmp.ne.s32.totalorder %s152, %s153
      %p164 = scmp.eq.s32.totalorder %s40, 0
      %p165 = por %p163, %p164
      %p166 = scmp.ne.s32.totalorder %s152, %s153
      %p167 = scmp.eq.s32.totalorder %s41, 1
      %p168 = por %p166, %p167
      %p170 = scmp.ne.s32.totalorder %s153, %s169
      %p171 = scmp.eq.s32.totalorder %s41, 0
      %p172 = por %p170, %p171
      %s174 = sadd.s32 %s173, 1
      %p177 = scmp.eq.s32.totalorder %s35, 1
      %p178 = scmp.ne.s32.totalorder %s173, %s175
      %p179 = scmp.eq.s32.totalorder %s35, 0
      %p180 = por %p178, %p179
      %p181 = scmp.ne.s32.totalorder %s173, %s175
      %p182 = scmp.eq.s32.totalorder %s40, 1
      %p183 = por %p181, %p182
      %p184 = scmp.ne.s32.totalorder %s175, %s176
      %p185 = scmp.eq.s32.totalorder %s40, 0
      %p186 = por %p184, %p185
      %p187 = scmp.ne.s32.totalorder %s175, %s176
      %p188 = scmp.eq.s32.totalorder %s41, 1
      %p189 = por %p187, %p188
      %p191 = scmp.ne.s32.totalorder %s176, %s190
      %p192 = scmp.eq.s32.totalorder %s41, 0
      %p193 = por %p191, %p192
      %s195 = sadd.s32 %s194, 1
      %p198 = scmp.eq.s32.totalorder %s35, 1
      %p199 = scmp.ne.s32.totalorder %s194, %s196
      %p200 = scmp.eq.s32.totalorder %s35, 0
      %p201 = por %p199, %p200
      %p202 = scmp.ne.s32.totalorder %s194, %s196
      %p203 = scmp.eq.s32.totalorder %s40, 1
      %p204 = por %p202, %p203
      %p205 = scmp.ne.s32.totalorder %s196, %s197
      %p206 = scmp.eq.s32.totalorder %s40, 0
      %p207 = por %p205, %p206
      %p208 = scmp.ne.s32.totalorder %s196, %s197
      %p209 = scmp.eq.s32.totalorder %s41, 1
      %p210 = por %p208, %p209
      %p212 = scmp.ne.s32.totalorder %s197, %s211
      %p213 = scmp.eq.s32.totalorder %s41, 0
      %p214 = por %p212, %p213
      %s216 = sadd.s32 %s215, 1
      %p219 = scmp.eq.s32.totalorder %s35, 1
      %p220 = scmp.ne.s32.totalorder %s215, %s217
      %p221 = scmp.eq.s32.totalorder %s35, 0
      %p222 = por %p220, %p221
      %p223 = scmp.ne.s32.totalorder %s215, %s217
      %p224 = scmp.eq.s32.totalorder %s40, 1
      %p225 = por %p223, %p224
      %p226 = scmp.ne.s32.totalorder %s217, %s218
      %p227 = scmp.eq.s32.totalorder %s40, 0
      %p228 = por %p226, %p227
      %p229 = scmp.ne.s32.totalorder %s217, %s218
      %p230 = scmp.eq.s32.totalorder %s41, 1
      %p231 = por %p229, %p230
      %p233 = scmp.ne.s32.totalorder %s218, %s232
      %p234 = scmp.eq.s32.totalorder %s41, 0
      %p235 = por %p233, %p234
      %s237 = sadd.s32 %s236, 1
      %p240 = scmp.eq.s32.totalorder %s35, 1
      %p241 = scmp.ne.s32.totalorder %s236, %s238
      %p242 = scmp.eq.s32.totalorder %s35, 0
      %p243 = por %p241, %p242
      %p244 = scmp.ne.s32.totalorder %s236, %s238
      %p245 = scmp.eq.s32.totalorder %s40, 1
      %p246 = por %p244, %p245
      %p247 = scmp.ne.s32.totalorder %s238, %s239
      %p248 = scmp.eq.s32.totalorder %s40, 0
      %p249 = por %p247, %p248
      %p250 = scmp.ne.s32.totalorder %s238, %s239
      %p251 = scmp.eq.s32.totalorder %s41, 1
      %p252 = por %p250, %p251
      %p254 = scmp.ne.s32.totalorder %s239, %s253
      %p255 = scmp.eq.s32.totalorder %s41, 0
      %p256 = por %p254, %p255
      %s258 = sadd.s32 %s257, 1
      %p261 = scmp.eq.s32.totalorder %s35, 1
      %p262 = scmp.ne.s32.totalorder %s257, %s259
      %p263 = scmp.eq.s32.totalorder %s35, 0
      %p264 = por %p262, %p263
      %p265 = scmp.ne.s32.totalorder %s257, %s259
      %p266 = scmp.eq.s32.totalorder %s40, 1
      %p267 = por %p265, %p266
      %p268 = scmp.ne.s32.totalorder %s259, %s260
      %p269 = scmp.eq.s32.totalorder %s40, 0
      %p270 = por %p268, %p269
      %p271 = scmp.ne.s32.totalorder %s259, %s260
      %p272 = scmp.eq.s32.totalorder %s41, 1
      %p273 = por %p271, %p272
      %p275 = scmp.ne.s32.totalorder %s260, %s274
      %p276 = scmp.eq.s32.totalorder %s41, 0
      %p277 = por %p275, %p276
      %s279 = sadd.s32 %s278, 1
      %p282 = scmp.eq.s32.totalorder %s35, 1
      %p283 = scmp.ne.s32.totalorder %s278, %s280
      %p284 = scmp.eq.s32.totalorder %s35, 0
      %p285 = por %p283, %p284
      %p286 = scmp.ne.s32.totalorder %s278, %s280
      %p287 = scmp.eq.s32.totalorder %s40, 1
      %p288 = por %p286, %p287
      %p289 = scmp.ne.s32.totalorder %s280, %s281
      %p290 = scmp.eq.s32.totalorder %s40, 0
      %p291 = por %p289, %p290
      %p292 = scmp.ne.s32.totalorder %s280, %s281
      %p293 = scmp.eq.s32.totalorder %s41, 1
      %p294 = por %p292, %p293
      %p296 = scmp.ne.s32.totalorder %s281, %s295
      %p297 = scmp.eq.s32.totalorder %s41, 0
      %p298 = por %p296, %p297
      %s300 = sadd.s32 %s299, 1
      %p303 = scmp.eq.s32.totalorder %s35, 1
      %p304 = scmp.ne.s32.totalorder %s299, %s301
      %p305 = scmp.eq.s32.totalorder %s35, 0
      %p306 = por %p304, %p305
      %p307 = scmp.ne.s32.totalorder %s299, %s301
      %p308 = scmp.eq.s32.totalorder %s40, 1
      %p309 = por %p307, %p308
      %p310 = scmp.ne.s32.totalorder %s301, %s302
      %p311 = scmp.eq.s32.totalorder %s40, 0
      %p312 = por %p310, %p311
      %p313 = scmp.ne.s32.totalorder %s301, %s302
      %p314 = scmp.eq.s32.totalorder %s41, 1
      %p315 = por %p313, %p314
      %p317 = scmp.ne.s32.totalorder %s302, %s316
      %p318 = scmp.eq.s32.totalorder %s41, 0
      %p319 = por %p317, %p318
      %s320 = ssub.s32 %s35, %s42
      %p321 = scmp.eq.s32.totalorder %s320, 0
      %s323 = sadd.s32 %s322, 1
      %s324 = scalar_select %p321, %s322, %s323
      %p327 = pneg %p321
      %p328 = scmp.eq.s32.totalorder %s35, 1
      %p329 = por %p327, %p328
      %p330 = scmp.ne.s32.totalorder %s322, %s325
      %p331 = scmp.eq.s32.totalorder %s35, 0
      %p332 = por %p330, %p331
      %p333 = scmp.ne.s32.totalorder %s322, %s325
      %p334 = scmp.eq.s32.totalorder %s40, 1
      %p335 = por %p333, %p334
      %p336 = scmp.ne.s32.totalorder %s325, %s326
      %p337 = scmp.eq.s32.totalorder %s40, 0
      %p338 = por %p336, %p337
      %p339 = scmp.ne.s32.totalorder %s325, %s326
      %p340 = scmp.eq.s32.totalorder %s41, 1
      %p341 = por %p339, %p340
      %p343 = scmp.ne.s32.totalorder %s326, %s342
      %p344 = scmp.eq.s32.totalorder %s41, 0
      %p345 = por %p343, %p344
      %s346 = ssub.s32 %s35, %s42
      %p347 = scmp.eq.s32.totalorder %s346, 0
      %s349 = sadd.s32 %s348, 1
      %s350 = scalar_select %p347, %s348, %s349
      %p353 = pneg %p347
      %p354 = scmp.eq.s32.totalorder %s35, 1
      %p355 = por %p353, %p354
      %p356 = scmp.ne.s32.totalorder %s348, %s351
      %p357 = scmp.eq.s32.totalorder %s35, 0
      %p358 = por %p356, %p357
      %p359 = scmp.ne.s32.totalorder %s348, %s351
      %p360 = scmp.eq.s32.totalorder %s40, 1
      %p361 = por %p359, %p360
      %p362 = scmp.ne.s32.totalorder %s351, %s352
      %p363 = scmp.eq.s32.totalorder %s40, 0
      %p364 = por %p362, %p363
      %p365 = scmp.ne.s32.totalorder %s351, %s352
      %p366 = scmp.eq.s32.totalorder %s41, 1
      %p367 = por %p365, %p366
      %p369 = scmp.ne.s32.totalorder %s352, %s368
      %p370 = scmp.eq.s32.totalorder %s41, 0
      %p371 = por %p369, %p370
      %s372 = ssub.s32 %s35, %s42
      %p373 = scmp.eq.s32.totalorder %s372, 0
      %s375 = sadd.s32 %s374, 1
      %s376 = scalar_select %p373, %s374, %s375
      %p379 = pneg %p373
      %p380 = scmp.eq.s32.totalorder %s35, 1
      %p381 = por %p379, %p380
      %p382 = scmp.ne.s32.totalorder %s374, %s377
      %p383 = scmp.eq.s32.totalorder %s35, 0
      %p384 = por %p382, %p383
      %p385 = scmp.ne.s32.totalorder %s374, %s377
      %p386 = scmp.eq.s32.totalorder %s40, 1
      %p387 = por %p385, %p386
      %p388 = scmp.ne.s32.totalorder %s377, %s378
      %p389 = scmp.eq.s32.totalorder %s40, 0
      %p390 = por %p388, %p389
      %p391 = scmp.ne.s32.totalorder %s377, %s378
      %p392 = scmp.eq.s32.totalorder %s41, 1
      %p393 = por %p391, %p392
      %p395 = scmp.ne.s32.totalorder %s378, %s394
      %p396 = scmp.eq.s32.totalorder %s41, 0
      %p397 = por %p395, %p396
      %p398 = scmp.le.s32.totalorder 1, %s35
      %p399 = scmp.lt.s32.totalorder %s35, 3
      %p400 = pnand %p398, %p399
      %p401 = pneg %p400
      // Predicated region
      $region9: #{tpu_custom_call.1} parent=5 // pred_check
        _
      $region10: #{tpu_custom_call.1} parent=5 // pred_check_branch
        %403 = sbr.rel (%p400) target = $region12
      $region11: #{tpu_custom_call.1} parent=5 // pred_region
        %s404 = ssub.s32 %s35, 1
        // Predicated region
        $region13: #{tpu_custom_call.1} parent=11 // pred_check
          %p405 = pneg %p186
        $region14: #{tpu_custom_call.1} parent=11 // pred_check_branch
          %407 = sbr.rel (%p405) target = $region16
        $region15: #{tpu_custom_call.1} parent=11 // pred_region
          _
        $region16: #{tpu_custom_call.1} parent=11 // pred_fallthru
          _
        // Predicated region
        $region17: #{tpu_custom_call.1} parent=11 // pred_check
          %p408 = pneg %p207
        $region18: #{tpu_custom_call.1} parent=11 // pred_check_branch
          %410 = sbr.rel (%p408) target = $region20
        $region19: #{tpu_custom_call.1} parent=11 // pred_region
          _
        $region20: #{tpu_custom_call.1} parent=11 // pred_fallthru
          _
        // Predicated region
        $region21: #{tpu_custom_call.1} parent=11 // pred_check
          %p411 = pneg %p228
        $region22: #{tpu_custom_call.1} parent=11 // pred_check_branch
          %413 = sbr.rel (%p411) target = $region24
        $region23: #{tpu_custom_call.1} parent=11 // pred_region
          _
        $region24: #{tpu_custom_call.1} parent=11 // pred_fallthru
          _
        // Predicated region
        $region25: #{tpu_custom_call.1} parent=11 // pred_check
          %p414 = pneg %p249
        $region26: #{tpu_custom_call.1} parent=11 // pred_check_branch
          %416 = sbr.rel (%p414) target = $region28
        $region27: #{tpu_custom_call.1} parent=11 // pred_region
          %s418 = ssub.s32 2048, 2048
          %419 = vsyncadd [#allocation9], %s418
          %s420 = sshll.u32 [#allocation8], 4
          %s421 = int_to_ptr.vmem [resolvable:$true] %s420
          %426 = dma.hbm_to_vmem [thread:$0]  %s8, 2048, %s421, [#allocation9], 128, 128, 8
        $region28: #{tpu_custom_call.1} parent=11 // pred_fallthru
          _
        // Predicated region
        $region29: #{tpu_custom_call.1} parent=11 // pred_check
          %p427 = pneg %p270
        $region30: #{tpu_custom_call.1} parent=11 // pred_check_branch
          %429 = sbr.rel (%p427) target = $region32
        $region31: #{tpu_custom_call.1} parent=11 // pred_region
          %s431 = ssub.s32 1024, 1024
          %432 = vsyncadd [#allocation9], %s431
          %s433 = sshll.u32 [#allocation10], 4
          %s434 = int_to_ptr.vmem [resolvable:$true] %s433
          %439 = dma.hbm_to_vmem [thread:$0]  %s9, 1024, %s434, [#allocation9], 128, 128, 8
        $region32: #{tpu_custom_call.1} parent=11 // pred_fallthru
          _
        // Predicated region
        $region33: #{tpu_custom_call.1} parent=11 // pred_check
          %p440 = pneg %p291
        $region34: #{tpu_custom_call.1} parent=11 // pred_check_branch
          %442 = sbr.rel (%p440) target = $region36
        $region35: #{tpu_custom_call.1} parent=11 // pred_region
          %s444 = ssub.s32 1024, 1024
          %445 = vsyncadd [#allocation12], %s444
          %s446 = sshll.u32 [#allocation11], 4
          %s447 = int_to_ptr.vmem [resolvable:$true] %s446
          %452 = dma.hbm_to_vmem [thread:$0]  %s10, 1024, %s447, [#allocation12], 128, 128, 8
        $region36: #{tpu_custom_call.1} parent=11 // pred_fallthru
          _
        // Predicated region
        $region37: #{tpu_custom_call.1} parent=11 // pred_check
          %p453 = pneg %p312
        $region38: #{tpu_custom_call.1} parent=11 // pred_check_branch
          %455 = sbr.rel (%p453) target = $region40
        $region39: #{tpu_custom_call.1} parent=11 // pred_region
          _
        $region40: #{tpu_custom_call.1} parent=11 // pred_fallthru
          _
      $region12: #{tpu_custom_call.1} parent=5 // pred_fallthru
        _
      %p456 = scmp.lt.s32.totalorder %s35, 2
      // Predicated region
      $region41: #{tpu_custom_call.1} parent=5 // pred_check
        %p457 = pneg %p456
      $region42: #{tpu_custom_call.1} parent=5 // pred_check_branch
        %459 = sbr.rel (%p457) target = $region44
      $region43: #{tpu_custom_call.1} parent=5 // pred_region
        // Predicated region
        $region45: #{tpu_custom_call.1} parent=43 // pred_check
          %p460 = pneg %p55
        $region46: #{tpu_custom_call.1} parent=43 // pred_check_branch
          %462 = sbr.rel (%p460) target = $region48
        $region47: #{tpu_custom_call.1} parent=43 // pred_region
          %s463 = smul.u32 4, %s35
          %p464 = scmp.lt.s32.totalorder %s463, 7
          %s465 = scalar_select %p464, %s463, 7
          %s466 = smul.addr %s465, 8
          %s467 = scalar_lea.vmem %s0, %s466
          %s468 = smul.u32 4, %s35
        $region48: #{tpu_custom_call.1} parent=43 // pred_fallthru
          _
        // Predicated region
        $region49: #{tpu_custom_call.1} parent=43 // pred_check
          %p469 = pneg %p81
        $region50: #{tpu_custom_call.1} parent=43 // pred_check_branch
          %471 = sbr.rel (%p469) target = $region52
        $region51: #{tpu_custom_call.1} parent=43 // pred_region
          %s472 = sand.u32 %s71, 1
          %s473 = scalar_lea.sflag [#allocation3], %s472
          %s474 = sand.u32 %s71, 1
          %s475 = smul.addr %s474, 512
          %s476 = scalar_lea.vmem [#allocation2], %s475
          %s477 = smul.u32 4, %s35
          %s479 = ssub.s32 8192, 8192
          %480 = vsyncadd %s473, %s479
          %s481 = smul.addr %s477, 16
          %s482 = smul.addr %s481, 128
          %s483 = scalar_lea.hbm %s1, %s482
          %s484 = sshll.u32 %s476, 4
          %s485 = int_to_ptr.vmem [resolvable:$true] %s484
          %490 = dma.hbm_to_vmem [thread:$0]  %s483, 8192, %s485, %s473, 128, 128, 8
        $region52: #{tpu_custom_call.1} parent=43 // pred_fallthru
          _
        // Predicated region
        $region53: #{tpu_custom_call.1} parent=43 // pred_check
          %p491 = pneg %p107
        $region54: #{tpu_custom_call.1} parent=43 // pred_check_branch
          %493 = sbr.rel (%p491) target = $region56
        $region55: #{tpu_custom_call.1} parent=43 // pred_region
          %s494 = smul.u32 4, %s35
          %p495 = scmp.lt.s32.totalorder %s494, 7
          %s496 = scalar_select %p495, %s494, 7
          %s497 = scalar_lea.vmem %s2, %s496
          %s498 = smul.u32 4, %s35
        $region56: #{tpu_custom_call.1} parent=43 // pred_fallthru
          _
        // Predicated region
        $region57: #{tpu_custom_call.1} parent=43 // pred_check
          %p499 = pneg %p133
        $region58: #{tpu_custom_call.1} parent=43 // pred_check_branch
          %501 = sbr.rel (%p499) target = $region60
        $region59: #{tpu_custom_call.1} parent=43 // pred_region
          %s502 = sand.u32 %s35, 1
          %s503 = scalar_lea.sflag [#allocation6], %s502
          %s504 = sand.u32 %s123, 1
          %s505 = smul.addr %s504, 256
          %s506 = scalar_lea.vmem [#allocation5], %s505
          %s507 = smul.u32 4, %s35
          %s509 = ssub.s32 4096, 4096
          %510 = vsyncadd %s503, %s509
          %s511 = smul.addr %s507, 8
          %s512 = smul.addr %s511, 128
          %s513 = scalar_lea.hbm %s3, %s512
          %s514 = sshll.u32 %s506, 4
          %s515 = int_to_ptr.vmem [resolvable:$true] %s514
          %520 = dma.hbm_to_vmem [thread:$0]  %s513, 4096, %s515, %s503, 128, 128, 8
        $region60: #{tpu_custom_call.1} parent=43 // pred_fallthru
          _
        // Predicated region
        $region61: #{tpu_custom_call.1} parent=43 // pred_check
          %p521 = pneg %p159
        $region62: #{tpu_custom_call.1} parent=43 // pred_check_branch
          %523 = sbr.rel (%p521) target = $region64
        $region63: #{tpu_custom_call.1} parent=43 // pred_region
          %s524 = sand.u32 %s35, 1
          %s525 = scalar_lea.sflag [#allocation6], %s524
          %s526 = sand.u32 %s149, 1
          %s527 = smul.addr %s526, 256
          %s528 = scalar_lea.vmem [#allocation7], %s527
          %s529 = smul.u32 4, %s35
          %s531 = ssub.s32 4096, 4096
          %532 = vsyncadd %s525, %s531
          %s533 = smul.addr %s529, 8
          %s534 = smul.addr %s533, 128
          %s535 = scalar_lea.hbm %s4, %s534
          %s536 = sshll.u32 %s528, 4
          %s537 = int_to_ptr.vmem [resolvable:$true] %s536
          %542 = dma.hbm_to_vmem [thread:$0]  %s535, 4096, %s537, %s525, 128, 128, 8
        $region64: #{tpu_custom_call.1} parent=43 // pred_fallthru
          _
      $region44: #{tpu_custom_call.1} parent=5 // pred_fallthru
        _
      %p543 = scmp.le.s32.totalorder 1, %s35
      %p544 = scmp.lt.s32.totalorder %s35, 3
      %p545 = pnand %p543, %p544
      %p546 = pneg %p545
      // Predicated region
      $region65: #{tpu_custom_call.1} parent=5 // pred_check
        _
      $region66: #{tpu_custom_call.1} parent=5 // pred_check_branch
        %548 = sbr.rel (%p545) target = $region68
      $region67: #{tpu_custom_call.1} parent=5 // pred_region
        %s549 = ssub.s32 %s35, 1
        %s550 = sand.u32 %s74, 1
        %s551 = scalar_lea.sflag [#allocation3], %s550
        %s552 = sand.u32 %s74, 1
        %s553 = smul.addr %s552, 512
        %s554 = scalar_lea.vmem [#allocation2], %s553
        // Predicated region
        $region69: #{tpu_custom_call.1} parent=67 // pred_check
          %p555 = pneg %p87
        $region70: #{tpu_custom_call.1} parent=67 // pred_check_branch
          %557 = sbr.rel (%p555) target = $region72
        $region71: #{tpu_custom_call.1} parent=67 // pred_region
          %558 = dma.done %s551, 8192
        $region72: #{tpu_custom_call.1} parent=67 // pred_fallthru
          _
        %s559 = sand.u32 %s40, 1
        %s560 = scalar_lea.sflag [#allocation6], %s559
        %s561 = sand.u32 %s126, 1
        %s562 = smul.addr %s561, 256
        %s563 = scalar_lea.vmem [#allocation5], %s562
        // Predicated region
        $region73: #{tpu_custom_call.1} parent=67 // pred_check
          %p564 = pneg %p139
        $region74: #{tpu_custom_call.1} parent=67 // pred_check_branch
          %566 = sbr.rel (%p564) target = $region76
        $region75: #{tpu_custom_call.1} parent=67 // pred_region
          %567 = dma.done %s560, 4096
        $region76: #{tpu_custom_call.1} parent=67 // pred_fallthru
          _
        %s568 = sand.u32 %s40, 1
        %s569 = scalar_lea.sflag [#allocation6], %s568
        %s570 = sand.u32 %s152, 1
        %s571 = smul.addr %s570, 256
        %s572 = scalar_lea.vmem [#allocation7], %s571
        // Predicated region
        $region77: #{tpu_custom_call.1} parent=67 // pred_check
          %p573 = pneg %p165
        $region78: #{tpu_custom_call.1} parent=67 // pred_check_branch
          %575 = sbr.rel (%p573) target = $region80
        $region79: #{tpu_custom_call.1} parent=67 // pred_region
          %576 = dma.done %s569, 4096
        $region80: #{tpu_custom_call.1} parent=67 // pred_fallthru
          _
        // Predicated region
        $region81: #{tpu_custom_call.1} parent=67 // pred_check
          %p577 = pneg %p249
        $region82: #{tpu_custom_call.1} parent=67 // pred_check_branch
          %579 = sbr.rel (%p577) target = $region84
        $region83: #{tpu_custom_call.1} parent=67 // pred_region
          %580 = dma.done [#allocation9], 2048
        $region84: #{tpu_custom_call.1} parent=67 // pred_fallthru
          _
        // Predicated region
        $region85: #{tpu_custom_call.1} parent=67 // pred_check
          %p581 = pneg %p270
        $region86: #{tpu_custom_call.1} parent=67 // pred_check_branch
          %583 = sbr.rel (%p581) target = $region88
        $region87: #{tpu_custom_call.1} parent=67 // pred_region
          %584 = dma.done [#allocation9], 1024
        $region88: #{tpu_custom_call.1} parent=67 // pred_fallthru
          _
        // Predicated region
        $region89: #{tpu_custom_call.1} parent=67 // pred_check
          %p585 = pneg %p291
        $region90: #{tpu_custom_call.1} parent=67 // pred_check_branch
          %587 = sbr.rel (%p585) target = $region92
        $region91: #{tpu_custom_call.1} parent=67 // pred_region
          %588 = dma.done [#allocation12], 1024
        $region92: #{tpu_custom_call.1} parent=67 // pred_fallthru
          _
        %s589 = smul.u32 4, %s40
        %p590 = scmp.lt.s32.totalorder %s589, 7
        %s591 = scalar_select %p590, %s589, 7
        %s592 = smul.addr %s591, 8
        %s593 = scalar_lea.vmem %s0, %s592
        %p594 = pneg %p61
        %p595 = pneg %p58
        %s596 = sand.u32 %s74, 1
        %s597 = scalar_lea.sflag [#allocation3], %s596
        %s598 = sand.u32 %s74, 1
        %s599 = smul.addr %s598, 512
        %s600 = scalar_lea.vmem [#allocation2], %s599
        %p601 = pneg %p87
        %p602 = pneg %p84
        %s603 = smul.u32 4, %s40
        %p604 = scmp.lt.s32.totalorder %s603, 7
        %s605 = scalar_select %p604, %s603, 7
        %s606 = scalar_lea.vmem %s2, %s605
        %p607 = pneg %p113
        %p608 = pneg %p110
        %s609 = sand.u32 %s40, 1
        %s610 = scalar_lea.sflag [#allocation6], %s609
        %s611 = sand.u32 %s126, 1
        %s612 = smul.addr %s611, 256
        %s613 = scalar_lea.vmem [#allocation5], %s612
        %p614 = pneg %p139
        %p615 = pneg %p136
        %s616 = sand.u32 %s40, 1
        %s617 = scalar_lea.sflag [#allocation6], %s616
        %s618 = sand.u32 %s152, 1
        %s619 = smul.addr %s618, 256
        %s620 = scalar_lea.vmem [#allocation7], %s619
        %p621 = pneg %p165
        %p622 = pneg %p162
        %p623 = pneg %p186
        %p624 = pneg %p183
        %p625 = pneg %p207
        %p626 = pneg %p204
        %p627 = pneg %p228
        %p628 = pneg %p225
        %p629 = pneg %p249
        %p630 = pneg %p246
        %p631 = pneg %p270
        %p632 = pneg %p267
        %p633 = pneg %p291
        %p634 = pneg %p288
        %p635 = pneg %p312
        %p636 = pneg %p309
        %p637 = pneg %p338
        %p638 = pneg %p335
        %s639 = sand.u32 %s325, 1
        %s640 = scalar_lea.sflag [#allocation4], %s639
        %s641 = sand.u32 %s325, 1
        %s642 = smul.addr %s641, 32
        %s643 = scalar_lea.vmem [#allocation13], %s642
        %p644 = pneg %p364
        %p645 = pneg %p361
        %s646 = sand.u32 %s40, 1
        %s647 = scalar_lea.sflag [#allocation15], %s646
        %s648 = sand.u32 %s351, 1
        %s649 = smul.addr %s648, 32
        %s650 = scalar_lea.vmem [#allocation14], %s649
        %p651 = pneg %p390
        %p652 = pneg %p387
        %s653 = sand.u32 %s40, 1
        %s654 = scalar_lea.sflag [#allocation15], %s653
        %s655 = sand.u32 %s377, 1
        %s656 = smul.addr %s655, 96
        %s657 = scalar_lea.vmem [#allocation16], %s656
        %s658 = smul.u32 4, %s40
        %p659 = scmp.lt.s32.totalorder %s658, 7
        %s660 = scalar_select %p659, %s658, 7
        %s661 = smul.addr %s660, 8
        %s662 = scalar_lea.vmem %s0, %s661
        %s663 = smul.u32 4, %s40
        %s664 = smul.u32 4, %s40
        %s665 = smul.u32 4, %s40
        %p666 = scmp.lt.s32.totalorder %s665, 7
        %s667 = scalar_select %p666, %s665, 7
        %s668 = scalar_lea.vmem %s2, %s667
        %s669 = smul.u32 4, %s40
        %s670 = smul.u32 4, %s40
        %s671 = smul.u32 4, %s40
        %s672 = smul.u32 4, %s40
        %s673 = smul.u32 4, %s40
        %s674 = smul.u32 4, %s40
        %v675 = vld [vmem:[%s662] sm:$0xff]
        %v676 = vld [vmem:[%s662 + $0x8] sm:$0xff]
        %v677 = vld [vmem:[%s662 + $0x10] sm:$0xff]
        %v678 = vld [vmem:[%s662 + $0x18] sm:$0xff]
        %v679 = vld [vmem:[%s554] sm:$0xff]
        %v680 = vld [vmem:[%s554 + $0x8] sm:$0xff]
        %v681 = vld [vmem:[%s554 + $0x10] sm:$0xff]
        %v682 = vld [vmem:[%s554 + $0x18] sm:$0xff]
        %v683 = vld [vmem:[%s554 + $0x20] sm:$0xff]
        %v684 = vld [vmem:[%s554 + $0x28] sm:$0xff]
        %v685 = vld [vmem:[%s554 + $0x30] sm:$0xff]
        %v686 = vld [vmem:[%s554 + $0x38] sm:$0xff]
        %v687 = vld [vmem:[%s554 + $0x40] sm:$0xff]
        %v688 = vld [vmem:[%s554 + $0x48] sm:$0xff]
        %v689 = vld [vmem:[%s554 + $0x50] sm:$0xff]
        %v690 = vld [vmem:[%s554 + $0x58] sm:$0xff]
        %v691 = vld [vmem:[%s554 + $0x60] sm:$0xff]
        %v692 = vld [vmem:[%s554 + $0x68] sm:$0xff]
        %v693 = vld [vmem:[%s554 + $0x70] sm:$0xff]
        %v694 = vld [vmem:[%s554 + $0x78] sm:$0xff]
        %v695 = vld [vmem:[%s554 + $0x80] sm:$0xff]
        %v696 = vld [vmem:[%s554 + $0x88] sm:$0xff]
        %v697 = vld [vmem:[%s554 + $0x90] sm:$0xff]
        %v698 = vld [vmem:[%s554 + $0x98] sm:$0xff]
        %v699 = vld [vmem:[%s554 + $0xa0] sm:$0xff]
        %v700 = vld [vmem:[%s554 + $0xa8] sm:$0xff]
        %v701 = vld [vmem:[%s554 + $0xb0] sm:$0xff]
        %v702 = vld [vmem:[%s554 + $0xb8] sm:$0xff]
        %v703 = vld [vmem:[%s554 + $0xc0] sm:$0xff]
        %v704 = vld [vmem:[%s554 + $0xc8] sm:$0xff]
        %v705 = vld [vmem:[%s554 + $0xd0] sm:$0xff]
        %v706 = vld [vmem:[%s554 + $0xd8] sm:$0xff]
        %v707 = vld [vmem:[%s554 + $0xe0] sm:$0xff]
        %v708 = vld [vmem:[%s554 + $0xe8] sm:$0xff]
        %v709 = vld [vmem:[%s554 + $0xf0] sm:$0xff]
        %v710 = vld [vmem:[%s554 + $0xf8] sm:$0xff]
        %v711 = vld [vmem:[%s554 + $0x100] sm:$0xff]
        %v712 = vld [vmem:[%s554 + $0x108] sm:$0xff]
        %v713 = vld [vmem:[%s554 + $0x110] sm:$0xff]
        %v714 = vld [vmem:[%s554 + $0x118] sm:$0xff]
        %v715 = vld [vmem:[%s554 + $0x120] sm:$0xff]
        %v716 = vld [vmem:[%s554 + $0x128] sm:$0xff]
        %v717 = vld [vmem:[%s554 + $0x130] sm:$0xff]
        %v718 = vld [vmem:[%s554 + $0x138] sm:$0xff]
        %v719 = vld [vmem:[%s554 + $0x140] sm:$0xff]
        %v720 = vld [vmem:[%s554 + $0x148] sm:$0xff]
        %v721 = vld [vmem:[%s554 + $0x150] sm:$0xff]
        %v722 = vld [vmem:[%s554 + $0x158] sm:$0xff]
        %v723 = vld [vmem:[%s554 + $0x160] sm:$0xff]
        %v724 = vld [vmem:[%s554 + $0x168] sm:$0xff]
        %v725 = vld [vmem:[%s554 + $0x170] sm:$0xff]
        %v726 = vld [vmem:[%s554 + $0x178] sm:$0xff]
        %v727 = vld [vmem:[%s554 + $0x180] sm:$0xff]
        %v728 = vld [vmem:[%s554 + $0x188] sm:$0xff]
        %v729 = vld [vmem:[%s554 + $0x190] sm:$0xff]
        %v730 = vld [vmem:[%s554 + $0x198] sm:$0xff]
        %v731 = vld [vmem:[%s554 + $0x1a0] sm:$0xff]
        %v732 = vld [vmem:[%s554 + $0x1a8] sm:$0xff]
        %v733 = vld [vmem:[%s554 + $0x1b0] sm:$0xff]
        %v734 = vld [vmem:[%s554 + $0x1b8] sm:$0xff]
        %v735 = vld [vmem:[%s554 + $0x1c0] sm:$0xff]
        %v736 = vld [vmem:[%s554 + $0x1c8] sm:$0xff]
        %v737 = vld [vmem:[%s554 + $0x1d0] sm:$0xff]
        %v738 = vld [vmem:[%s554 + $0x1d8] sm:$0xff]
        %v739 = vld [vmem:[%s554 + $0x1e0] sm:$0xff]
        %v740 = vld [vmem:[%s554 + $0x1e8] sm:$0xff]
        %v741 = vld [vmem:[%s554 + $0x1f0] sm:$0xff]
        %v742 = vld [vmem:[%s554 + $0x1f8] sm:$0xff]
        %v743 = vld [vmem:[%s563] sm:$0xff]
        %v744 = vld [vmem:[%s563 + $0x8] sm:$0xff]
        %v745 = vld [vmem:[%s563 + $0x10] sm:$0xff]
        %v746 = vld [vmem:[%s563 + $0x18] sm:$0xff]
        %v747 = vld [vmem:[%s563 + $0x20] sm:$0xff]
        %v748 = vld [vmem:[%s563 + $0x28] sm:$0xff]
        %v749 = vld [vmem:[%s563 + $0x30] sm:$0xff]
        %v750 = vld [vmem:[%s563 + $0x38] sm:$0xff]
        %v751 = vld [vmem:[%s563 + $0x40] sm:$0xff]
        %v752 = vld [vmem:[%s563 + $0x48] sm:$0xff]
        %v753 = vld [vmem:[%s563 + $0x50] sm:$0xff]
        %v754 = vld [vmem:[%s563 + $0x58] sm:$0xff]
        %v755 = vld [vmem:[%s563 + $0x60] sm:$0xff]
        %v756 = vld [vmem:[%s563 + $0x68] sm:$0xff]
        %v757 = vld [vmem:[%s563 + $0x70] sm:$0xff]
        %v758 = vld [vmem:[%s563 + $0x78] sm:$0xff]
        %v759 = vld [vmem:[%s563 + $0x80] sm:$0xff]
        %v760 = vld [vmem:[%s563 + $0x88] sm:$0xff]
        %v761 = vld [vmem:[%s563 + $0x90] sm:$0xff]
        %v762 = vld [vmem:[%s563 + $0x98] sm:$0xff]
        %v763 = vld [vmem:[%s563 + $0xa0] sm:$0xff]
        %v764 = vld [vmem:[%s563 + $0xa8] sm:$0xff]
        %v765 = vld [vmem:[%s563 + $0xb0] sm:$0xff]
        %v766 = vld [vmem:[%s563 + $0xb8] sm:$0xff]
        %v767 = vld [vmem:[%s563 + $0xc0] sm:$0xff]
        %v768 = vld [vmem:[%s563 + $0xc8] sm:$0xff]
        %v769 = vld [vmem:[%s563 + $0xd0] sm:$0xff]
        %v770 = vld [vmem:[%s563 + $0xd8] sm:$0xff]
        %v771 = vld [vmem:[%s563 + $0xe0] sm:$0xff]
        %v772 = vld [vmem:[%s563 + $0xe8] sm:$0xff]
        %v773 = vld [vmem:[%s563 + $0xf0] sm:$0xff]
        %v774 = vld [vmem:[%s563 + $0xf8] sm:$0xff]
        %v775 = vld [vmem:[%s572] sm:$0xff]
        %v776 = vld [vmem:[%s572 + $0x8] sm:$0xff]
        %v777 = vld [vmem:[%s572 + $0x10] sm:$0xff]
        %v778 = vld [vmem:[%s572 + $0x18] sm:$0xff]
        %v779 = vld [vmem:[%s572 + $0x20] sm:$0xff]
        %v780 = vld [vmem:[%s572 + $0x28] sm:$0xff]
        %v781 = vld [vmem:[%s572 + $0x30] sm:$0xff]
        %v782 = vld [vmem:[%s572 + $0x38] sm:$0xff]
        %v783 = vld [vmem:[%s572 + $0x40] sm:$0xff]
        %v784 = vld [vmem:[%s572 + $0x48] sm:$0xff]
        %v785 = vld [vmem:[%s572 + $0x50] sm:$0xff]
        %v786 = vld [vmem:[%s572 + $0x58] sm:$0xff]
        %v787 = vld [vmem:[%s572 + $0x60] sm:$0xff]
        %v788 = vld [vmem:[%s572 + $0x68] sm:$0xff]
        %v789 = vld [vmem:[%s572 + $0x70] sm:$0xff]
        %v790 = vld [vmem:[%s572 + $0x78] sm:$0xff]
        %v791 = vld [vmem:[%s572 + $0x80] sm:$0xff]
        %v792 = vld [vmem:[%s572 + $0x88] sm:$0xff]
        %v793 = vld [vmem:[%s572 + $0x90] sm:$0xff]
        %v794 = vld [vmem:[%s572 + $0x98] sm:$0xff]
        %v795 = vld [vmem:[%s572 + $0xa0] sm:$0xff]
        %v796 = vld [vmem:[%s572 + $0xa8] sm:$0xff]
        %v797 = vld [vmem:[%s572 + $0xb0] sm:$0xff]
        %v798 = vld [vmem:[%s572 + $0xb8] sm:$0xff]
        %v799 = vld [vmem:[%s572 + $0xc0] sm:$0xff]
        %v800 = vld [vmem:[%s572 + $0xc8] sm:$0xff]
        %v801 = vld [vmem:[%s572 + $0xd0] sm:$0xff]
        %v802 = vld [vmem:[%s572 + $0xd8] sm:$0xff]
        %v803 = vld [vmem:[%s572 + $0xe0] sm:$0xff]
        %v804 = vld [vmem:[%s572 + $0xe8] sm:$0xff]
        %v805 = vld [vmem:[%s572 + $0xf0] sm:$0xff]
        %v806 = vld [vmem:[%s572 + $0xf8] sm:$0xff]
        %v807 = vld [vmem:[%s668] sm:$0x1]
        %v808 = vld [vmem:[%s668 + $0x1] sm:$0x1]
        %v809 = vld [vmem:[%s668 + $0x2] sm:$0x1]
        %v810 = vld [vmem:[%s668 + $0x3] sm:$0x1]
        %811 = vmatprep.subr.mxu0 0.0
        %812 = vmatpush1.xpose.msra.mxu0 %v679
        %813 = vmatprep.subr.mxu0 0.0
        %814 = vmatpush1.xpose.msra.mxu0 %v680
        %815 = vmatprep.subr.mxu0 0.0
        %816 = vmatpush1.xpose.msra.mxu0 %v681
        %817 = vmatprep.subr.mxu0 0.0
        %818 = vmatpush1.xpose.msra.mxu0 %v682
        %819 = vmatprep.subr.mxu0 0.0
        %820 = vmatpush1.xpose.msra.mxu0 %v683
        %821 = vmatprep.subr.mxu0 0.0
        %822 = vmatpush1.xpose.msra.mxu0 %v684
        %823 = vmatprep.subr.mxu0 0.0
        %824 = vmatpush1.xpose.msra.mxu0 %v685
        %825 = vmatprep.subr.mxu0 0.0
        %826 = vmatpush1.xpose.msra.mxu0 %v686
        %827 = vmatprep.subr.mxu0 0.0
        %828 = vmatpush1.xpose.msra.mxu0 %v687
        %829 = vmatprep.subr.mxu0 0.0
        %830 = vmatpush1.xpose.msra.mxu0 %v688
        %831 = vmatprep.subr.mxu0 0.0
        %832 = vmatpush1.xpose.msra.mxu0 %v689
        %833 = vmatprep.subr.mxu0 0.0
        %834 = vmatpush1.xpose.msra.mxu0 %v690
        %835 = vmatprep.subr.mxu0 0.0
        %836 = vmatpush1.xpose.msra.mxu0 %v691
        %837 = vmatprep.subr.mxu0 0.0
        %838 = vmatpush1.xpose.msra.mxu0 %v692
        %839 = vmatprep.subr.mxu0 0.0
        %840 = vmatpush1.xpose.msra.mxu0 %v693
        %841 = vmatprep.subr.mxu0 0.0
        %842 = vmatpush1.xpose.msra.mxu0 %v694
        %843 = vmatprep.subr.mxu0 0.0
        %844 = vmatpush1.xpose.msra.mxu0 0.0
        %845 = vmatprep.subr.mxu0 0.0
        %846 = vmatpush1.xpose.msra.mxu0 0.0
        %847 = vmatprep.subr.mxu0 0.0
        %848 = vmatpush1.xpose.msra.mxu0 0.0
        %849 = vmatprep.subr.mxu0 0.0
        %850 = vmatpush1.xpose.msra.mxu0 0.0
        %851 = vmatprep.subr.mxu0 0.0
        %852 = vmatpush1.xpose.msra.mxu0 0.0
        %853 = vmatprep.subr.mxu0 0.0
        %854 = vmatpush1.xpose.msra.mxu0 0.0
        %855 = vmatprep.subr.mxu0 0.0
        %856 = vmatpush1.xpose.msra.mxu0 0.0
        %857 = vmatprep.subr.mxu0 0.0
        %858 = vmatpush1.xpose.msra.mxu0 0.0
        %859 = vmatprep.subr.mxu0 0.0
        %860 = vmatpush1.xpose.msra.mxu0 0.0
        %861 = vmatprep.subr.mxu0 0.0
        %862 = vmatpush1.xpose.msra.mxu0 0.0
        %863 = vmatprep.subr.mxu0 0.0
        %864 = vmatpush1.xpose.msra.mxu0 0.0
        %865 = vmatprep.subr.mxu0 0.0
        %866 = vmatpush1.xpose.msra.mxu0 0.0
        %867 = vmatprep.subr.mxu0 0.0
        %868 = vmatpush1.xpose.msra.mxu0 0.0
        %869 = vmatprep.subr.mxu0 0.0
        %870 = vmatpush1.xpose.msra.mxu0 0.0
        %871 = vmatprep.subr.mxu0 0.0
        %872 = vmatpush1.xpose.msra.mxu0 0.0
        %873 = vmatprep.subr.mxu0 0.0
        %874 = vmatpush1.xpose.msra.mxu0 0.0
        %875 = vmatprep.mubr.f32.mxu0 0.0
        %876 = vmatmul.mubr.f32.gmra.mrb[0].mxu0 %v675
        %v877 = vpop.f32.mrb[0].mxu0
        %v878 = vadd.f32 0.0, %v877
        %v879 = vpop.f32.mrb[0].mxu0
        %880 = vdwg.mxu0
        %881 = vmatprep.subr.mxu0 0.0
        %882 = vmatpush1.xpose.msra.mxu0 %v695
        %883 = vmatprep.subr.mxu0 0.0
        %884 = vmatpush1.xpose.msra.mxu0 %v696
        %885 = vmatprep.subr.mxu0 0.0
        %886 = vmatpush1.xpose.msra.mxu0 %v697
        %887 = vmatprep.subr.mxu0 0.0
        %888 = vmatpush1.xpose.msra.mxu0 %v698
        %889 = vmatprep.subr.mxu0 0.0
        %890 = vmatpush1.xpose.msra.mxu0 %v699
        %891 = vmatprep.subr.mxu0 0.0
        %892 = vmatpush1.xpose.msra.mxu0 %v700
        %893 = vmatprep.subr.mxu0 0.0
        %894 = vmatpush1.xpose.msra.mxu0 %v701
        %895 = vmatprep.subr.mxu0 0.0
        %896 = vmatpush1.xpose.msra.mxu0 %v702
        %897 = vmatprep.subr.mxu0 0.0
        %898 = vmatpush1.xpose.msra.mxu0 %v703
        %899 = vmatprep.subr.mxu0 0.0
        %900 = vmatpush1.xpose.msra.mxu0 %v704
        %901 = vmatprep.subr.mxu0 0.0
        %902 = vmatpush1.xpose.msra.mxu0 %v705
        %903 = vmatprep.subr.mxu0 0.0
        %904 = vmatpush1.xpose.msra.mxu0 %v706
        %905 = vmatprep.subr.mxu0 0.0
        %906 = vmatpush1.xpose.msra.mxu0 %v707
        %907 = vmatprep.subr.mxu0 0.0
        %908 = vmatpush1.xpose.msra.mxu0 %v708
        %909 = vmatprep.subr.mxu0 0.0
        %910 = vmatpush1.xpose.msra.mxu0 %v709
        %911 = vmatprep.subr.mxu0 0.0
        %912 = vmatpush1.xpose.msra.mxu0 %v710
        %913 = vmatprep.subr.mxu0 0.0
        %914 = vmatpush1.xpose.msra.mxu0 0.0
        %915 = vmatprep.subr.mxu0 0.0
        %916 = vmatpush1.xpose.msra.mxu0 0.0
        %917 = vmatprep.subr.mxu0 0.0
        %918 = vmatpush1.xpose.msra.mxu0 0.0
        %919 = vmatprep.subr.mxu0 0.0
        %920 = vmatpush1.xpose.msra.mxu0 0.0
        %921 = vmatprep.subr.mxu0 0.0
        %922 = vmatpush1.xpose.msra.mxu0 0.0
        %923 = vmatprep.subr.mxu0 0.0
        %924 = vmatpush1.xpose.msra.mxu0 0.0
        %925 = vmatprep.subr.mxu0 0.0
        %926 = vmatpush1.xpose.msra.mxu0 0.0
        %927 = vmatprep.subr.mxu0 0.0
        %928 = vmatpush1.xpose.msra.mxu0 0.0
        %929 = vmatprep.subr.mxu0 0.0
        %930 = vmatpush1.xpose.msra.mxu0 0.0
        %931 = vmatprep.subr.mxu0 0.0
        %932 = vmatpush1.xpose.msra.mxu0 0.0
        %933 = vmatprep.subr.mxu0 0.0
        %934 = vmatpush1.xpose.msra.mxu0 0.0
        %935 = vmatprep.subr.mxu0 0.0
        %936 = vmatpush1.xpose.msra.mxu0 0.0
        %937 = vmatprep.subr.mxu0 0.0
        %938 = vmatpush1.xpose.msra.mxu0 0.0
        %939 = vmatprep.subr.mxu0 0.0
        %940 = vmatpush1.xpose.msra.mxu0 0.0
        %941 = vmatprep.subr.mxu0 0.0
        %942 = vmatpush1.xpose.msra.mxu0 0.0
        %943 = vmatprep.subr.mxu0 0.0
        %944 = vmatpush1.xpose.msra.mxu0 0.0
        %945 = vmatprep.mubr.f32.mxu0 0.0
        %946 = vmatmul.mubr.f32.gmra.mrb[0].mxu0 %v676
        %v947 = vpop.f32.mrb[0].mxu0
        %v948 = vadd.f32 0.0, %v947
        %v949 = vpop.f32.mrb[0].mxu0
        %950 = vdwg.mxu0
        %951 = vmatprep.subr.mxu0 0.0
        %952 = vmatpush1.xpose.msra.mxu0 %v711
        %953 = vmatprep.subr.mxu0 0.0
        %954 = vmatpush1.xpose.msra.mxu0 %v712
        %955 = vmatprep.subr.mxu0 0.0
        %956 = vmatpush1.xpose.msra.mxu0 %v713
        %957 = vmatprep.subr.mxu0 0.0
        %958 = vmatpush1.xpose.msra.mxu0 %v714
        %959 = vmatprep.subr.mxu0 0.0
        %960 = vmatpush1.xpose.msra.mxu0 %v715
        %961 = vmatprep.subr.mxu0 0.0
        %962 = vmatpush1.xpose.msra.mxu0 %v716
        %963 = vmatprep.subr.mxu0 0.0
        %964 = vmatpush1.xpose.msra.mxu0 %v717
        %965 = vmatprep.subr.mxu0 0.0
        %966 = vmatpush1.xpose.msra.mxu0 %v718
        %967 = vmatprep.subr.mxu0 0.0
        %968 = vmatpush1.xpose.msra.mxu0 %v719
        %969 = vmatprep.subr.mxu0 0.0
        %970 = vmatpush1.xpose.msra.mxu0 %v720
        %971 = vmatprep.subr.mxu0 0.0
        %972 = vmatpush1.xpose.msra.mxu0 %v721
        %973 = vmatprep.subr.mxu0 0.0
        %974 = vmatpush1.xpose.msra.mxu0 %v722
        %975 = vmatprep.subr.mxu0 0.0
        %976 = vmatpush1.xpose.msra.mxu0 %v723
        %977 = vmatprep.subr.mxu0 0.0
        %978 = vmatpush1.xpose.msra.mxu0 %v724
        %979 = vmatprep.subr.mxu0 0.0
        %980 = vmatpush1.xpose.msra.mxu0 %v725
        %981 = vmatprep.subr.mxu0 0.0
        %982 = vmatpush1.xpose.msra.mxu0 %v726
        %983 = vmatprep.subr.mxu0 0.0
        %984 = vmatpush1.xpose.msra.mxu0 0.0
        %985 = vmatprep.subr.mxu0 0.0
        %986 = vmatpush1.xpose.msra.mxu0 0.0
        %987 = vmatprep.subr.mxu0 0.0
        %988 = vmatpush1.xpose.msra.mxu0 0.0
        %989 = vmatprep.subr.mxu0 0.0
        %990 = vmatpush1.xpose.msra.mxu0 0.0
        %991 = vmatprep.subr.mxu0 0.0
        %992 = vmatpush1.xpose.msra.mxu0 0.0
        %993 = vmatprep.subr.mxu0 0.0
        %994 = vmatpush1.xpose.msra.mxu0 0.0
        %995 = vmatprep.subr.mxu0 0.0
        %996 = vmatpush1.xpose.msra.mxu0 0.0
        %997 = vmatprep.subr.mxu0 0.0
        %998 = vmatpush1.xpose.msra.mxu0 0.0
        %999 = vmatprep.subr.mxu0 0.0
        %1000 = vmatpush1.xpose.msra.mxu0 0.0
        %1001 = vmatprep.subr.mxu0 0.0
        %1002 = vmatpush1.xpose.msra.mxu0 0.0
        %1003 = vmatprep.subr.mxu0 0.0
        %1004 = vmatpush1.xpose.msra.mxu0 0.0
        %1005 = vmatprep.subr.mxu0 0.0
        %1006 = vmatpush1.xpose.msra.mxu0 0.0
        %1007 = vmatprep.subr.mxu0 0.0
        %1008 = vmatpush1.xpose.msra.mxu0 0.0
        %1009 = vmatprep.subr.mxu0 0.0
        %1010 = vmatpush1.xpose.msra.mxu0 0.0
        %1011 = vmatprep.subr.mxu0 0.0
        %1012 = vmatpush1.xpose.msra.mxu0 0.0
        %1013 = vmatprep.subr.mxu0 0.0
        %1014 = vmatpush1.xpose.msra.mxu0 0.0
        %1015 = vmatprep.mubr.f32.mxu0 0.0
        %1016 = vmatmul.mubr.f32.gmra.mrb[0].mxu0 %v677
        %v1017 = vpop.f32.mrb[0].mxu0
        %v1018 = vadd.f32 0.0, %v1017
        %v1019 = vpop.f32.mrb[0].mxu0
        %1020 = vdwg.mxu0
        %1021 = vmatprep.subr.mxu0 0.0
        %1022 = vmatpush1.xpose.msra.mxu0 %v727
        %1023 = vmatprep.subr.mxu0 0.0
        %1024 = vmatpush1.xpose.msra.mxu0 %v728
        %1025 = vmatprep.subr.mxu0 0.0
        %1026 = vmatpush1.xpose.msra.mxu0 %v729
        %1027 = vmatprep.subr.mxu0 0.0
        %1028 = vmatpush1.xpose.msra.mxu0 %v730
        %1029 = vmatprep.subr.mxu0 0.0
        %1030 = vmatpush1.xpose.msra.mxu0 %v731
        %1031 = vmatprep.subr.mxu0 0.0
        %1032 = vmatpush1.xpose.msra.mxu0 %v732
        %1033 = vmatprep.subr.mxu0 0.0
        %1034 = vmatpush1.xpose.msra.mxu0 %v733
        %1035 = vmatprep.subr.mxu0 0.0
        %1036 = vmatpush1.xpose.msra.mxu0 %v734
        %1037 = vmatprep.subr.mxu0 0.0
        %1038 = vmatpush1.xpose.msra.mxu0 %v735
        %1039 = vmatprep.subr.mxu0 0.0
        %1040 = vmatpush1.xpose.msra.mxu0 %v736
        %1041 = vmatprep.subr.mxu0 0.0
        %1042 = vmatpush1.xpose.msra.mxu0 %v737
        %1043 = vmatprep.subr.mxu0 0.0
        %1044 = vmatpush1.xpose.msra.mxu0 %v738
        %1045 = vmatprep.subr.mxu0 0.0
        %1046 = vmatpush1.xpose.msra.mxu0 %v739
        %1047 = vmatprep.subr.mxu0 0.0
        %1048 = vmatpush1.xpose.msra.mxu0 %v740
        %1049 = vmatprep.subr.mxu0 0.0
        %1050 = vmatpush1.xpose.msra.mxu0 %v741
        %1051 = vmatprep.subr.mxu0 0.0
        %1052 = vmatpush1.xpose.msra.mxu0 %v742
        %1053 = vmatprep.subr.mxu0 0.0
        %1054 = vmatpush1.xpose.msra.mxu0 0.0
        %1055 = vmatprep.subr.mxu0 0.0
        %1056 = vmatpush1.xpose.msra.mxu0 0.0
        %1057 = vmatprep.subr.mxu0 0.0
        %1058 = vmatpush1.xpose.msra.mxu0 0.0
        %1059 = vmatprep.subr.mxu0 0.0
        %1060 = vmatpush1.xpose.msra.mxu0 0.0
        %1061 = vmatprep.subr.mxu0 0.0
        %1062 = vmatpush1.xpose.msra.mxu0 0.0
        %1063 = vmatprep.subr.mxu0 0.0
        %1064 = vmatpush1.xpose.msra.mxu0 0.0
        %1065 = vmatprep.subr.mxu0 0.0
        %1066 = vmatpush1.xpose.msra.mxu0 0.0
        %1067 = vmatprep.subr.mxu0 0.0
        %1068 = vmatpush1.xpose.msra.mxu0 0.0
        %1069 = vmatprep.subr.mxu0 0.0
        %1070 = vmatpush1.xpose.msra.mxu0 0.0
        %1071 = vmatprep.subr.mxu0 0.0
        %1072 = vmatpush1.xpose.msra.mxu0 0.0
        %1073 = vmatprep.subr.mxu0 0.0
        %1074 = vmatpush1.xpose.msra.mxu0 0.0
        %1075 = vmatprep.subr.mxu0 0.0
        %1076 = vmatpush1.xpose.msra.mxu0 0.0
        %1077 = vmatprep.subr.mxu0 0.0
        %1078 = vmatpush1.xpose.msra.mxu0 0.0
        %1079 = vmatprep.subr.mxu0 0.0
        %1080 = vmatpush1.xpose.msra.mxu0 0.0
        %1081 = vmatprep.subr.mxu0 0.0
        %1082 = vmatpush1.xpose.msra.mxu0 0.0
        %1083 = vmatprep.subr.mxu0 0.0
        %1084 = vmatpush1.xpose.msra.mxu0 0.0
        %1085 = vmatprep.mubr.f32.mxu0 0.0
        %1086 = vmatmul.mubr.f32.gmra.mrb[0].mxu0 %v678
        %v1087 = vpop.f32.mrb[0].mxu0
        %v1088 = vadd.f32 0.0, %v1087
        %v1089 = vpop.f32.mrb[0].mxu0
        %1090 = vdwg.mxu0
        %1091 = vmax.xlane.f32.xlu0 %v878
        %v1092 = vpop.xlane.xlu0 %1091
        %1093 = vmax.xlane.f32.xlu0 %v948
        %v1094 = vpop.xlane.xlu0 %1093
        %1095 = vmax.xlane.f32.xlu0 %v1018
        %v1096 = vpop.xlane.xlu0 %1095
        %1097 = vmax.xlane.f32.xlu0 %v1088
        %v1098 = vpop.xlane.xlu0 %1097
        %v1099 = vsub.f32 %v878, %v1092
        %v1100 = vsub.f32 %v948, %v1094
        %v1101 = vsub.f32 %v1018, %v1096
        %v1102 = vsub.f32 %v1088, %v1098
        %v1103 = vmul.f32 %v1099, 1.442695
        %v1104 = vpow.pop %v1103
        %v1105 = vmul.f32 %v1100, 1.442695
        %v1106 = vpow.pop %v1105
        %v1107 = vmul.f32 %v1101, 1.442695
        %v1108 = vpow.pop %v1107
        %v1109 = vmul.f32 %v1102, 1.442695
        %v1110 = vpow.pop %v1109
        %1111 = vadd.xlane.f32.xlu0 %v1104
        %v1112 = vpop.xlane.xlu0 %1111
        %1113 = vadd.xlane.f32.xlu0 %v1106
        %v1114 = vpop.xlane.xlu0 %1113
        %1115 = vadd.xlane.f32.xlu0 %v1108
        %v1116 = vpop.xlane.xlu0 %1115
        %1117 = vadd.xlane.f32.xlu0 %v1110
        %v1118 = vpop.xlane.xlu0 %1117
        %v1119 = vrcp.pop %v1112
        %v1120 = vrcp.pop %v1114
        %v1121 = vrcp.pop %v1116
        %v1122 = vrcp.pop %v1118
        %v1123 = vmul.f32 %v1104, %v1119
        %v1124 = vmul.f32 %v1106, %v1120
        %v1125 = vmul.f32 %v1108, %v1121
        %v1126 = vmul.f32 %v1110, %v1122
        %1127 = vmatprep.subr.mxu0 0.0
        %1128 = vmatpush1.msra.mxu0 %v679
        %1129 = vmatprep.subr.mxu0 0.0
        %1130 = vmatpush1.msra.mxu0 %v680
        %1131 = vmatprep.subr.mxu0 0.0
        %1132 = vmatpush1.msra.mxu0 %v681
        %1133 = vmatprep.subr.mxu0 0.0
        %1134 = vmatpush1.msra.mxu0 %v682
        %1135 = vmatprep.subr.mxu0 0.0
        %1136 = vmatpush1.msra.mxu0 %v683
        %1137 = vmatprep.subr.mxu0 0.0
        %1138 = vmatpush1.msra.mxu0 %v684
        %1139 = vmatprep.subr.mxu0 0.0
        %1140 = vmatpush1.msra.mxu0 %v685
        %1141 = vmatprep.subr.mxu0 0.0
        %1142 = vmatpush1.msra.mxu0 %v686
        %1143 = vmatprep.subr.mxu0 0.0
        %1144 = vmatpush1.msra.mxu0 %v687
        %1145 = vmatprep.subr.mxu0 0.0
        %1146 = vmatpush1.msra.mxu0 %v688
        %1147 = vmatprep.subr.mxu0 0.0
        %1148 = vmatpush1.msra.mxu0 %v689
        %1149 = vmatprep.subr.mxu0 0.0
        %1150 = vmatpush1.msra.mxu0 %v690
        %1151 = vmatprep.subr.mxu0 0.0
        %1152 = vmatpush1.msra.mxu0 %v691
        %1153 = vmatprep.subr.mxu0 0.0
        %1154 = vmatpush1.msra.mxu0 %v692
        %1155 = vmatprep.subr.mxu0 0.0
        %1156 = vmatpush1.msra.mxu0 %v693
        %1157 = vmatprep.subr.mxu0 0.0
        %1158 = vmatpush1.msra.mxu0 %v694
        %1159 = vmatprep.subr.mxu0 0.0
        %1160 = vmatpush1.msra.mxu0 0.0
        %1161 = vmatprep.subr.mxu0 0.0
        %1162 = vmatpush1.msra.mxu0 0.0
        %1163 = vmatprep.subr.mxu0 0.0
        %1164 = vmatpush1.msra.mxu0 0.0
        %1165 = vmatprep.subr.mxu0 0.0
        %1166 = vmatpush1.msra.mxu0 0.0
        %1167 = vmatprep.subr.mxu0 0.0
        %1168 = vmatpush1.msra.mxu0 0.0
        %1169 = vmatprep.subr.mxu0 0.0
        %1170 = vmatpush1.msra.mxu0 0.0
        %1171 = vmatprep.subr.mxu0 0.0
        %1172 = vmatpush1.msra.mxu0 0.0
        %1173 = vmatprep.subr.mxu0 0.0
        %1174 = vmatpush1.msra.mxu0 0.0
        %1175 = vmatprep.subr.mxu0 0.0
        %1176 = vmatpush1.msra.mxu0 0.0
        %1177 = vmatprep.subr.mxu0 0.0
        %1178 = vmatpush1.msra.mxu0 0.0
        %1179 = vmatprep.subr.mxu0 0.0
        %1180 = vmatpush1.msra.mxu0 0.0
        %1181 = vmatprep.subr.mxu0 0.0
        %1182 = vmatpush1.msra.mxu0 0.0
        %1183 = vmatprep.subr.mxu0 0.0
        %1184 = vmatpush1.msra.mxu0 0.0
        %1185 = vmatprep.subr.mxu0 0.0
        %1186 = vmatpush1.msra.mxu0 0.0
        %1187 = vmatprep.subr.mxu0 0.0
        %1188 = vmatpush1.msra.mxu0 0.0
        %1189 = vmatprep.subr.mxu0 0.0
        %1190 = vmatpush1.msra.mxu0 0.0
        %1191 = vmatprep.mubr.f32.mxu0 0.0
        %1192 = vmatmul.mubr.f32.gmra.mrb[0].mxu0 %v1123
        %v1193 = vpop.f32.mrb[0].mxu0
        %v1194 = vadd.f32 0.0, %v1193
        %v1195 = vpop.f32.mrb[0].mxu0
        %1196 = vdwg.mxu0
        %1197 = vmatprep.subr.mxu0 0.0
        %1198 = vmatpush1.msra.mxu0 %v695
        %1199 = vmatprep.subr.mxu0 0.0
        %1200 = vmatpush1.msra.mxu0 %v696
        %1201 = vmatprep.subr.mxu0 0.0
        %1202 = vmatpush1.msra.mxu0 %v697
        %1203 = vmatprep.subr.mxu0 0.0
        %1204 = vmatpush1.msra.mxu0 %v698
        %1205 = vmatprep.subr.mxu0 0.0
        %1206 = vmatpush1.msra.mxu0 %v699
        %1207 = vmatprep.subr.mxu0 0.0
        %1208 = vmatpush1.msra.mxu0 %v700
        %1209 = vmatprep.subr.mxu0 0.0
        %1210 = vmatpush1.msra.mxu0 %v701
        %1211 = vmatprep.subr.mxu0 0.0
        %1212 = vmatpush1.msra.mxu0 %v702
        %1213 = vmatprep.subr.mxu0 0.0
        %1214 = vmatpush1.msra.mxu0 %v703
        %1215 = vmatprep.subr.mxu0 0.0
        %1216 = vmatpush1.msra.mxu0 %v704
        %1217 = vmatprep.subr.mxu0 0.0
        %1218 = vmatpush1.msra.mxu0 %v705
        %1219 = vmatprep.subr.mxu0 0.0
        %1220 = vmatpush1.msra.mxu0 %v706
        %1221 = vmatprep.subr.mxu0 0.0
        %1222 = vmatpush1.msra.mxu0 %v707
        %1223 = vmatprep.subr.mxu0 0.0
        %1224 = vmatpush1.msra.mxu0 %v708
        %1225 = vmatprep.subr.mxu0 0.0
        %1226 = vmatpush1.msra.mxu0 %v709
        %1227 = vmatprep.subr.mxu0 0.0
        %1228 = vmatpush1.msra.mxu0 %v710
        %1229 = vmatprep.subr.mxu0 0.0
        %1230 = vmatpush1.msra.mxu0 0.0
        %1231 = vmatprep.subr.mxu0 0.0
        %1232 = vmatpush1.msra.mxu0 0.0
        %1233 = vmatprep.subr.mxu0 0.0
        %1234 = vmatpush1.msra.mxu0 0.0
        %1235 = vmatprep.subr.mxu0 0.0
        %1236 = vmatpush1.msra.mxu0 0.0
        %1237 = vmatprep.subr.mxu0 0.0
        %1238 = vmatpush1.msra.mxu0 0.0
        %1239 = vmatprep.subr.mxu0 0.0
        %1240 = vmatpush1.msra.mxu0 0.0
        %1241 = vmatprep.subr.mxu0 0.0
        %1242 = vmatpush1.msra.mxu0 0.0
        %1243 = vmatprep.subr.mxu0 0.0
        %1244 = vmatpush1.msra.mxu0 0.0
        %1245 = vmatprep.subr.mxu0 0.0
        %1246 = vmatpush1.msra.mxu0 0.0
        %1247 = vmatprep.subr.mxu0 0.0
        %1248 = vmatpush1.msra.mxu0 0.0
        %1249 = vmatprep.subr.mxu0 0.0
        %1250 = vmatpush1.msra.mxu0 0.0
        %1251 = vmatprep.subr.mxu0 0.0
        %1252 = vmatpush1.msra.mxu0 0.0
        %1253 = vmatprep.subr.mxu0 0.0
        %1254 = vmatpush1.msra.mxu0 0.0
        %1255 = vmatprep.subr.mxu0 0.0
        %1256 = vmatpush1.msra.mxu0 0.0
        %1257 = vmatprep.subr.mxu0 0.0
        %1258 = vmatpush1.msra.mxu0 0.0
        %1259 = vmatprep.subr.mxu0 0.0
        %1260 = vmatpush1.msra.mxu0 0.0
        %1261 = vmatprep.mubr.f32.mxu0 0.0
        %1262 = vmatmul.mubr.f32.gmra.mrb[0].mxu0 %v1124
        %v1263 = vpop.f32.mrb[0].mxu0
        %v1264 = vadd.f32 0.0, %v1263
        %v1265 = vpop.f32.mrb[0].mxu0
        %1266 = vdwg.mxu0
        %1267 = vmatprep.subr.mxu0 0.0
        %1268 = vmatpush1.msra.mxu0 %v711
        %1269 = vmatprep.subr.mxu0 0.0
        %1270 = vmatpush1.msra.mxu0 %v712
        %1271 = vmatprep.subr.mxu0 0.0
        %1272 = vmatpush1.msra.mxu0 %v713
        %1273 = vmatprep.subr.mxu0 0.0
        %1274 = vmatpush1.msra.mxu0 %v714
        %1275 = vmatprep.subr.mxu0 0.0
        %1276 = vmatpush1.msra.mxu0 %v715
        %1277 = vmatprep.subr.mxu0 0.0
        %1278 = vmatpush1.msra.mxu0 %v716
        %1279 = vmatprep.subr.mxu0 0.0
        %1280 = vmatpush1.msra.mxu0 %v717
        %1281 = vmatprep.subr.mxu0 0.0
        %1282 = vmatpush1.msra.mxu0 %v718
        %1283 = vmatprep.subr.mxu0 0.0
        %1284 = vmatpush1.msra.mxu0 %v719
        %1285 = vmatprep.subr.mxu0 0.0
        %1286 = vmatpush1.msra.mxu0 %v720
        %1287 = vmatprep.subr.mxu0 0.0
        %1288 = vmatpush1.msra.mxu0 %v721
        %1289 = vmatprep.subr.mxu0 0.0
        %1290 = vmatpush1.msra.mxu0 %v722
        %1291 = vmatprep.subr.mxu0 0.0
        %1292 = vmatpush1.msra.mxu0 %v723
        %1293 = vmatprep.subr.mxu0 0.0
        %1294 = vmatpush1.msra.mxu0 %v724
        %1295 = vmatprep.subr.mxu0 0.0
        %1296 = vmatpush1.msra.mxu0 %v725
        %1297 = vmatprep.subr.mxu0 0.0
        %1298 = vmatpush1.msra.mxu0 %v726
        %1299 = vmatprep.subr.mxu0 0.0
        %1300 = vmatpush1.msra.mxu0 0.0
        %1301 = vmatprep.subr.mxu0 0.0
        %1302 = vmatpush1.msra.mxu0 0.0
        %1303 = vmatprep.subr.mxu0 0.0
        %1304 = vmatpush1.msra.mxu0 0.0
        %1305 = vmatprep.subr.mxu0 0.0
        %1306 = vmatpush1.msra.mxu0 0.0
        %1307 = vmatprep.subr.mxu0 0.0
        %1308 = vmatpush1.msra.mxu0 0.0
        %1309 = vmatprep.subr.mxu0 0.0
        %1310 = vmatpush1.msra.mxu0 0.0
        %1311 = vmatprep.subr.mxu0 0.0
        %1312 = vmatpush1.msra.mxu0 0.0
        %1313 = vmatprep.subr.mxu0 0.0
        %1314 = vmatpush1.msra.mxu0 0.0
        %1315 = vmatprep.subr.mxu0 0.0
        %1316 = vmatpush1.msra.mxu0 0.0
        %1317 = vmatprep.subr.mxu0 0.0
        %1318 = vmatpush1.msra.mxu0 0.0
        %1319 = vmatprep.subr.mxu0 0.0
        %1320 = vmatpush1.msra.mxu0 0.0
        %1321 = vmatprep.subr.mxu0 0.0
        %1322 = vmatpush1.msra.mxu0 0.0
        %1323 = vmatprep.subr.mxu0 0.0
        %1324 = vmatpush1.msra.mxu0 0.0
        %1325 = vmatprep.subr.mxu0 0.0
        %1326 = vmatpush1.msra.mxu0 0.0
        %1327 = vmatprep.subr.mxu0 0.0
        %1328 = vmatpush1.msra.mxu0 0.0
        %1329 = vmatprep.subr.mxu0 0.0
        %1330 = vmatpush1.msra.mxu0 0.0
        %1331 = vmatprep.mubr.f32.mxu0 0.0
        %1332 = vmatmul.mubr.f32.gmra.mrb[0].mxu0 %v1125
        %v1333 = vpop.f32.mrb[0].mxu0
        %v1334 = vadd.f32 0.0, %v1333
        %v1335 = vpop.f32.mrb[0].mxu0
        %1336 = vdwg.mxu0
        %1337 = vmatprep.subr.mxu0 0.0
        %1338 = vmatpush1.msra.mxu0 %v727
        %1339 = vmatprep.subr.mxu0 0.0
        %1340 = vmatpush1.msra.mxu0 %v728
        %1341 = vmatprep.subr.mxu0 0.0
        %1342 = vmatpush1.msra.mxu0 %v729
        %1343 = vmatprep.subr.mxu0 0.0
        %1344 = vmatpush1.msra.mxu0 %v730
        %1345 = vmatprep.subr.mxu0 0.0
        %1346 = vmatpush1.msra.mxu0 %v731
        %1347 = vmatprep.subr.mxu0 0.0
        %1348 = vmatpush1.msra.mxu0 %v732
        %1349 = vmatprep.subr.mxu0 0.0
        %1350 = vmatpush1.msra.mxu0 %v733
        %1351 = vmatprep.subr.mxu0 0.0
        %1352 = vmatpush1.msra.mxu0 %v734
        %1353 = vmatprep.subr.mxu0 0.0
        %1354 = vmatpush1.msra.mxu0 %v735
        %1355 = vmatprep.subr.mxu0 0.0
        %1356 = vmatpush1.msra.mxu0 %v736
        %1357 = vmatprep.subr.mxu0 0.0
        %1358 = vmatpush1.msra.mxu0 %v737
        %1359 = vmatprep.subr.mxu0 0.0
        %1360 = vmatpush1.msra.mxu0 %v738
        %1361 = vmatprep.subr.mxu0 0.0
        %1362 = vmatpush1.msra.mxu0 %v739
        %1363 = vmatprep.subr.mxu0 0.0
        %1364 = vmatpush1.msra.mxu0 %v740
        %1365 = vmatprep.subr.mxu0 0.0
        %1366 = vmatpush1.msra.mxu0 %v741
        %1367 = vmatprep.subr.mxu0 0.0
        %1368 = vmatpush1.msra.mxu0 %v742
        %1369 = vmatprep.subr.mxu0 0.0
        %1370 = vmatpush1.msra.mxu0 0.0
        %1371 = vmatprep.subr.mxu0 0.0
        %1372 = vmatpush1.msra.mxu0 0.0
        %1373 = vmatprep.subr.mxu0 0.0
        %1374 = vmatpush1.msra.mxu0 0.0
        %1375 = vmatprep.subr.mxu0 0.0
        %1376 = vmatpush1.msra.mxu0 0.0
        %1377 = vmatprep.subr.mxu0 0.0
        %1378 = vmatpush1.msra.mxu0 0.0
        %1379 = vmatprep.subr.mxu0 0.0
        %1380 = vmatpush1.msra.mxu0 0.0
        %1381 = vmatprep.subr.mxu0 0.0
        %1382 = vmatpush1.msra.mxu0 0.0
        %1383 = vmatprep.subr.mxu0 0.0
        %1384 = vmatpush1.msra.mxu0 0.0
        %1385 = vmatprep.subr.mxu0 0.0
        %1386 = vmatpush1.msra.mxu0 0.0
        %1387 = vmatprep.subr.mxu0 0.0
        %1388 = vmatpush1.msra.mxu0 0.0
        %1389 = vmatprep.subr.mxu0 0.0
        %1390 = vmatpush1.msra.mxu0 0.0
        %1391 = vmatprep.subr.mxu0 0.0
        %1392 = vmatpush1.msra.mxu0 0.0
        %1393 = vmatprep.subr.mxu0 0.0
        %1394 = vmatpush1.msra.mxu0 0.0
        %1395 = vmatprep.subr.mxu0 0.0
        %1396 = vmatpush1.msra.mxu0 0.0
        %1397 = vmatprep.subr.mxu0 0.0
        %1398 = vmatpush1.msra.mxu0 0.0
        %1399 = vmatprep.subr.mxu0 0.0
        %1400 = vmatpush1.msra.mxu0 0.0
        %1401 = vmatprep.mubr.f32.mxu0 0.0
        %1402 = vmatmul.mubr.f32.gmra.mrb[0].mxu0 %v1126
        %v1403 = vpop.f32.mrb[0].mxu0
        %v1404 = vadd.f32 0.0, %v1403
        %v1405 = vpop.f32.mrb[0].mxu0
        %1406 = vdwg.mxu0
        %v1407 = vld [vmem:[%s5] sm:$0xff]
        %v1408 = vld [vmem:[%s5 + $0x8] sm:$0xff]
        %v1409 = vld [vmem:[%s5 + $0x10] sm:$0xff]
        %v1410 = vld [vmem:[%s5 + $0x18] sm:$0xff]
        %v1411 = vld [vmem:[%s5 + $0x20] sm:$0xff]
        %v1412 = vld [vmem:[%s5 + $0x28] sm:$0xff]
        %v1413 = vld [vmem:[%s5 + $0x30] sm:$0xff]
        %v1414 = vld [vmem:[%s5 + $0x38] sm:$0xff]
        %v1415 = vld [vmem:[%s5 + $0x40] sm:$0xff]
        %v1416 = vld [vmem:[%s5 + $0x48] sm:$0xff]
        %v1417 = vld [vmem:[%s5 + $0x50] sm:$0xff]
        %v1418 = vld [vmem:[%s5 + $0x58] sm:$0xff]
        %v1419 = vld [vmem:[%s5 + $0x60] sm:$0xff]
        %v1420 = vld [vmem:[%s5 + $0x68] sm:$0xff]
        %v1421 = vld [vmem:[%s5 + $0x70] sm:$0xff]
        %v1422 = vld [vmem:[%s5 + $0x78] sm:$0xff]
        %v1423 = vld [vmem:[%s6] sm:$0x1]
        %v1425 = vlaneseq
        %v1426 = vshrl.u32 %v1425, 7
        %v1427 = vsub.s32 0, %v1426
        %v1428 = vrot.slane %v1423, %v1427
        %1430 = vmatprep.subr.mxu0 0.0
        %1431 = vmatpush1.msra.mxu0 %v1407
        %1432 = vmatprep.subr.mxu0 0.0
        %1433 = vmatpush1.msra.mxu0 %v1408
        %1434 = vmatprep.subr.mxu0 0.0
        %1435 = vmatpush1.msra.mxu0 %v1409
        %1436 = vmatprep.subr.mxu0 0.0
        %1437 = vmatpush1.msra.mxu0 %v1410
        %1438 = vmatprep.subr.mxu0 0.0
        %1439 = vmatpush1.msra.mxu0 %v1411
        %1440 = vmatprep.subr.mxu0 0.0
        %1441 = vmatpush1.msra.mxu0 %v1412
        %1442 = vmatprep.subr.mxu0 0.0
        %1443 = vmatpush1.msra.mxu0 %v1413
        %1444 = vmatprep.subr.mxu0 0.0
        %1445 = vmatpush1.msra.mxu0 %v1414
        %1446 = vmatprep.subr.mxu0 0.0
        %1447 = vmatpush1.msra.mxu0 %v1415
        %1448 = vmatprep.subr.mxu0 0.0
        %1449 = vmatpush1.msra.mxu0 %v1416
        %1450 = vmatprep.subr.mxu0 0.0
        %1451 = vmatpush1.msra.mxu0 %v1417
        %1452 = vmatprep.subr.mxu0 0.0
        %1453 = vmatpush1.msra.mxu0 %v1418
        %1454 = vmatprep.subr.mxu0 0.0
        %1455 = vmatpush1.msra.mxu0 %v1419
        %1456 = vmatprep.subr.mxu0 0.0
        %1457 = vmatpush1.msra.mxu0 %v1420
        %1458 = vmatprep.subr.mxu0 0.0
        %1459 = vmatpush1.msra.mxu0 %v1421
        %1460 = vmatprep.subr.mxu0 0.0
        %1461 = vmatpush1.msra.mxu0 %v1422
        %1462 = vmatprep.subr.mxu0 0.0
        %1463 = vmatpush1.msra.mxu0 0.0
        %1464 = vmatprep.subr.mxu0 0.0
        %1465 = vmatpush1.msra.mxu0 0.0
        %1466 = vmatprep.subr.mxu0 0.0
        %1467 = vmatpush1.msra.mxu0 0.0
        %1468 = vmatprep.subr.mxu0 0.0
        %1469 = vmatpush1.msra.mxu0 0.0
        %1470 = vmatprep.subr.mxu0 0.0
        %1471 = vmatpush1.msra.mxu0 0.0
        %1472 = vmatprep.subr.mxu0 0.0
        %1473 = vmatpush1.msra.mxu0 0.0
        %1474 = vmatprep.subr.mxu0 0.0
        %1475 = vmatpush1.msra.mxu0 0.0
        %1476 = vmatprep.subr.mxu0 0.0
        %1477 = vmatpush1.msra.mxu0 0.0
        %1478 = vmatprep.subr.mxu0 0.0
        %1479 = vmatpush1.msra.mxu0 0.0
        %1480 = vmatprep.subr.mxu0 0.0
        %1481 = vmatpush1.msra.mxu0 0.0
        %1482 = vmatprep.subr.mxu0 0.0
        %1483 = vmatpush1.msra.mxu0 0.0
        %1484 = vmatprep.subr.mxu0 0.0
        %1485 = vmatpush1.msra.mxu0 0.0
        %1486 = vmatprep.subr.mxu0 0.0
        %1487 = vmatpush1.msra.mxu0 0.0
        %1488 = vmatprep.subr.mxu0 0.0
        %1489 = vmatpush1.msra.mxu0 0.0
        %1490 = vmatprep.subr.mxu0 0.0
        %1491 = vmatpush1.msra.mxu0 0.0
        %1492 = vmatprep.subr.mxu0 0.0
        %1493 = vmatpush1.msra.mxu0 0.0
        %1494 = vmatprep.mubr.f32.mxu0 0.0
        %1495 = vmatmul.mubr.f32.gmra.mrb[0].mxu0 %v675
        %v1496 = vpop.f32.mrb[0].mxu0
        %v1497 = vadd.f32 %v1428, %v1496
        %v1498 = vpop.f32.mrb[0].mxu0
        %1499 = vmatprep.mubr.f32.mxu0 0.0
        %1500 = vmatmul.mubr.f32.gmra.mrb[0].mxu0 %v676
        %v1501 = vpop.f32.mrb[0].mxu0
        %v1502 = vadd.f32 %v1428, %v1501
        %v1503 = vpop.f32.mrb[0].mxu0
        %1504 = vmatprep.mubr.f32.mxu0 0.0
        %1505 = vmatmul.mubr.f32.gmra.mrb[0].mxu0 %v677
        %v1506 = vpop.f32.mrb[0].mxu0
        %v1507 = vadd.f32 %v1428, %v1506
        %v1508 = vpop.f32.mrb[0].mxu0
        %1509 = vmatprep.mubr.f32.mxu0 0.0
        %1510 = vmatmul.mubr.f32.gmra.mrb[0].mxu0 %v678
        %v1511 = vpop.f32.mrb[0].mxu0
        %v1512 = vadd.f32 %v1428, %v1511
        %v1513 = vpop.f32.mrb[0].mxu0
        %1514 = vdwg.mxu0
        %vm1515 = vcmask 523264
        %v1517 = vsel %vm1515, %v1497, 0
        %v1520 = vsel %vm1515, %v743, 0
        %v1523 = vsel %vm1515, %v744, 0
        %v1526 = vsel %vm1515, %v745, 0
        %v1529 = vsel %vm1515, %v746, 0
        %v1532 = vsel %vm1515, %v747, 0
        %v1535 = vsel %vm1515, %v748, 0
        %v1538 = vsel %vm1515, %v749, 0
        %v1541 = vsel %vm1515, %v750, 0
        %1543 = vmatprep.subr.mxu0 0.0
        %1544 = vmatpush1.xpose.msra.mxu0 %v1520
        %1545 = vmatprep.subr.mxu0 0.0
        %1546 = vmatpush1.xpose.msra.mxu0 %v1523
        %1547 = vmatprep.subr.mxu0 0.0
        %1548 = vmatpush1.xpose.msra.mxu0 %v1526
        %1549 = vmatprep.subr.mxu0 0.0
        %1550 = vmatpush1.xpose.msra.mxu0 %v1529
        %1551 = vmatprep.subr.mxu0 0.0
        %1552 = vmatpush1.xpose.msra.mxu0 %v1532
        %1553 = vmatprep.subr.mxu0 0.0
        %1554 = vmatpush1.xpose.msra.mxu0 %v1535
        %1555 = vmatprep.subr.mxu0 0.0
        %1556 = vmatpush1.xpose.msra.mxu0 %v1538
        %1557 = vmatprep.subr.mxu0 0.0
        %1558 = vmatpush1.xpose.msra.mxu0 %v1541
        %1559 = vmatprep.subr.mxu0 0.0
        %1560 = vmatpush1.xpose.msra.mxu0 0.0
        %1561 = vmatprep.subr.mxu0 0.0
        %1562 = vmatpush1.xpose.msra.mxu0 0.0
        %1563 = vmatprep.subr.mxu0 0.0
        %1564 = vmatpush1.xpose.msra.mxu0 0.0
        %1565 = vmatprep.subr.mxu0 0.0
        %1566 = vmatpush1.xpose.msra.mxu0 0.0
        %1567 = vmatprep.subr.mxu0 0.0
        %1568 = vmatpush1.xpose.msra.mxu0 0.0
        %1569 = vmatprep.subr.mxu0 0.0
        %1570 = vmatpush1.xpose.msra.mxu0 0.0
        %1571 = vmatprep.subr.mxu0 0.0
        %1572 = vmatpush1.xpose.msra.mxu0 0.0
        %1573 = vmatprep.subr.mxu0 0.0
        %1574 = vmatpush1.xpose.msra.mxu0 0.0
        %1575 = vmatprep.subr.mxu0 0.0
        %1576 = vmatpush1.xpose.msra.mxu0 0.0
        %1577 = vmatprep.subr.mxu0 0.0
        %1578 = vmatpush1.xpose.msra.mxu0 0.0
        %1579 = vmatprep.subr.mxu0 0.0
        %1580 = vmatpush1.xpose.msra.mxu0 0.0
        %1581 = vmatprep.subr.mxu0 0.0
        %1582 = vmatpush1.xpose.msra.mxu0 0.0
        %1583 = vmatprep.subr.mxu0 0.0
        %1584 = vmatpush1.xpose.msra.mxu0 0.0
        %1585 = vmatprep.subr.mxu0 0.0
        %1586 = vmatpush1.xpose.msra.mxu0 0.0
        %1587 = vmatprep.subr.mxu0 0.0
        %1588 = vmatpush1.xpose.msra.mxu0 0.0
        %1589 = vmatprep.subr.mxu0 0.0
        %1590 = vmatpush1.xpose.msra.mxu0 0.0
        %1591 = vmatprep.subr.mxu0 0.0
        %1592 = vmatpush1.xpose.msra.mxu0 0.0
        %1593 = vmatprep.subr.mxu0 0.0
        %1594 = vmatpush1.xpose.msra.mxu0 0.0
        %1595 = vmatprep.subr.mxu0 0.0
        %1596 = vmatpush1.xpose.msra.mxu0 0.0
        %1597 = vmatprep.subr.mxu0 0.0
        %1598 = vmatpush1.xpose.msra.mxu0 0.0
        %1599 = vmatprep.subr.mxu0 0.0
        %1600 = vmatpush1.xpose.msra.mxu0 0.0
        %1601 = vmatprep.subr.mxu0 0.0
        %1602 = vmatpush1.xpose.msra.mxu0 0.0
        %1603 = vmatprep.subr.mxu0 0.0
        %1604 = vmatpush1.xpose.msra.mxu0 0.0
        %1605 = vmatprep.subr.mxu0 0.0
        %1606 = vmatpush1.xpose.msra.mxu0 0.0
        %1607 = vmatprep.mubr.f32.mxu0 0.0
        %1608 = vmatmul.mubr.f32.gmra.mrb[0].mxu0 %v1517
        %v1609 = vpop.f32.mrb[0].mxu0
        %v1610 = vadd.f32 0.0, %v1609
        %v1611 = vpop.f32.mrb[0].mxu0
        %1612 = vdwg.mxu0
        %v1614 = vsel %vm1515, %v1502, 0
        %v1617 = vsel %vm1515, %v751, 0
        %v1620 = vsel %vm1515, %v752, 0
        %v1623 = vsel %vm1515, %v753, 0
        %v1626 = vsel %vm1515, %v754, 0
        %v1629 = vsel %vm1515, %v755, 0
        %v1632 = vsel %vm1515, %v756, 0
        %v1635 = vsel %vm1515, %v757, 0
        %v1638 = vsel %vm1515, %v758, 0
        %1640 = vmatprep.subr.mxu0 0.0
        %1641 = vmatpush1.xpose.msra.mxu0 %v1617
        %1642 = vmatprep.subr.mxu0 0.0
        %1643 = vmatpush1.xpose.msra.mxu0 %v1620
        %1644 = vmatprep.subr.mxu0 0.0
        %1645 = vmatpush1.xpose.msra.mxu0 %v1623
        %1646 = vmatprep.subr.mxu0 0.0
        %1647 = vmatpush1.xpose.msra.mxu0 %v1626
        %1648 = vmatprep.subr.mxu0 0.0
        %1649 = vmatpush1.xpose.msra.mxu0 %v1629
        %1650 = vmatprep.subr.mxu0 0.0
        %1651 = vmatpush1.xpose.msra.mxu0 %v1632
        %1652 = vmatprep.subr.mxu0 0.0
        %1653 = vmatpush1.xpose.msra.mxu0 %v1635
        %1654 = vmatprep.subr.mxu0 0.0
        %1655 = vmatpush1.xpose.msra.mxu0 %v1638
        %1656 = vmatprep.subr.mxu0 0.0
        %1657 = vmatpush1.xpose.msra.mxu0 0.0
        %1658 = vmatprep.subr.mxu0 0.0
        %1659 = vmatpush1.xpose.msra.mxu0 0.0
        %1660 = vmatprep.subr.mxu0 0.0
        %1661 = vmatpush1.xpose.msra.mxu0 0.0
        %1662 = vmatprep.subr.mxu0 0.0
        %1663 = vmatpush1.xpose.msra.mxu0 0.0
        %1664 = vmatprep.subr.mxu0 0.0
        %1665 = vmatpush1.xpose.msra.mxu0 0.0
        %1666 = vmatprep.subr.mxu0 0.0
        %1667 = vmatpush1.xpose.msra.mxu0 0.0
        %1668 = vmatprep.subr.mxu0 0.0
        %1669 = vmatpush1.xpose.msra.mxu0 0.0
        %1670 = vmatprep.subr.mxu0 0.0
        %1671 = vmatpush1.xpose.msra.mxu0 0.0
        %1672 = vmatprep.subr.mxu0 0.0
        %1673 = vmatpush1.xpose.msra.mxu0 0.0
        %1674 = vmatprep.subr.mxu0 0.0
        %1675 = vmatpush1.xpose.msra.mxu0 0.0
        %1676 = vmatprep.subr.mxu0 0.0
        %1677 = vmatpush1.xpose.msra.mxu0 0.0
        %1678 = vmatprep.subr.mxu0 0.0
        %1679 = vmatpush1.xpose.msra.mxu0 0.0
        %1680 = vmatprep.subr.mxu0 0.0
        %1681 = vmatpush1.xpose.msra.mxu0 0.0
        %1682 = vmatprep.subr.mxu0 0.0
        %1683 = vmatpush1.xpose.msra.mxu0 0.0
        %1684 = vmatprep.subr.mxu0 0.0
        %1685 = vmatpush1.xpose.msra.mxu0 0.0
        %1686 = vmatprep.subr.mxu0 0.0
        %1687 = vmatpush1.xpose.msra.mxu0 0.0
        %1688 = vmatprep.subr.mxu0 0.0
        %1689 = vmatpush1.xpose.msra.mxu0 0.0
        %1690 = vmatprep.subr.mxu0 0.0
        %1691 = vmatpush1.xpose.msra.mxu0 0.0
        %1692 = vmatprep.subr.mxu0 0.0
        %1693 = vmatpush1.xpose.msra.mxu0 0.0
        %1694 = vmatprep.subr.mxu0 0.0
        %1695 = vmatpush1.xpose.msra.mxu0 0.0
        %1696 = vmatprep.subr.mxu0 0.0
        %1697 = vmatpush1.xpose.msra.mxu0 0.0
        %1698 = vmatprep.subr.mxu0 0.0
        %1699 = vmatpush1.xpose.msra.mxu0 0.0
        %1700 = vmatprep.subr.mxu0 0.0
        %1701 = vmatpush1.xpose.msra.mxu0 0.0
        %1702 = vmatprep.subr.mxu0 0.0
        %1703 = vmatpush1.xpose.msra.mxu0 0.0
        %1704 = vmatprep.mubr.f32.mxu0 0.0
        %1705 = vmatmul.mubr.f32.gmra.mrb[0].mxu0 %v1614
        %v1706 = vpop.f32.mrb[0].mxu0
        %v1707 = vadd.f32 0.0, %v1706
        %v1708 = vpop.f32.mrb[0].mxu0
        %1709 = vdwg.mxu0
        %v1711 = vsel %vm1515, %v1507, 0
        %v1714 = vsel %vm1515, %v759, 0
        %v1717 = vsel %vm1515, %v760, 0
        %v1720 = vsel %vm1515, %v761, 0
        %v1723 = vsel %vm1515, %v762, 0
        %v1726 = vsel %vm1515, %v763, 0
        %v1729 = vsel %vm1515, %v764, 0
        %v1732 = vsel %vm1515, %v765, 0
        %v1735 = vsel %vm1515, %v766, 0
        %1737 = vmatprep.subr.mxu0 0.0
        %1738 = vmatpush1.xpose.msra.mxu0 %v1714
        %1739 = vmatprep.subr.mxu0 0.0
        %1740 = vmatpush1.xpose.msra.mxu0 %v1717
        %1741 = vmatprep.subr.mxu0 0.0
        %1742 = vmatpush1.xpose.msra.mxu0 %v1720
        %1743 = vmatprep.subr.mxu0 0.0
        %1744 = vmatpush1.xpose.msra.mxu0 %v1723
        %1745 = vmatprep.subr.mxu0 0.0
        %1746 = vmatpush1.xpose.msra.mxu0 %v1726
        %1747 = vmatprep.subr.mxu0 0.0
        %1748 = vmatpush1.xpose.msra.mxu0 %v1729
        %1749 = vmatprep.subr.mxu0 0.0
        %1750 = vmatpush1.xpose.msra.mxu0 %v1732
        %1751 = vmatprep.subr.mxu0 0.0
        %1752 = vmatpush1.xpose.msra.mxu0 %v1735
        %1753 = vmatprep.subr.mxu0 0.0
        %1754 = vmatpush1.xpose.msra.mxu0 0.0
        %1755 = vmatprep.subr.mxu0 0.0
        %1756 = vmatpush1.xpose.msra.mxu0 0.0
        %1757 = vmatprep.subr.mxu0 0.0
        %1758 = vmatpush1.xpose.msra.mxu0 0.0
        %1759 = vmatprep.subr.mxu0 0.0
        %1760 = vmatpush1.xpose.msra.mxu0 0.0
        %1761 = vmatprep.subr.mxu0 0.0
        %1762 = vmatpush1.xpose.msra.mxu0 0.0
        %1763 = vmatprep.subr.mxu0 0.0
        %1764 = vmatpush1.xpose.msra.mxu0 0.0
        %1765 = vmatprep.subr.mxu0 0.0
        %1766 = vmatpush1.xpose.msra.mxu0 0.0
        %1767 = vmatprep.subr.mxu0 0.0
        %1768 = vmatpush1.xpose.msra.mxu0 0.0
        %1769 = vmatprep.subr.mxu0 0.0
        %1770 = vmatpush1.xpose.msra.mxu0 0.0
        %1771 = vmatprep.subr.mxu0 0.0
        %1772 = vmatpush1.xpose.msra.mxu0 0.0
        %1773 = vmatprep.subr.mxu0 0.0
        %1774 = vmatpush1.xpose.msra.mxu0 0.0
        %1775 = vmatprep.subr.mxu0 0.0
        %1776 = vmatpush1.xpose.msra.mxu0 0.0
        %1777 = vmatprep.subr.mxu0 0.0
        %1778 = vmatpush1.xpose.msra.mxu0 0.0
        %1779 = vmatprep.subr.mxu0 0.0
        %1780 = vmatpush1.xpose.msra.mxu0 0.0
        %1781 = vmatprep.subr.mxu0 0.0
        %1782 = vmatpush1.xpose.msra.mxu0 0.0
        %1783 = vmatprep.subr.mxu0 0.0
        %1784 = vmatpush1.xpose.msra.mxu0 0.0
        %1785 = vmatprep.subr.mxu0 0.0
        %1786 = vmatpush1.xpose.msra.mxu0 0.0
        %1787 = vmatprep.subr.mxu0 0.0
        %1788 = vmatpush1.xpose.msra.mxu0 0.0
        %1789 = vmatprep.subr.mxu0 0.0
        %1790 = vmatpush1.xpose.msra.mxu0 0.0
        %1791 = vmatprep.subr.mxu0 0.0
        %1792 = vmatpush1.xpose.msra.mxu0 0.0
        %1793 = vmatprep.subr.mxu0 0.0
        %1794 = vmatpush1.xpose.msra.mxu0 0.0
        %1795 = vmatprep.subr.mxu0 0.0
        %1796 = vmatpush1.xpose.msra.mxu0 0.0
        %1797 = vmatprep.subr.mxu0 0.0
        %1798 = vmatpush1.xpose.msra.mxu0 0.0
        %1799 = vmatprep.subr.mxu0 0.0
        %1800 = vmatpush1.xpose.msra.mxu0 0.0
        %1801 = vmatprep.mubr.f32.mxu0 0.0
        %1802 = vmatmul.mubr.f32.gmra.mrb[0].mxu0 %v1711
        %v1803 = vpop.f32.mrb[0].mxu0
        %v1804 = vadd.f32 0.0, %v1803
        %v1805 = vpop.f32.mrb[0].mxu0
        %1806 = vdwg.mxu0
        %v1808 = vsel %vm1515, %v1512, 0
        %v1811 = vsel %vm1515, %v767, 0
        %v1814 = vsel %vm1515, %v768, 0
        %v1817 = vsel %vm1515, %v769, 0
        %v1820 = vsel %vm1515, %v770, 0
        %v1823 = vsel %vm1515, %v771, 0
        %v1826 = vsel %vm1515, %v772, 0
        %v1829 = vsel %vm1515, %v773, 0
        %v1832 = vsel %vm1515, %v774, 0
        %1834 = vmatprep.subr.mxu0 0.0
        %1835 = vmatpush1.xpose.msra.mxu0 %v1811
        %1836 = vmatprep.subr.mxu0 0.0
        %1837 = vmatpush1.xpose.msra.mxu0 %v1814
        %1838 = vmatprep.subr.mxu0 0.0
        %1839 = vmatpush1.xpose.msra.mxu0 %v1817
        %1840 = vmatprep.subr.mxu0 0.0
        %1841 = vmatpush1.xpose.msra.mxu0 %v1820
        %1842 = vmatprep.subr.mxu0 0.0
        %1843 = vmatpush1.xpose.msra.mxu0 %v1823
        %1844 = vmatprep.subr.mxu0 0.0
        %1845 = vmatpush1.xpose.msra.mxu0 %v1826
        %1846 = vmatprep.subr.mxu0 0.0
        %1847 = vmatpush1.xpose.msra.mxu0 %v1829
        %1848 = vmatprep.subr.mxu0 0.0
        %1849 = vmatpush1.xpose.msra.mxu0 %v1832
        %1850 = vmatprep.subr.mxu0 0.0
        %1851 = vmatpush1.xpose.msra.mxu0 0.0
        %1852 = vmatprep.subr.mxu0 0.0
        %1853 = vmatpush1.xpose.msra.mxu0 0.0
        %1854 = vmatprep.subr.mxu0 0.0
        %1855 = vmatpush1.xpose.msra.mxu0 0.0
        %1856 = vmatprep.subr.mxu0 0.0
        %1857 = vmatpush1.xpose.msra.mxu0 0.0
        %1858 = vmatprep.subr.mxu0 0.0
        %1859 = vmatpush1.xpose.msra.mxu0 0.0
        %1860 = vmatprep.subr.mxu0 0.0
        %1861 = vmatpush1.xpose.msra.mxu0 0.0
        %1862 = vmatprep.subr.mxu0 0.0
        %1863 = vmatpush1.xpose.msra.mxu0 0.0
        %1864 = vmatprep.subr.mxu0 0.0
        %1865 = vmatpush1.xpose.msra.mxu0 0.0
        %1866 = vmatprep.subr.mxu0 0.0
        %1867 = vmatpush1.xpose.msra.mxu0 0.0
        %1868 = vmatprep.subr.mxu0 0.0
        %1869 = vmatpush1.xpose.msra.mxu0 0.0
        %1870 = vmatprep.subr.mxu0 0.0
        %1871 = vmatpush1.xpose.msra.mxu0 0.0
        %1872 = vmatprep.subr.mxu0 0.0
        %1873 = vmatpush1.xpose.msra.mxu0 0.0
        %1874 = vmatprep.subr.mxu0 0.0
        %1875 = vmatpush1.xpose.msra.mxu0 0.0
        %1876 = vmatprep.subr.mxu0 0.0
        %1877 = vmatpush1.xpose.msra.mxu0 0.0
        %1878 = vmatprep.subr.mxu0 0.0
        %1879 = vmatpush1.xpose.msra.mxu0 0.0
        %1880 = vmatprep.subr.mxu0 0.0
        %1881 = vmatpush1.xpose.msra.mxu0 0.0
        %1882 = vmatprep.subr.mxu0 0.0
        %1883 = vmatpush1.xpose.msra.mxu0 0.0
        %1884 = vmatprep.subr.mxu0 0.0
        %1885 = vmatpush1.xpose.msra.mxu0 0.0
        %1886 = vmatprep.subr.mxu0 0.0
        %1887 = vmatpush1.xpose.msra.mxu0 0.0
        %1888 = vmatprep.subr.mxu0 0.0
        %1889 = vmatpush1.xpose.msra.mxu0 0.0
        %1890 = vmatprep.subr.mxu0 0.0
        %1891 = vmatpush1.xpose.msra.mxu0 0.0
        %1892 = vmatprep.subr.mxu0 0.0
        %1893 = vmatpush1.xpose.msra.mxu0 0.0
        %1894 = vmatprep.subr.mxu0 0.0
        %1895 = vmatpush1.xpose.msra.mxu0 0.0
        %1896 = vmatprep.subr.mxu0 0.0
        %1897 = vmatpush1.xpose.msra.mxu0 0.0
        %1898 = vmatprep.mubr.f32.mxu0 0.0
        %1899 = vmatmul.mubr.f32.gmra.mrb[0].mxu0 %v1808
        %v1900 = vpop.f32.mrb[0].mxu0
        %v1901 = vadd.f32 0.0, %v1900
        %v1902 = vpop.f32.mrb[0].mxu0
        %1903 = vdwg.mxu0
        %v1904 = vsel %vm1515, %v1610, -inf
        %1905 = vmax.xlane.f32.xlu0 %v1904
        %v1906 = vpop.xlane.xlu0 %1905
        %v1907 = vsel %vm1515, %v1707, -inf
        %1908 = vmax.xlane.f32.xlu0 %v1907
        %v1909 = vpop.xlane.xlu0 %1908
        %v1910 = vsel %vm1515, %v1804, -inf
        %1911 = vmax.xlane.f32.xlu0 %v1910
        %v1912 = vpop.xlane.xlu0 %1911
        %v1913 = vsel %vm1515, %v1901, -inf
        %1914 = vmax.xlane.f32.xlu0 %v1913
        %v1915 = vpop.xlane.xlu0 %1914
        %v1916 = vsub.f32 %v1610, %v1906
        %v1917 = vsub.f32 %v1707, %v1909
        %v1918 = vsub.f32 %v1804, %v1912
        %v1919 = vsub.f32 %v1901, %v1915
        %v1920 = vmul.f32 %v1916, 1.442695
        %v1921 = vpow.pop %v1920
        %v1922 = vmul.f32 %v1917, 1.442695
        %v1923 = vpow.pop %v1922
        %v1924 = vmul.f32 %v1918, 1.442695
        %v1925 = vpow.pop %v1924
        %v1926 = vmul.f32 %v1919, 1.442695
        %v1927 = vpow.pop %v1926
        %v1928 = vsel %vm1515, %v1921, 0.0
        %1929 = vadd.xlane.f32.xlu0 %v1928
        %v1930 = vpop.xlane.xlu0 %1929
        %v1931 = vsel %vm1515, %v1923, 0.0
        %1932 = vadd.xlane.f32.xlu0 %v1931
        %v1933 = vpop.xlane.xlu0 %1932
        %v1934 = vsel %vm1515, %v1925, 0.0
        %1935 = vadd.xlane.f32.xlu0 %v1934
        %v1936 = vpop.xlane.xlu0 %1935
        %v1937 = vsel %vm1515, %v1927, 0.0
        %1938 = vadd.xlane.f32.xlu0 %v1937
        %v1939 = vpop.xlane.xlu0 %1938
        %v1940 = vrcp.pop %v1930
        %v1941 = vrcp.pop %v1933
        %v1942 = vrcp.pop %v1936
        %v1943 = vrcp.pop %v1939
        %v1944 = vmul.f32 %v1921, %v1940
        %v1945 = vmul.f32 %v1923, %v1941
        %v1946 = vmul.f32 %v1925, %v1942
        %v1947 = vmul.f32 %v1927, %v1943
        %v1949 = vsel %vm1515, %v1944, 0
        %1951 = vmatprep.subr.mxu0 0.0
        %1952 = vmatpush1.msra.mxu0 %v775
        %1953 = vmatprep.subr.mxu0 0.0
        %1954 = vmatpush1.msra.mxu0 %v776
        %1955 = vmatprep.subr.mxu0 0.0
        %1956 = vmatpush1.msra.mxu0 %v777
        %1957 = vmatprep.subr.mxu0 0.0
        %1958 = vmatpush1.msra.mxu0 %v778
        %1959 = vmatprep.subr.mxu0 0.0
        %1960 = vmatpush1.msra.mxu0 %v779
        %1961 = vmatprep.subr.mxu0 0.0
        %1962 = vmatpush1.msra.mxu0 %v780
        %1963 = vmatprep.subr.mxu0 0.0
        %1964 = vmatpush1.msra.mxu0 %v781
        %1965 = vmatprep.subr.mxu0 0.0
        %1966 = vmatpush1.msra.mxu0 %v782
        %1967 = vmatprep.subr.mxu0 0.0
        %1968 = vmatpush1.msra.mxu0 0.0
        %1969 = vmatprep.subr.mxu0 0.0
        %1970 = vmatpush1.msra.mxu0 0.0
        %1971 = vmatprep.subr.mxu0 0.0
        %1972 = vmatpush1.msra.mxu0 0.0
        %1973 = vmatprep.subr.mxu0 0.0
        %1974 = vmatpush1.msra.mxu0 0.0
        %1975 = vmatprep.subr.mxu0 0.0
        %1976 = vmatpush1.msra.mxu0 0.0
        %1977 = vmatprep.subr.mxu0 0.0
        %1978 = vmatpush1.msra.mxu0 0.0
        %1979 = vmatprep.subr.mxu0 0.0
        %1980 = vmatpush1.msra.mxu0 0.0
        %1981 = vmatprep.subr.mxu0 0.0
        %1982 = vmatpush1.msra.mxu0 0.0
        %1983 = vmatprep.subr.mxu0 0.0
        %1984 = vmatpush1.msra.mxu0 0.0
        %1985 = vmatprep.subr.mxu0 0.0
        %1986 = vmatpush1.msra.mxu0 0.0
        %1987 = vmatprep.subr.mxu0 0.0
        %1988 = vmatpush1.msra.mxu0 0.0
        %1989 = vmatprep.subr.mxu0 0.0
        %1990 = vmatpush1.msra.mxu0 0.0
        %1991 = vmatprep.subr.mxu0 0.0
        %1992 = vmatpush1.msra.mxu0 0.0
        %1993 = vmatprep.subr.mxu0 0.0
        %1994 = vmatpush1.msra.mxu0 0.0
        %1995 = vmatprep.subr.mxu0 0.0
        %1996 = vmatpush1.msra.mxu0 0.0
        %1997 = vmatprep.subr.mxu0 0.0
        %1998 = vmatpush1.msra.mxu0 0.0
        %1999 = vmatprep.subr.mxu0 0.0
        %2000 = vmatpush1.msra.mxu0 0.0
        %2001 = vmatprep.subr.mxu0 0.0
        %2002 = vmatpush1.msra.mxu0 0.0
        %2003 = vmatprep.subr.mxu0 0.0
        %2004 = vmatpush1.msra.mxu0 0.0
        %2005 = vmatprep.subr.mxu0 0.0
        %2006 = vmatpush1.msra.mxu0 0.0
        %2007 = vmatprep.subr.mxu0 0.0
        %2008 = vmatpush1.msra.mxu0 0.0
        %2009 = vmatprep.subr.mxu0 0.0
        %2010 = vmatpush1.msra.mxu0 0.0
        %2011 = vmatprep.subr.mxu0 0.0
        %2012 = vmatpush1.msra.mxu0 0.0
        %2013 = vmatprep.subr.mxu0 0.0
        %2014 = vmatpush1.msra.mxu0 0.0
        %2015 = vmatprep.mubr.f32.mxu0 0.0
        %2016 = vmatmul.mubr.f32.gmra.mrb[0].mxu0 %v1949
        %v2017 = vpop.f32.mrb[0].mxu0
        %v2018 = vadd.f32 0.0, %v2017
        %v2019 = vpop.f32.mrb[0].mxu0
        %2020 = vdwg.mxu0
        %v2022 = vsel %vm1515, %v1945, 0
        %2024 = vmatprep.subr.mxu0 0.0
        %2025 = vmatpush1.msra.mxu0 %v783
        %2026 = vmatprep.subr.mxu0 0.0
        %2027 = vmatpush1.msra.mxu0 %v784
        %2028 = vmatprep.subr.mxu0 0.0
        %2029 = vmatpush1.msra.mxu0 %v785
        %2030 = vmatprep.subr.mxu0 0.0
        %2031 = vmatpush1.msra.mxu0 %v786
        %2032 = vmatprep.subr.mxu0 0.0
        %2033 = vmatpush1.msra.mxu0 %v787
        %2034 = vmatprep.subr.mxu0 0.0
        %2035 = vmatpush1.msra.mxu0 %v788
        %2036 = vmatprep.subr.mxu0 0.0
        %2037 = vmatpush1.msra.mxu0 %v789
        %2038 = vmatprep.subr.mxu0 0.0
        %2039 = vmatpush1.msra.mxu0 %v790
        %2040 = vmatprep.subr.mxu0 0.0
        %2041 = vmatpush1.msra.mxu0 0.0
        %2042 = vmatprep.subr.mxu0 0.0
        %2043 = vmatpush1.msra.mxu0 0.0
        %2044 = vmatprep.subr.mxu0 0.0
        %2045 = vmatpush1.msra.mxu0 0.0
        %2046 = vmatprep.subr.mxu0 0.0
        %2047 = vmatpush1.msra.mxu0 0.0
        %2048 = vmatprep.subr.mxu0 0.0
        %2049 = vmatpush1.msra.mxu0 0.0
        %2050 = vmatprep.subr.mxu0 0.0
        %2051 = vmatpush1.msra.mxu0 0.0
        %2052 = vmatprep.subr.mxu0 0.0
        %2053 = vmatpush1.msra.mxu0 0.0
        %2054 = vmatprep.subr.mxu0 0.0
        %2055 = vmatpush1.msra.mxu0 0.0
        %2056 = vmatprep.subr.mxu0 0.0
        %2057 = vmatpush1.msra.mxu0 0.0
        %2058 = vmatprep.subr.mxu0 0.0
        %2059 = vmatpush1.msra.mxu0 0.0
        %2060 = vmatprep.subr.mxu0 0.0
        %2061 = vmatpush1.msra.mxu0 0.0
        %2062 = vmatprep.subr.mxu0 0.0
        %2063 = vmatpush1.msra.mxu0 0.0
        %2064 = vmatprep.subr.mxu0 0.0
        %2065 = vmatpush1.msra.mxu0 0.0
        %2066 = vmatprep.subr.mxu0 0.0
        %2067 = vmatpush1.msra.mxu0 0.0
        %2068 = vmatprep.subr.mxu0 0.0
        %2069 = vmatpush1.msra.mxu0 0.0
        %2070 = vmatprep.subr.mxu0 0.0
        %2071 = vmatpush1.msra.mxu0 0.0
        %2072 = vmatprep.subr.mxu0 0.0
        %2073 = vmatpush1.msra.mxu0 0.0
        %2074 = vmatprep.subr.mxu0 0.0
        %2075 = vmatpush1.msra.mxu0 0.0
        %2076 = vmatprep.subr.mxu0 0.0
        %2077 = vmatpush1.msra.mxu0 0.0
        %2078 = vmatprep.subr.mxu0 0.0
        %2079 = vmatpush1.msra.mxu0 0.0
        %2080 = vmatprep.subr.mxu0 0.0
        %2081 = vmatpush1.msra.mxu0 0.0
        %2082 = vmatprep.subr.mxu0 0.0
        %2083 = vmatpush1.msra.mxu0 0.0
        %2084 = vmatprep.subr.mxu0 0.0
        %2085 = vmatpush1.msra.mxu0 0.0
        %2086 = vmatprep.subr.mxu0 0.0
        %2087 = vmatpush1.msra.mxu0 0.0
        %2088 = vmatprep.mubr.f32.mxu0 0.0
        %2089 = vmatmul.mubr.f32.gmra.mrb[0].mxu0 %v2022
        %v2090 = vpop.f32.mrb[0].mxu0
        %v2091 = vadd.f32 0.0, %v2090
        %v2092 = vpop.f32.mrb[0].mxu0
        %2093 = vdwg.mxu0
        %v2095 = vsel %vm1515, %v1946, 0
        %2097 = vmatprep.subr.mxu0 0.0
        %2098 = vmatpush1.msra.mxu0 %v791
        %2099 = vmatprep.subr.mxu0 0.0
        %2100 = vmatpush1.msra.mxu0 %v792
        %2101 = vmatprep.subr.mxu0 0.0
        %2102 = vmatpush1.msra.mxu0 %v793
        %2103 = vmatprep.subr.mxu0 0.0
        %2104 = vmatpush1.msra.mxu0 %v794
        %2105 = vmatprep.subr.mxu0 0.0
        %2106 = vmatpush1.msra.mxu0 %v795
        %2107 = vmatprep.subr.mxu0 0.0
        %2108 = vmatpush1.msra.mxu0 %v796
        %2109 = vmatprep.subr.mxu0 0.0
        %2110 = vmatpush1.msra.mxu0 %v797
        %2111 = vmatprep.subr.mxu0 0.0
        %2112 = vmatpush1.msra.mxu0 %v798
        %2113 = vmatprep.subr.mxu0 0.0
        %2114 = vmatpush1.msra.mxu0 0.0
        %2115 = vmatprep.subr.mxu0 0.0
        %2116 = vmatpush1.msra.mxu0 0.0
        %2117 = vmatprep.subr.mxu0 0.0
        %2118 = vmatpush1.msra.mxu0 0.0
        %2119 = vmatprep.subr.mxu0 0.0
        %2120 = vmatpush1.msra.mxu0 0.0
        %2121 = vmatprep.subr.mxu0 0.0
        %2122 = vmatpush1.msra.mxu0 0.0
        %2123 = vmatprep.subr.mxu0 0.0
        %2124 = vmatpush1.msra.mxu0 0.0
        %2125 = vmatprep.subr.mxu0 0.0
        %2126 = vmatpush1.msra.mxu0 0.0
        %2127 = vmatprep.subr.mxu0 0.0
        %2128 = vmatpush1.msra.mxu0 0.0
        %2129 = vmatprep.subr.mxu0 0.0
        %2130 = vmatpush1.msra.mxu0 0.0
        %2131 = vmatprep.subr.mxu0 0.0
        %2132 = vmatpush1.msra.mxu0 0.0
        %2133 = vmatprep.subr.mxu0 0.0
        %2134 = vmatpush1.msra.mxu0 0.0
        %2135 = vmatprep.subr.mxu0 0.0
        %2136 = vmatpush1.msra.mxu0 0.0
        %2137 = vmatprep.subr.mxu0 0.0
        %2138 = vmatpush1.msra.mxu0 0.0
        %2139 = vmatprep.subr.mxu0 0.0
        %2140 = vmatpush1.msra.mxu0 0.0
        %2141 = vmatprep.subr.mxu0 0.0
        %2142 = vmatpush1.msra.mxu0 0.0
        %2143 = vmatprep.subr.mxu0 0.0
        %2144 = vmatpush1.msra.mxu0 0.0
        %2145 = vmatprep.subr.mxu0 0.0
        %2146 = vmatpush1.msra.mxu0 0.0
        %2147 = vmatprep.subr.mxu0 0.0
        %2148 = vmatpush1.msra.mxu0 0.0
        %2149 = vmatprep.subr.mxu0 0.0
        %2150 = vmatpush1.msra.mxu0 0.0
        %2151 = vmatprep.subr.mxu0 0.0
        %2152 = vmatpush1.msra.mxu0 0.0
        %2153 = vmatprep.subr.mxu0 0.0
        %2154 = vmatpush1.msra.mxu0 0.0
        %2155 = vmatprep.subr.mxu0 0.0
        %2156 = vmatpush1.msra.mxu0 0.0
        %2157 = vmatprep.subr.mxu0 0.0
        %2158 = vmatpush1.msra.mxu0 0.0
        %2159 = vmatprep.subr.mxu0 0.0
        %2160 = vmatpush1.msra.mxu0 0.0
        %2161 = vmatprep.mubr.f32.mxu0 0.0
        %2162 = vmatmul.mubr.f32.gmra.mrb[0].mxu0 %v2095
        %v2163 = vpop.f32.mrb[0].mxu0
        %v2164 = vadd.f32 0.0, %v2163
        %v2165 = vpop.f32.mrb[0].mxu0
        %2166 = vdwg.mxu0
        %v2168 = vsel %vm1515, %v1947, 0
        %2170 = vmatprep.subr.mxu0 0.0
        %2171 = vmatpush1.msra.mxu0 %v799
        %2172 = vmatprep.subr.mxu0 0.0
        %2173 = vmatpush1.msra.mxu0 %v800
        %2174 = vmatprep.subr.mxu0 0.0
        %2175 = vmatpush1.msra.mxu0 %v801
        %2176 = vmatprep.subr.mxu0 0.0
        %2177 = vmatpush1.msra.mxu0 %v802
        %2178 = vmatprep.subr.mxu0 0.0
        %2179 = vmatpush1.msra.mxu0 %v803
        %2180 = vmatprep.subr.mxu0 0.0
        %2181 = vmatpush1.msra.mxu0 %v804
        %2182 = vmatprep.subr.mxu0 0.0
        %2183 = vmatpush1.msra.mxu0 %v805
        %2184 = vmatprep.subr.mxu0 0.0
        %2185 = vmatpush1.msra.mxu0 %v806
        %2186 = vmatprep.subr.mxu0 0.0
        %2187 = vmatpush1.msra.mxu0 0.0
        %2188 = vmatprep.subr.mxu0 0.0
        %2189 = vmatpush1.msra.mxu0 0.0
        %2190 = vmatprep.subr.mxu0 0.0
        %2191 = vmatpush1.msra.mxu0 0.0
        %2192 = vmatprep.subr.mxu0 0.0
        %2193 = vmatpush1.msra.mxu0 0.0
        %2194 = vmatprep.subr.mxu0 0.0
        %2195 = vmatpush1.msra.mxu0 0.0
        %2196 = vmatprep.subr.mxu0 0.0
        %2197 = vmatpush1.msra.mxu0 0.0
        %2198 = vmatprep.subr.mxu0 0.0
        %2199 = vmatpush1.msra.mxu0 0.0
        %2200 = vmatprep.subr.mxu0 0.0
        %2201 = vmatpush1.msra.mxu0 0.0
        %2202 = vmatprep.subr.mxu0 0.0
        %2203 = vmatpush1.msra.mxu0 0.0
        %2204 = vmatprep.subr.mxu0 0.0
        %2205 = vmatpush1.msra.mxu0 0.0
        %2206 = vmatprep.subr.mxu0 0.0
        %2207 = vmatpush1.msra.mxu0 0.0
        %2208 = vmatprep.subr.mxu0 0.0
        %2209 = vmatpush1.msra.mxu0 0.0
        %2210 = vmatprep.subr.mxu0 0.0
        %2211 = vmatpush1.msra.mxu0 0.0
        %2212 = vmatprep.subr.mxu0 0.0
        %2213 = vmatpush1.msra.mxu0 0.0
        %2214 = vmatprep.subr.mxu0 0.0
        %2215 = vmatpush1.msra.mxu0 0.0
        %2216 = vmatprep.subr.mxu0 0.0
        %2217 = vmatpush1.msra.mxu0 0.0
        %2218 = vmatprep.subr.mxu0 0.0
        %2219 = vmatpush1.msra.mxu0 0.0
        %2220 = vmatprep.subr.mxu0 0.0
        %2221 = vmatpush1.msra.mxu0 0.0
        %2222 = vmatprep.subr.mxu0 0.0
        %2223 = vmatpush1.msra.mxu0 0.0
        %2224 = vmatprep.subr.mxu0 0.0
        %2225 = vmatpush1.msra.mxu0 0.0
        %2226 = vmatprep.subr.mxu0 0.0
        %2227 = vmatpush1.msra.mxu0 0.0
        %2228 = vmatprep.subr.mxu0 0.0
        %2229 = vmatpush1.msra.mxu0 0.0
        %2230 = vmatprep.subr.mxu0 0.0
        %2231 = vmatpush1.msra.mxu0 0.0
        %2232 = vmatprep.subr.mxu0 0.0
        %2233 = vmatpush1.msra.mxu0 0.0
        %2234 = vmatprep.mubr.f32.mxu0 0.0
        %2235 = vmatmul.mubr.f32.gmra.mrb[0].mxu0 %v2168
        %v2236 = vpop.f32.mrb[0].mxu0
        %v2237 = vadd.f32 0.0, %v2236
        %v2238 = vpop.f32.mrb[0].mxu0
        %2239 = vdwg.mxu0
        %v2240 = vld [vmem:[%s7] sm:$0xff]
        %v2241 = vld [vmem:[%s7 + $0x8] sm:$0xff]
        %v2242 = vld [vmem:[%s7 + $0x10] sm:$0xff]
        %v2243 = vld [vmem:[%s7 + $0x18] sm:$0xff]
        %v2244 = vld [vmem:[%s7 + $0x20] sm:$0xff]
        %v2245 = vld [vmem:[%s7 + $0x28] sm:$0xff]
        %v2246 = vld [vmem:[%s7 + $0x30] sm:$0xff]
        %v2247 = vld [vmem:[%s7 + $0x38] sm:$0xff]
        %v2248 = vld [vmem:[%s7 + $0x40] sm:$0xff]
        %v2249 = vld [vmem:[%s7 + $0x48] sm:$0xff]
        %v2250 = vld [vmem:[%s7 + $0x50] sm:$0xff]
        %v2251 = vld [vmem:[%s7 + $0x58] sm:$0xff]
        %v2252 = vld [vmem:[%s7 + $0x60] sm:$0xff]
        %v2253 = vld [vmem:[%s7 + $0x68] sm:$0xff]
        %v2254 = vld [vmem:[%s7 + $0x70] sm:$0xff]
        %v2255 = vld [vmem:[%s7 + $0x78] sm:$0xff]
        %v2256 = vld [vmem:[#allocation8] sm:$0xff]
        %v2257 = vld [vmem:[#allocation8 + $0x8] sm:$0xff]
        %v2258 = vld [vmem:[#allocation8 + $0x10] sm:$0xff]
        %v2259 = vld [vmem:[#allocation8 + $0x18] sm:$0xff]
        %v2260 = vld [vmem:[#allocation8 + $0x20] sm:$0xff]
        %v2261 = vld [vmem:[#allocation8 + $0x28] sm:$0xff]
        %v2262 = vld [vmem:[#allocation8 + $0x30] sm:$0xff]
        %v2263 = vld [vmem:[#allocation8 + $0x38] sm:$0xff]
        %v2264 = vld [vmem:[#allocation8 + $0x40] sm:$0xff]
        %v2265 = vld [vmem:[#allocation8 + $0x48] sm:$0xff]
        %v2266 = vld [vmem:[#allocation8 + $0x50] sm:$0xff]
        %v2267 = vld [vmem:[#allocation8 + $0x58] sm:$0xff]
        %v2268 = vld [vmem:[#allocation8 + $0x60] sm:$0xff]
        %v2269 = vld [vmem:[#allocation8 + $0x68] sm:$0xff]
        %v2270 = vld [vmem:[#allocation8 + $0x70] sm:$0xff]
        %v2271 = vld [vmem:[#allocation8 + $0x78] sm:$0xff]
        %2272 = vmatprep.subr.mxu0 0.0
        %2273 = vmatpush1.msra.mxu0 %v2256
        %2274 = vmatprep.subr.mxu0 0.0
        %2275 = vmatpush1.msra.mxu0 %v2257
        %2276 = vmatprep.subr.mxu0 0.0
        %2277 = vmatpush1.msra.mxu0 %v2258
        %2278 = vmatprep.subr.mxu0 0.0
        %2279 = vmatpush1.msra.mxu0 %v2259
        %2280 = vmatprep.subr.mxu0 0.0
        %2281 = vmatpush1.msra.mxu0 %v2260
        %2282 = vmatprep.subr.mxu0 0.0
        %2283 = vmatpush1.msra.mxu0 %v2261
        %2284 = vmatprep.subr.mxu0 0.0
        %2285 = vmatpush1.msra.mxu0 %v2262
        %2286 = vmatprep.subr.mxu0 0.0
        %2287 = vmatpush1.msra.mxu0 %v2263
        %2288 = vmatprep.subr.mxu0 0.0
        %2289 = vmatpush1.msra.mxu0 %v2264
        %2290 = vmatprep.subr.mxu0 0.0
        %2291 = vmatpush1.msra.mxu0 %v2265
        %2292 = vmatprep.subr.mxu0 0.0
        %2293 = vmatpush1.msra.mxu0 %v2266
        %2294 = vmatprep.subr.mxu0 0.0
        %2295 = vmatpush1.msra.mxu0 %v2267
        %2296 = vmatprep.subr.mxu0 0.0
        %2297 = vmatpush1.msra.mxu0 %v2268
        %2298 = vmatprep.subr.mxu0 0.0
        %2299 = vmatpush1.msra.mxu0 %v2269
        %2300 = vmatprep.subr.mxu0 0.0
        %2301 = vmatpush1.msra.mxu0 %v2270
        %2302 = vmatprep.subr.mxu0 0.0
        %2303 = vmatpush1.msra.mxu0 %v2271
        %2304 = vmatprep.subr.mxu0 0.0
        %2305 = vmatpush1.msra.mxu0 0.0
        %2306 = vmatprep.subr.mxu0 0.0
        %2307 = vmatpush1.msra.mxu0 0.0
        %2308 = vmatprep.subr.mxu0 0.0
        %2309 = vmatpush1.msra.mxu0 0.0
        %2310 = vmatprep.subr.mxu0 0.0
        %2311 = vmatpush1.msra.mxu0 0.0
        %2312 = vmatprep.subr.mxu0 0.0
        %2313 = vmatpush1.msra.mxu0 0.0
        %2314 = vmatprep.subr.mxu0 0.0
        %2315 = vmatpush1.msra.mxu0 0.0
        %2316 = vmatprep.subr.mxu0 0.0
        %2317 = vmatpush1.msra.mxu0 0.0
        %2318 = vmatprep.subr.mxu0 0.0
        %2319 = vmatpush1.msra.mxu0 0.0
        %2320 = vmatprep.subr.mxu0 0.0
        %2321 = vmatpush1.msra.mxu0 0.0
        %2322 = vmatprep.subr.mxu0 0.0
        %2323 = vmatpush1.msra.mxu0 0.0
        %2324 = vmatprep.subr.mxu0 0.0
        %2325 = vmatpush1.msra.mxu0 0.0
        %2326 = vmatprep.subr.mxu0 0.0
        %2327 = vmatpush1.msra.mxu0 0.0
        %2328 = vmatprep.subr.mxu0 0.0
        %2329 = vmatpush1.msra.mxu0 0.0
        %2330 = vmatprep.subr.mxu0 0.0
        %2331 = vmatpush1.msra.mxu0 0.0
        %2332 = vmatprep.subr.mxu0 0.0
        %2333 = vmatpush1.msra.mxu0 0.0
        %2334 = vmatprep.subr.mxu0 0.0
        %2335 = vmatpush1.msra.mxu0 0.0
        %2336 = vmatprep.mubr.f32.mxu0 0.0
        %2337 = vmatmul.mubr.f32.gmra.mrb[0].mxu0 %v675
        %v2338 = vpop.f32.mrb[0].mxu0
        %v2339 = vadd.f32 0.0, %v2338
        %v2340 = vpop.f32.mrb[0].mxu0
        %2341 = vmatprep.mubr.f32.mxu0 0.0
        %2342 = vmatmul.mubr.f32.gmra.mrb[0].mxu0 %v676
        %v2343 = vpop.f32.mrb[0].mxu0
        %v2344 = vadd.f32 0.0, %v2343
        %v2345 = vpop.f32.mrb[0].mxu0
        %2346 = vmatprep.mubr.f32.mxu0 0.0
        %2347 = vmatmul.mubr.f32.gmra.mrb[0].mxu0 %v677
        %v2348 = vpop.f32.mrb[0].mxu0
        %v2349 = vadd.f32 0.0, %v2348
        %v2350 = vpop.f32.mrb[0].mxu0
        %2351 = vmatprep.mubr.f32.mxu0 0.0
        %2352 = vmatmul.mubr.f32.gmra.mrb[0].mxu0 %v678
        %v2353 = vpop.f32.mrb[0].mxu0
        %v2354 = vadd.f32 0.0, %v2353
        %v2355 = vpop.f32.mrb[0].mxu0
        %2356 = vdwg.mxu0
        %2357 = vmatprep.subr.mxu0 0.0
        %2358 = vmatpush1.msra.mxu0 %v2240
        %2359 = vmatprep.subr.mxu0 0.0
        %2360 = vmatpush1.msra.mxu0 %v2241
        %2361 = vmatprep.subr.mxu0 0.0
        %2362 = vmatpush1.msra.mxu0 %v2242
        %2363 = vmatprep.subr.mxu0 0.0
        %2364 = vmatpush1.msra.mxu0 %v2243
        %2365 = vmatprep.subr.mxu0 0.0
        %2366 = vmatpush1.msra.mxu0 %v2244
        %2367 = vmatprep.subr.mxu0 0.0
        %2368 = vmatpush1.msra.mxu0 %v2245
        %2369 = vmatprep.subr.mxu0 0.0
        %2370 = vmatpush1.msra.mxu0 %v2246
        %2371 = vmatprep.subr.mxu0 0.0
        %2372 = vmatpush1.msra.mxu0 %v2247
        %2373 = vmatprep.subr.mxu0 0.0
        %2374 = vmatpush1.msra.mxu0 %v2248
        %2375 = vmatprep.subr.mxu0 0.0
        %2376 = vmatpush1.msra.mxu0 %v2249
        %2377 = vmatprep.subr.mxu0 0.0
        %2378 = vmatpush1.msra.mxu0 %v2250
        %2379 = vmatprep.subr.mxu0 0.0
        %2380 = vmatpush1.msra.mxu0 %v2251
        %2381 = vmatprep.subr.mxu0 0.0
        %2382 = vmatpush1.msra.mxu0 %v2252
        %2383 = vmatprep.subr.mxu0 0.0
        %2384 = vmatpush1.msra.mxu0 %v2253
        %2385 = vmatprep.subr.mxu0 0.0
        %2386 = vmatpush1.msra.mxu0 %v2254
        %2387 = vmatprep.subr.mxu0 0.0
        %2388 = vmatpush1.msra.mxu0 %v2255
        %2389 = vmatprep.subr.mxu0 0.0
        %2390 = vmatpush1.msra.mxu0 0.0
        %2391 = vmatprep.subr.mxu0 0.0
        %2392 = vmatpush1.msra.mxu0 0.0
        %2393 = vmatprep.subr.mxu0 0.0
        %2394 = vmatpush1.msra.mxu0 0.0
        %2395 = vmatprep.subr.mxu0 0.0
        %2396 = vmatpush1.msra.mxu0 0.0
        %2397 = vmatprep.subr.mxu0 0.0
        %2398 = vmatpush1.msra.mxu0 0.0
        %2399 = vmatprep.subr.mxu0 0.0
        %2400 = vmatpush1.msra.mxu0 0.0
        %2401 = vmatprep.subr.mxu0 0.0
        %2402 = vmatpush1.msra.mxu0 0.0
        %2403 = vmatprep.subr.mxu0 0.0
        %2404 = vmatpush1.msra.mxu0 0.0
        %2405 = vmatprep.subr.mxu0 0.0
        %2406 = vmatpush1.msra.mxu0 0.0
        %2407 = vmatprep.subr.mxu0 0.0
        %2408 = vmatpush1.msra.mxu0 0.0
        %2409 = vmatprep.subr.mxu0 0.0
        %2410 = vmatpush1.msra.mxu0 0.0
        %2411 = vmatprep.subr.mxu0 0.0
        %2412 = vmatpush1.msra.mxu0 0.0
        %2413 = vmatprep.subr.mxu0 0.0
        %2414 = vmatpush1.msra.mxu0 0.0
        %2415 = vmatprep.subr.mxu0 0.0
        %2416 = vmatpush1.msra.mxu0 0.0
        %2417 = vmatprep.subr.mxu0 0.0
        %2418 = vmatpush1.msra.mxu0 0.0
        %2419 = vmatprep.subr.mxu0 0.0
        %2420 = vmatpush1.msra.mxu0 0.0
        %2421 = vmatprep.mubr.f32.mxu0 0.0
        %2422 = vmatmul.mubr.f32.gmra.mrb[0].mxu0 %v1194
        %v2423 = vpop.f32.mrb[0].mxu0
        %v2424 = vadd.f32 %v2339, %v2423
        %v2425 = vpop.f32.mrb[0].mxu0
        %2426 = vmatprep.mubr.f32.mxu0 0.0
        %2427 = vmatmul.mubr.f32.gmra.mrb[0].mxu0 %v1264
        %v2428 = vpop.f32.mrb[0].mxu0
        %v2429 = vadd.f32 %v2344, %v2428
        %v2430 = vpop.f32.mrb[0].mxu0
        %2431 = vmatprep.mubr.f32.mxu0 0.0
        %2432 = vmatmul.mubr.f32.gmra.mrb[0].mxu0 %v1334
        %v2433 = vpop.f32.mrb[0].mxu0
        %v2434 = vadd.f32 %v2349, %v2433
        %v2435 = vpop.f32.mrb[0].mxu0
        %2436 = vmatprep.mubr.f32.mxu0 0.0
        %2437 = vmatmul.mubr.f32.gmra.mrb[0].mxu0 %v1404
        %v2438 = vpop.f32.mrb[0].mxu0
        %v2439 = vadd.f32 %v2354, %v2438
        %v2440 = vpop.f32.mrb[0].mxu0
        %2441 = vdwg.mxu0
        %v2442 = vld [vmem:[#allocation11] sm:$0xff]
        %v2443 = vld [vmem:[#allocation11 + $0x8] sm:$0xff]
        %v2444 = vld [vmem:[#allocation11 + $0x10] sm:$0xff]
        %v2445 = vld [vmem:[#allocation11 + $0x18] sm:$0xff]
        %v2446 = vld [vmem:[#allocation11 + $0x20] sm:$0xff]
        %v2447 = vld [vmem:[#allocation11 + $0x28] sm:$0xff]
        %v2448 = vld [vmem:[#allocation11 + $0x30] sm:$0xff]
        %v2449 = vld [vmem:[#allocation11 + $0x38] sm:$0xff]
        %v2451 = vsel %vm1515, %v2018, 0
        %v2454 = vsel %vm1515, %v2091, 0
        %v2457 = vsel %vm1515, %v2164, 0
        %v2460 = vsel %vm1515, %v2237, 0
        %2462 = vmatprep.subr.mxu0 0.0
        %2463 = vmatpush1.msra.mxu0 %v2442
        %2464 = vmatprep.subr.mxu0 0.0
        %2465 = vmatpush1.msra.mxu0 %v2443
        %2466 = vmatprep.subr.mxu0 0.0
        %2467 = vmatpush1.msra.mxu0 %v2444
        %2468 = vmatprep.subr.mxu0 0.0
        %2469 = vmatpush1.msra.mxu0 %v2445
        %2470 = vmatprep.subr.mxu0 0.0
        %2471 = vmatpush1.msra.mxu0 %v2446
        %2472 = vmatprep.subr.mxu0 0.0
        %2473 = vmatpush1.msra.mxu0 %v2447
        %2474 = vmatprep.subr.mxu0 0.0
        %2475 = vmatpush1.msra.mxu0 %v2448
        %2476 = vmatprep.subr.mxu0 0.0
        %2477 = vmatpush1.msra.mxu0 %v2449
        %2478 = vmatprep.subr.mxu0 0.0
        %2479 = vmatpush1.msra.mxu0 0.0
        %2480 = vmatprep.subr.mxu0 0.0
        %2481 = vmatpush1.msra.mxu0 0.0
        %2482 = vmatprep.subr.mxu0 0.0
        %2483 = vmatpush1.msra.mxu0 0.0
        %2484 = vmatprep.subr.mxu0 0.0
        %2485 = vmatpush1.msra.mxu0 0.0
        %2486 = vmatprep.subr.mxu0 0.0
        %2487 = vmatpush1.msra.mxu0 0.0
        %2488 = vmatprep.subr.mxu0 0.0
        %2489 = vmatpush1.msra.mxu0 0.0
        %2490 = vmatprep.subr.mxu0 0.0
        %2491 = vmatpush1.msra.mxu0 0.0
        %2492 = vmatprep.subr.mxu0 0.0
        %2493 = vmatpush1.msra.mxu0 0.0
        %2494 = vmatprep.subr.mxu0 0.0
        %2495 = vmatpush1.msra.mxu0 0.0
        %2496 = vmatprep.subr.mxu0 0.0
        %2497 = vmatpush1.msra.mxu0 0.0
        %2498 = vmatprep.subr.mxu0 0.0
        %2499 = vmatpush1.msra.mxu0 0.0
        %2500 = vmatprep.subr.mxu0 0.0
        %2501 = vmatpush1.msra.mxu0 0.0
        %2502 = vmatprep.subr.mxu0 0.0
        %2503 = vmatpush1.msra.mxu0 0.0
        %2504 = vmatprep.subr.mxu0 0.0
        %2505 = vmatpush1.msra.mxu0 0.0
        %2506 = vmatprep.subr.mxu0 0.0
        %2507 = vmatpush1.msra.mxu0 0.0
        %2508 = vmatprep.subr.mxu0 0.0
        %2509 = vmatpush1.msra.mxu0 0.0
        %2510 = vmatprep.subr.mxu0 0.0
        %2511 = vmatpush1.msra.mxu0 0.0
        %2512 = vmatprep.subr.mxu0 0.0
        %2513 = vmatpush1.msra.mxu0 0.0
        %2514 = vmatprep.subr.mxu0 0.0
        %2515 = vmatpush1.msra.mxu0 0.0
        %2516 = vmatprep.subr.mxu0 0.0
        %2517 = vmatpush1.msra.mxu0 0.0
        %2518 = vmatprep.subr.mxu0 0.0
        %2519 = vmatpush1.msra.mxu0 0.0
        %2520 = vmatprep.subr.mxu0 0.0
        %2521 = vmatpush1.msra.mxu0 0.0
        %2522 = vmatprep.subr.mxu0 0.0
        %2523 = vmatpush1.msra.mxu0 0.0
        %2524 = vmatprep.subr.mxu0 0.0
        %2525 = vmatpush1.msra.mxu0 0.0
        %2526 = vmatprep.mubr.f32.mxu0 0.0
        %2527 = vmatmul.mubr.f32.gmra.mrb[0].mxu0 %v2451
        %v2528 = vpop.f32.mrb[0].mxu0
        %v2529 = vadd.f32 0.0, %v2528
        %v2530 = vpop.f32.mrb[0].mxu0
        %2531 = vmatprep.mubr.f32.mxu0 0.0
        %2532 = vmatmul.mubr.f32.gmra.mrb[0].mxu0 %v2454
        %v2533 = vpop.f32.mrb[0].mxu0
        %v2534 = vadd.f32 0.0, %v2533
        %v2535 = vpop.f32.mrb[0].mxu0
        %2536 = vmatprep.mubr.f32.mxu0 0.0
        %2537 = vmatmul.mubr.f32.gmra.mrb[0].mxu0 %v2457
        %v2538 = vpop.f32.mrb[0].mxu0
        %v2539 = vadd.f32 0.0, %v2538
        %v2540 = vpop.f32.mrb[0].mxu0
        %2541 = vmatprep.mubr.f32.mxu0 0.0
        %2542 = vmatmul.mubr.f32.gmra.mrb[0].mxu0 %v2460
        %v2543 = vpop.f32.mrb[0].mxu0
        %v2544 = vadd.f32 0.0, %v2543
        %v2545 = vpop.f32.mrb[0].mxu0
        %2546 = vdwg.mxu0
        %v2547 = vadd.f32 %v2424, %v2529
        %v2548 = vadd.f32 %v2429, %v2534
        %v2549 = vadd.f32 %v2434, %v2539
        %v2550 = vadd.f32 %v2439, %v2544
        %v2551 = vld [vmem:[%s11] sm:$0x1]
        %v2553 = vlaneseq
        %v2554 = vshrl.u32 %v2553, 7
        %v2555 = vsub.s32 0, %v2554
        %v2556 = vrot.slane %v2551, %v2555
        %v2558 = vadd.f32 %v2547, %v2556
        %v2559 = vadd.f32 %v2548, %v2556
        %v2560 = vadd.f32 %v2549, %v2556
        %v2561 = vadd.f32 %v2550, %v2556
        %v2562 = vld [vmem:[#allocation10] sm:$0xff]
        %v2563 = vld [vmem:[#allocation10 + $0x8] sm:$0xff]
        %v2564 = vld [vmem:[#allocation10 + $0x10] sm:$0xff]
        %v2565 = vld [vmem:[#allocation10 + $0x18] sm:$0xff]
        %v2566 = vld [vmem:[#allocation10 + $0x20] sm:$0xff]
        %v2567 = vld [vmem:[#allocation10 + $0x28] sm:$0xff]
        %v2568 = vld [vmem:[#allocation10 + $0x30] sm:$0xff]
        %v2569 = vld [vmem:[#allocation10 + $0x38] sm:$0xff]
        %v2574 = vcombine.low %v807, %v808
        %v2575 = vcombine.low %v809, %v810
        %v2577 = vunpack.c.l.s4 1966171168
        %v2578 = vunpack.c.0.s8 %v2577
        %v2579 = vlaneseq
        %v2580 = vshrl.u32 %v2579, 7
        %v2581 = vsub.s32 %v2578, %v2580
        %v2582 = vrot.slane %v2574, %v2581
        %v2584 = vunpack.c.l.s4 1966171168
        %v2585 = vunpack.c.0.s8 %v2584
        %v2586 = vlaneseq
        %v2587 = vshrl.u32 %v2586, 7
        %v2588 = vsub.s32 %v2585, %v2587
        %v2589 = vrot.slane %v2575, %v2588
        %v2590 = vcombine.low %v2582, %v2589
        %v2592 = vunpack.c.l.s4 1966171168
        %v2593 = vunpack.c.0.s8 %v2592
        %v2594 = vlaneseq
        %v2595 = vshrl.u32 %v2594, 7
        %v2596 = vsub.s32 %v2593, %v2595
        %v2597 = vrot.slane %v2590, %v2596
        %v2598 = vsel %vm1515, %v2597, 0
        %2600 = vmatprep.subr.mxu0 0.0
        %2601 = vmatpush1.msra.mxu0 %v2562
        %2602 = vmatprep.subr.mxu0 0.0
        %2603 = vmatpush1.msra.mxu0 %v2563
        %2604 = vmatprep.subr.mxu0 0.0
        %2605 = vmatpush1.msra.mxu0 %v2564
        %2606 = vmatprep.subr.mxu0 0.0
        %2607 = vmatpush1.msra.mxu0 %v2565
        %2608 = vmatprep.subr.mxu0 0.0
        %2609 = vmatpush1.msra.mxu0 %v2566
        %2610 = vmatprep.subr.mxu0 0.0
        %2611 = vmatpush1.msra.mxu0 %v2567
        %2612 = vmatprep.subr.mxu0 0.0
        %2613 = vmatpush1.msra.mxu0 %v2568
        %2614 = vmatprep.subr.mxu0 0.0
        %2615 = vmatpush1.msra.mxu0 %v2569
        %2616 = vmatprep.subr.mxu0 0.0
        %2617 = vmatpush1.msra.mxu0 0.0
        %2618 = vmatprep.subr.mxu0 0.0
        %2619 = vmatpush1.msra.mxu0 0.0
        %2620 = vmatprep.subr.mxu0 0.0
        %2621 = vmatpush1.msra.mxu0 0.0
        %2622 = vmatprep.subr.mxu0 0.0
        %2623 = vmatpush1.msra.mxu0 0.0
        %2624 = vmatprep.subr.mxu0 0.0
        %2625 = vmatpush1.msra.mxu0 0.0
        %2626 = vmatprep.subr.mxu0 0.0
        %2627 = vmatpush1.msra.mxu0 0.0
        %2628 = vmatprep.subr.mxu0 0.0
        %2629 = vmatpush1.msra.mxu0 0.0
        %2630 = vmatprep.subr.mxu0 0.0
        %2631 = vmatpush1.msra.mxu0 0.0
        %2632 = vmatprep.subr.mxu0 0.0
        %2633 = vmatpush1.msra.mxu0 0.0
        %2634 = vmatprep.subr.mxu0 0.0
        %2635 = vmatpush1.msra.mxu0 0.0
        %2636 = vmatprep.subr.mxu0 0.0
        %2637 = vmatpush1.msra.mxu0 0.0
        %2638 = vmatprep.subr.mxu0 0.0
        %2639 = vmatpush1.msra.mxu0 0.0
        %2640 = vmatprep.subr.mxu0 0.0
        %2641 = vmatpush1.msra.mxu0 0.0
        %2642 = vmatprep.subr.mxu0 0.0
        %2643 = vmatpush1.msra.mxu0 0.0
        %2644 = vmatprep.subr.mxu0 0.0
        %2645 = vmatpush1.msra.mxu0 0.0
        %2646 = vmatprep.subr.mxu0 0.0
        %2647 = vmatpush1.msra.mxu0 0.0
        %2648 = vmatprep.subr.mxu0 0.0
        %2649 = vmatpush1.msra.mxu0 0.0
        %2650 = vmatprep.subr.mxu0 0.0
        %2651 = vmatpush1.msra.mxu0 0.0
        %2652 = vmatprep.subr.mxu0 0.0
        %2653 = vmatpush1.msra.mxu0 0.0
        %2654 = vmatprep.subr.mxu0 0.0
        %2655 = vmatpush1.msra.mxu0 0.0
        %2656 = vmatprep.subr.mxu0 0.0
        %2657 = vmatpush1.msra.mxu0 0.0
        %2658 = vmatprep.subr.mxu0 0.0
        %2659 = vmatpush1.msra.mxu0 0.0
        %2660 = vmatprep.subr.mxu0 0.0
        %2661 = vmatpush1.msra.mxu0 0.0
        %2662 = vmatprep.subr.mxu0 0.0
        %2663 = vmatpush1.msra.mxu0 0.0
        %2664 = vmatprep.mubr.f32.mxu0 0.0
        %2665 = vmatmul.mubr.f32.gmra.mrb[0].mxu0 %v2598
        %v2666 = vpop.f32.mrb[0].mxu0
        %v2667 = vadd.f32 0.0, %v2666
        %v2668 = vpop.f32.mrb[0].mxu0
        %2669 = vdwg.mxu0
        %v2672 = vunpack.c.l.s4 1966171168
        %v2673 = vunpack.c.0.s8 %v2672
        %v2674 = vlaneseq
        %v2675 = vshrl.u32 %v2674, 7
        %v2676 = vsub.s32 %v2673, %v2675
        %v2677 = vrot.slane %v2667, %v2676
        %v2678 = vcombine.high %v2677, %v2677
        %v2680 = vunpack.c.l.s4 1966171168
        %v2681 = vunpack.c.0.s8 %v2680
        %v2682 = vlaneseq
        %v2683 = vshrl.u32 %v2682, 7
        %v2684 = vsub.s32 %v2681, %v2683
        %v2685 = vrot.slane %v2677, %v2684
        %v2687 = vunpack.c.l.s4 1966171168
        %v2688 = vunpack.c.0.s8 %v2687
        %v2689 = vlaneseq
        %v2690 = vshrl.u32 %v2689, 7
        %v2691 = vsub.s32 %v2688, %v2690
        %v2692 = vrot.slane %v2678, %v2691
        %v2693 = vcombine.high %v2685, %v2685
        %v2694 = vcombine.high %v2692, %v2692
        %v2695 = vlaneseq
        %v2696 = vshrl.u32 %v2695, 7
        %v2697 = vsub.s32 0, %v2696
        %v2698 = vrot.slane %v2685, %v2697
        %v2699 = vlaneseq
        %v2700 = vshrl.u32 %v2699, 7
        %v2701 = vsub.s32 0, %v2700
        %v2702 = vrot.slane %v2692, %v2701
        %v2703 = vlaneseq
        %v2704 = vshrl.u32 %v2703, 7
        %v2705 = vsub.s32 0, %v2704
        %v2706 = vrot.slane %v2693, %v2705
        %v2707 = vlaneseq
        %v2708 = vshrl.u32 %v2707, 7
        %v2709 = vsub.s32 0, %v2708
        %v2710 = vrot.slane %v2694, %v2709
        %v2715 = vadd.f32 %v2558, %v2698
        %v2716 = vadd.f32 %v2559, %v2702
        %v2717 = vadd.f32 %v2560, %v2706
        %v2718 = vadd.f32 %v2561, %v2710
        %v2719 = vtanh.pop %v2715
        %v2720 = vtanh.pop %v2716
        %v2721 = vtanh.pop %v2717
        %v2722 = vtanh.pop %v2718
        %2723 = vst [vmem:[%s643] sm:$0xff] %v2719
        %2724 = vst [vmem:[%s643 + $0x8] sm:$0xff] %v2720
        %2725 = vst [vmem:[%s643 + $0x10] sm:$0xff] %v2721
        %2726 = vst [vmem:[%s643 + $0x18] sm:$0xff] %v2722
        %2727 = vst [vmem:[%s650] sm:$0xff] %v1123
        %2728 = vst [vmem:[%s650 + $0x8] sm:$0xff] %v1124
        %2729 = vst [vmem:[%s650 + $0x10] sm:$0xff] %v1125
        %2730 = vst [vmem:[%s650 + $0x18] sm:$0xff] %v1126
        %2731 = vst [vmem:[%s657] sm:$0xff] %v1194
        %2732 = vst [vmem:[%s657 + $0x18] sm:$0xff] %v1264
        %2733 = vst [vmem:[%s657 + $0x30] sm:$0xff] %v1334
        %2734 = vst [vmem:[%s657 + $0x48] sm:$0xff] %v1404
        %2735 = vst [vmem:[%s657 + $0x8] sm:$0xff] %v675
        %2736 = vst [vmem:[%s657 + $0x20] sm:$0xff] %v676
        %2737 = vst [vmem:[%s657 + $0x38] sm:$0xff] %v677
        %2738 = vst [vmem:[%s657 + $0x50] sm:$0xff] %v678
        %v2739 = vlaneseq
        %v2740 = vshrl.u32 %v2739, 7
        %v2741 = vsub.s32 0, %v2740
        %v2742 = vrot.slane %v807, %v2741
        %v2743 = vlaneseq
        %v2744 = vshrl.u32 %v2743, 7
        %v2745 = vsub.s32 0, %v2744
        %v2746 = vrot.slane %v808, %v2745
        %v2747 = vlaneseq
        %v2748 = vshrl.u32 %v2747, 7
        %v2749 = vsub.s32 0, %v2748
        %v2750 = vrot.slane %v809, %v2749
        %v2751 = vlaneseq
        %v2752 = vshrl.u32 %v2751, 7
        %v2753 = vsub.s32 0, %v2752
        %v2754 = vrot.slane %v810, %v2753
        %2759 = vst.msk [vmem:[%s657 + $0x10] sm:$0xff] %vm1515, %v2742
        %2760 = vst.msk [vmem:[%s657 + $0x28] sm:$0xff] %vm1515, %v2746
        %2761 = vst.msk [vmem:[%s657 + $0x40] sm:$0xff] %vm1515, %v2750
        %2762 = vst.msk [vmem:[%s657 + $0x58] sm:$0xff] %vm1515, %v2754
        %2763 = vrot.lane.b32.xlu0 %v2018, 64
        %v2764 = vpop.permute.xlu0 %2763
        %2765 = vrot.lane.b32.xlu0 %v2091, 64
        %v2766 = vpop.permute.xlu0 %2765
        %2767 = vrot.lane.b32.xlu0 %v2164, 64
        %v2768 = vpop.permute.xlu0 %2767
        %2769 = vrot.lane.b32.xlu0 %v2237, 64
        %v2770 = vpop.permute.xlu0 %2769
        %vm2775 = vcmask 1048064
        %2776 = vst.msk [vmem:[%s657 + $0x10] sm:$0xff] %vm2775, %v2764
        %2777 = vst.msk [vmem:[%s657 + $0x28] sm:$0xff] %vm2775, %v2766
        %2778 = vst.msk [vmem:[%s657 + $0x40] sm:$0xff] %vm2775, %v2768
        %2779 = vst.msk [vmem:[%s657 + $0x58] sm:$0xff] %vm2775, %v2770
        %s2780 = sand.u32 %s325, 1
        %s2781 = scalar_lea.sflag [#allocation4], %s2780
        %s2782 = sand.u32 %s325, 1
        %s2783 = smul.addr %s2782, 32
        %s2784 = scalar_lea.vmem [#allocation13], %s2783
        %s2785 = sand.u32 %s40, 1
        %s2786 = scalar_lea.sflag [#allocation15], %s2785
        %s2787 = sand.u32 %s351, 1
        %s2788 = smul.addr %s2787, 32
        %s2789 = scalar_lea.vmem [#allocation14], %s2788
        %s2790 = sand.u32 %s40, 1
        %s2791 = scalar_lea.sflag [#allocation15], %s2790
        %s2792 = sand.u32 %s377, 1
        %s2793 = smul.addr %s2792, 96
        %s2794 = scalar_lea.vmem [#allocation16], %s2793
        // Predicated region
        $region93: #{tpu_custom_call.1} parent=67 // pred_check
          %p2795 = pneg %p335
        $region94: #{tpu_custom_call.1} parent=67 // pred_check_branch
          %2797 = sbr.rel (%p2795) target = $region96
        $region95: #{tpu_custom_call.1} parent=67 // pred_region
          %s2798 = smul.u32 4, %s40
          %s2800 = ssub.s32 512, 512
          %2801 = vsyncadd %s2781, %s2800
          %s2802 = smul.addr %s2798, 128
          %s2803 = scalar_lea.hbm %s12, %s2802
          %s2804 = sshll.u32 %s2784, 4
          %s2805 = int_to_ptr.vmem [resolvable:$true] %s2804
          %2810 = dma.vmem_to_hbm [thread:$0]  %s2805, 512, %s2803, %s2781, 128, 128, 8
        $region96: #{tpu_custom_call.1} parent=67 // pred_fallthru
          _
        // Predicated region
        $region97: #{tpu_custom_call.1} parent=67 // pred_check
          %p2811 = pneg %p361
        $region98: #{tpu_custom_call.1} parent=67 // pred_check_branch
          %2813 = sbr.rel (%p2811) target = $region100
        $region99: #{tpu_custom_call.1} parent=67 // pred_region
          %s2814 = smul.u32 4, %s40
          %s2816 = ssub.s32 512, 512
          %2817 = vsyncadd %s2786, %s2816
          %s2818 = smul.addr %s2814, 128
          %s2819 = scalar_lea.hbm %s13, %s2818
          %s2820 = sshll.u32 %s2789, 4
          %s2821 = int_to_ptr.vmem [resolvable:$true] %s2820
          %2826 = dma.vmem_to_hbm [thread:$0]  %s2821, 512, %s2819, %s2786, 128, 128, 8
        $region100: #{tpu_custom_call.1} parent=67 // pred_fallthru
          _
        // Predicated region
        $region101: #{tpu_custom_call.1} parent=67 // pred_check
          %p2827 = pneg %p387
        $region102: #{tpu_custom_call.1} parent=67 // pred_check_branch
          %2829 = sbr.rel (%p2827) target = $region104
        $region103: #{tpu_custom_call.1} parent=67 // pred_region
          %s2830 = smul.u32 4, %s40
          %s2832 = ssub.s32 1536, 1536
          %2833 = vsyncadd %s2791, %s2832
          %s2834 = smul.addr %s2830, 3
          %s2835 = smul.addr %s2834, 128
          %s2836 = scalar_lea.hbm %s14, %s2835
          %s2837 = sshll.u32 %s2794, 4
          %s2838 = int_to_ptr.vmem [resolvable:$true] %s2837
          %2843 = dma.vmem_to_hbm [thread:$0]  %s2838, 1536, %s2836, %s2791, 384, 384, 24
        $region104: #{tpu_custom_call.1} parent=67 // pred_fallthru
          _
      $region68: #{tpu_custom_call.1} parent=5 // pred_fallthru
        _
      %p2844 = scmp.le.s32.totalorder 2, %s35
      // Predicated region
      $region105: #{tpu_custom_call.1} parent=5 // pred_check
        %p2845 = pneg %p2844
      $region106: #{tpu_custom_call.1} parent=5 // pred_check_branch
        %2847 = sbr.rel (%p2845) target = $region108
      $region107: #{tpu_custom_call.1} parent=5 // pred_region
        %s2848 = ssub.s32 %s35, 2
        // Predicated region
        $region109: #{tpu_custom_call.1} parent=107 // pred_check
          %p2849 = pneg %p341
        $region110: #{tpu_custom_call.1} parent=107 // pred_check_branch
          %2851 = sbr.rel (%p2849) target = $region112
        $region111: #{tpu_custom_call.1} parent=107 // pred_region
          %s2852 = sand.u32 %s326, 1
          %s2853 = scalar_lea.sflag [#allocation4], %s2852
          %s2854 = sand.u32 %s326, 1
          %s2855 = smul.addr %s2854, 32
          %s2856 = scalar_lea.vmem [#allocation13], %s2855
          %2857 = dma.done %s2853, 512
        $region112: #{tpu_custom_call.1} parent=107 // pred_fallthru
          _
        // Predicated region
        $region113: #{tpu_custom_call.1} parent=107 // pred_check
          %p2858 = pneg %p367
        $region114: #{tpu_custom_call.1} parent=107 // pred_check_branch
          %2860 = sbr.rel (%p2858) target = $region116
        $region115: #{tpu_custom_call.1} parent=107 // pred_region
          %s2861 = sand.u32 %s41, 1
          %s2862 = scalar_lea.sflag [#allocation15], %s2861
          %s2863 = sand.u32 %s352, 1
          %s2864 = smul.addr %s2863, 32
          %s2865 = scalar_lea.vmem [#allocation14], %s2864
          %2866 = dma.done %s2862, 512
        $region116: #{tpu_custom_call.1} parent=107 // pred_fallthru
          _
        // Predicated region
        $region117: #{tpu_custom_call.1} parent=107 // pred_check
          %p2867 = pneg %p393
        $region118: #{tpu_custom_call.1} parent=107 // pred_check_branch
          %2869 = sbr.rel (%p2867) target = $region120
        $region119: #{tpu_custom_call.1} parent=107 // pred_region
          %s2870 = sand.u32 %s41, 1
          %s2871 = scalar_lea.sflag [#allocation15], %s2870
          %s2872 = sand.u32 %s378, 1
          %s2873 = smul.addr %s2872, 96
          %s2874 = scalar_lea.vmem [#allocation16], %s2873
          %2875 = dma.done %s2871, 1536
        $region120: #{tpu_custom_call.1} parent=107 // pred_fallthru
          _
      $region108: #{tpu_custom_call.1} parent=5 // pred_fallthru
        _
    $region6: #{tpu_custom_call.1} parent=1 // loop_footer
      %s39 = sadd.s32 1, %s35
    $region7: #{tpu_custom_call.1} parent=1 // loop_footer_branch
      %34 = sbr.rel target = $region3
    $region8: #{tpu_custom_call.1} parent=1 // loop_exit
      _
    %2876 = vsyncpa [#allocation3], 1
    %s2877 = scalar_lea.sflag [#allocation3], 1
    %2878 = vsyncpa %s2877, 1
    %2879 = vsyncpa [#allocation6], 1
    %s2880 = scalar_lea.sflag [#allocation6], 1
    %2881 = vsyncpa %s2880, 1
    %2882 = vsyncpa [#allocation9], 1
    %2883 = vsyncpa [#allocation12], 1
    %2884 = vsyncpa [#allocation4], 1
    %s2885 = scalar_lea.sflag [#allocation4], 1
    %2886 = vsyncpa %s2885, 1
    %2887 = vsyncpa [#allocation15], 1
    %s2888 = scalar_lea.sflag [#allocation15], 1
    %2889 = vsyncpa %s2888, 1

</llo_original>
